<compile_context>
chip_gen: v5e
topology: v5e:2x2
jax: 0.10.0
libtpu: 0.0.40
codegen_flags: <defaults>
</compile_context>

<pallas_src>
import numpy as np
import jax
import jax.numpy as jnp
from jax.experimental import pallas as pl
from jax.experimental.pallas import tpu as pltpu


def _deconv_concat_kernel(x1_ref, x2_ref, w_ref, b_ref, s_ref, o_ref):
    # x1_ref: (1, Cin, HW)        one batch of the input feature map (spatial flattened)
    # x2_ref: (1, C2, SHW)        one batch of the skip connection (SHW = 4*HW)
    # w_ref:  (4, Cout, Cin)      per-tap weights, tap t = kh*2 + kw
    # b_ref:  (Cout, 1)           ConvTranspose2d bias
    # s_ref:  (4, HW, SHW)        per-tap one-hot scatter: input pixel p -> output pixel s
    # o_ref:  (1, Cout+C2, SHW)   deconv result (channels 0:Cout) ++ skip copy (channels Cout:)
    Cout = w_ref.shape[1]
    C2 = x2_ref.shape[1]
    SHW = o_ref.shape[2]

    x1 = x1_ref[0].astype(jnp.float32)                        # (Cin, HW), spatial in lanes

    acc = jnp.zeros((Cout, SHW), dtype=jnp.float32)
    for t in range(4):                                         # static unroll over the 2x2 taps
        # channel mix: (Cout, Cin) @ (Cin, HW) -> (Cout, HW); spatial stays in lanes.
        r_t = jnp.dot(w_ref[t].astype(jnp.float32), x1,
                      preferred_element_type=jnp.float32)
        # depth-to-space scatter via one-hot matmul: (Cout, HW) @ (HW, SHW) -> (Cout, SHW).
        acc = acc + jnp.dot(r_t, s_ref[t], preferred_element_type=jnp.float32)
    acc = acc + b_ref[...].astype(jnp.float32)                 # per-channel bias

    o_ref[0, 0:Cout, :] = acc.astype(o_ref.dtype)              # deconv half of the concat
    o_ref[0, Cout:Cout + C2, :] = x2_ref[0]                    # skip half (fused concat)


def _make_scatter(H, W):
    """One-hot scatter: S[t, h*W+w, (2h+kh)*2W + (2w+kw)] = 1 for tap t = kh*2 + kw."""
    HW = H * W
    SHW = 4 * HW
    S = np.zeros((4, HW, SHW), dtype=np.float32)
    for kh in range(2):
        for kw in range(2):
            t = kh * 2 + kw
            for h in range(H):
                for w in range(W):
                    S[t, h * W + w, (2 * h + kh) * (2 * W) + (2 * w + kw)] = 1.0
    return jnp.asarray(S)


def deconv_block_pallas(x1, x2, w, b):
    """x1: (N, Cin, H, W); x2: (N, C2, 2H, 2W); w: (Cin, Cout, 2, 2)  (PyTorch ConvTranspose2d
    layout); b: (Cout,).  Returns cat([ConvTranspose2d(x1), x2], dim=1) of shape
    (N, Cout + C2, 2H, 2W)."""
    N, Cin, H, W = x1.shape
    Cout = w.shape[1]
    C2 = x2.shape[1]
    HW, SHW = H * W, 4 * H * W
    C_total = Cout + C2

    # Only free reshapes on the activations (no transposes, no pads, no XLA concat).
    x1f = x1.reshape(N, Cin, HW)
    x2f = x2.reshape(N, C2, SHW)
    # Tiny weight relayout (Cin*Cout*4 scalars): (Cin, Cout, 2, 2) -> (4, Cout, Cin).
    wt = jnp.transpose(w, (2, 3, 1, 0)).reshape(4, Cout, Cin)
    bias = b.reshape(Cout, 1)
    scat = _make_scatter(H, W)                    # static constant, fetched once (index map const)

    out_flat = pl.pallas_call(
        _deconv_concat_kernel,
        out_shape=jax.ShapeDtypeStruct((N, C_total, SHW), x1.dtype),
        grid=(N,),
        in_specs=[
            pl.BlockSpec((1, Cin, HW), lambda n: (n, 0, 0)),
            pl.BlockSpec((1, C2, SHW), lambda n: (n, 0, 0)),
            pl.BlockSpec((4, Cout, Cin), lambda n: (0, 0, 0)),   # constant across grid steps
            pl.BlockSpec((Cout, 1), lambda n: (0, 0)),           # constant across grid steps
            pl.BlockSpec((4, HW, SHW), lambda n: (0, 0, 0)),     # constant across grid steps
        ],
        out_specs=pl.BlockSpec((1, C_total, SHW), lambda n: (n, 0, 0)),
        compiler_params=pltpu.CompilerParams(
            dimension_semantics=("parallel",),   # batch shards across v7x's 2 TensorCores
            vmem_limit_bytes=32 * 1024 * 1024,
        ),
    )(x1f, x2f, wt, bias, scat)

    # Free reshape back to NCHW spatial layout.
    return out_flat.reshape(N, C_total, 2 * H, 2 * W)


def deconv_block_reference(x1, x2, w, b):
    """Pure-JAX reference of the PyTorch forward: ConvTranspose2d(k=2, s=2) then channel concat."""
    N, Cin, H, W = x1.shape
    Cout = w.shape[1]
    out = jnp.zeros((N, Cout, 2 * H, 2 * W), dtype=x1.dtype)
    for kh in range(2):
        for kw in range(2):
            contrib = jnp.einsum('nihw,ic->nchw', x1, w[:, :, kh, kw],
                                 precision=jax.lax.Precision.HIGHEST)
            out = out.at[:, :, kh::2, kw::2].add(contrib)
    out = out + b.reshape(1, Cout, 1, 1)
    return jnp.concatenate([out, x2], axis=1)


if __name__ == "__main__":
    # deconvBlock(in_channels=8, out_channels=4, kernel_size=2, stride=2); skip x2 has 4 channels.
    N, Cin, H, W = 2, 8, 16, 16
    Cout, C2 = 4, 4

    key = jax.random.PRNGKey(0)
    k1, k2, kw_, kb_ = jax.random.split(key, 4)
    x1 = jax.random.normal(k1, (N, Cin, H, W), dtype=jnp.float32)
    x2 = jax.random.normal(k2, (N, C2, 2 * H, 2 * W), dtype=jnp.float32)
    # PyTorch ConvTranspose2d weight layout: (in_channels, out_channels, kH, kW).
    w = jax.random.normal(kw_, (Cin, Cout, 2, 2), dtype=jnp.float32) / np.sqrt(Cin * 2 * 2)
    b = jax.random.normal(kb_, (Cout,), dtype=jnp.float32) * 0.1

    out = deconv_block_pallas(x1, x2, w, b)
    out = jax.block_until_ready(out)

    ref = deconv_block_reference(x1, x2, w, b)
    np.testing.assert_allclose(np.asarray(out), np.asarray(ref), rtol=1e-3, atol=1e-3)

    print("KERNEL_OK")
</pallas_src>

<mosaic_0001>
module attributes {stable_mosaic.version = 11 : i64} {
  func.func @_deconv_concat_kernel(%arg0: i32, %arg1: memref<1x8x256xf32, #tpu.memory_space<vmem>>, %arg2: memref<1x4x1024xf32, #tpu.memory_space<vmem>>, %arg3: memref<4x4x8xf32, #tpu.memory_space<vmem>>, %arg4: memref<4x1xf32, #tpu.memory_space<vmem>>, %arg5: memref<4x256x1024xf32, #tpu.memory_space<vmem>>, %arg6: memref<1x8x1024xf32, #tpu.memory_space<vmem>>) attributes {dimension_semantics = [#tpu.dimension_semantics<parallel>], iteration_bounds = array<i64: 2>, scalar_prefetch = 0 : i64, scratch_operands = 0 : i64, tpu.core_type = #tpu.core_type<tc>, window_params = [{transform_indices = @transform_0, window_bounds = array<i64: 1, 8, 256>}, {transform_indices = @transform_1, window_bounds = array<i64: 1, 4, 1024>}, {pipeline_mode = #tpu.pipeline_mode<synchronous>, transform_indices = @transform_2, window_bounds = array<i64: 4, 4, 8>}, {pipeline_mode = #tpu.pipeline_mode<synchronous>, transform_indices = @transform_3, window_bounds = array<i64: 4, 1>}, {pipeline_mode = #tpu.pipeline_mode<synchronous>, transform_indices = @transform_4, window_bounds = array<i64: 4, 256, 1024>}, {transform_indices = @transform_5, window_bounds = array<i64: 1, 8, 1024>}]} {
    %c0 = arith.constant 0 : index
    %c0_0 = arith.constant 0 : index
    %c0_1 = arith.constant 0 : index
    %0 = vector.load %arg1[%c0, %c0_0, %c0_1] : memref<1x8x256xf32, #tpu.memory_space<vmem>>, vector<1x8x256xf32>
    %1 = vector.shape_cast %0 : vector<1x8x256xf32> to vector<8x256xf32>
    %cst = arith.constant 0.000000e+00 : f32
    %2 = vector.broadcast %cst : f32 to vector<4x1024xf32>
    %c0_2 = arith.constant 0 : index
    %c0_3 = arith.constant 0 : index
    %c0_4 = arith.constant 0 : index
    %3 = vector.load %arg3[%c0_2, %c0_3, %c0_4] : memref<4x4x8xf32, #tpu.memory_space<vmem>>, vector<1x4x8xf32>
    %4 = vector.shape_cast %3 : vector<1x4x8xf32> to vector<4x8xf32>
    %cst_5 = arith.constant dense<0.000000e+00> : vector<4x256xf32>
    %5 = tpu.matmul %4, %1, %cst_5 {dimension_numbers = #tpu.dot_dimension_numbers<[1], [0], [0], [1], [0, 0, 1, 1], [], []>} : vector<4x8xf32>, vector<8x256xf32>, vector<4x256xf32> -> vector<4x256xf32>
    %c0_6 = arith.constant 0 : index
    %c0_7 = arith.constant 0 : index
    %c0_8 = arith.constant 0 : index
    %6 = vector.load %arg5[%c0_6, %c0_7, %c0_8] : memref<4x256x1024xf32, #tpu.memory_space<vmem>>, vector<1x256x1024xf32>
    %7 = vector.shape_cast %6 : vector<1x256x1024xf32> to vector<256x1024xf32>
    %cst_9 = arith.constant dense<0.000000e+00> : vector<4x1024xf32>
    %8 = tpu.matmul %5, %7, %cst_9 {dimension_numbers = #tpu.dot_dimension_numbers<[1], [0], [0], [1], [0, 0, 1, 1], [], []>} : vector<4x256xf32>, vector<256x1024xf32>, vector<4x1024xf32> -> vector<4x1024xf32>
    %9 = arith.addf %2, %8 : vector<4x1024xf32>
    %c1 = arith.constant 1 : index
    %c0_10 = arith.constant 0 : index
    %c0_11 = arith.constant 0 : index
    %10 = vector.load %arg3[%c1, %c0_10, %c0_11] : memref<4x4x8xf32, #tpu.memory_space<vmem>>, vector<1x4x8xf32>
    %11 = vector.shape_cast %10 : vector<1x4x8xf32> to vector<4x8xf32>
    %cst_12 = arith.constant dense<0.000000e+00> : vector<4x256xf32>
    %12 = tpu.matmul %11, %1, %cst_12 {dimension_numbers = #tpu.dot_dimension_numbers<[1], [0], [0], [1], [0, 0, 1, 1], [], []>} : vector<4x8xf32>, vector<8x256xf32>, vector<4x256xf32> -> vector<4x256xf32>
    %c1_13 = arith.constant 1 : index
    %c0_14 = arith.constant 0 : index
    %c0_15 = arith.constant 0 : index
    %13 = vector.load %arg5[%c1_13, %c0_14, %c0_15] : memref<4x256x1024xf32, #tpu.memory_space<vmem>>, vector<1x256x1024xf32>
    %14 = vector.shape_cast %13 : vector<1x256x1024xf32> to vector<256x1024xf32>
    %cst_16 = arith.constant dense<0.000000e+00> : vector<4x1024xf32>
    %15 = tpu.matmul %12, %14, %cst_16 {dimension_numbers = #tpu.dot_dimension_numbers<[1], [0], [0], [1], [0, 0, 1, 1], [], []>} : vector<4x256xf32>, vector<256x1024xf32>, vector<4x1024xf32> -> vector<4x1024xf32>
    %16 = arith.addf %9, %15 : vector<4x1024xf32>
    %c2 = arith.constant 2 : index
    %c0_17 = arith.constant 0 : index
    %c0_18 = arith.constant 0 : index
    %17 = vector.load %arg3[%c2, %c0_17, %c0_18] : memref<4x4x8xf32, #tpu.memory_space<vmem>>, vector<1x4x8xf32>
    %18 = vector.shape_cast %17 : vector<1x4x8xf32> to vector<4x8xf32>
    %cst_19 = arith.constant dense<0.000000e+00> : vector<4x256xf32>
    %19 = tpu.matmul %18, %1, %cst_19 {dimension_numbers = #tpu.dot_dimension_numbers<[1], [0], [0], [1], [0, 0, 1, 1], [], []>} : vector<4x8xf32>, vector<8x256xf32>, vector<4x256xf32> -> vector<4x256xf32>
    %c2_20 = arith.constant 2 : index
    %c0_21 = arith.constant 0 : index
    %c0_22 = arith.constant 0 : index
    %20 = vector.load %arg5[%c2_20, %c0_21, %c0_22] : memref<4x256x1024xf32, #tpu.memory_space<vmem>>, vector<1x256x1024xf32>
    %21 = vector.shape_cast %20 : vector<1x256x1024xf32> to vector<256x1024xf32>
    %cst_23 = arith.constant dense<0.000000e+00> : vector<4x1024xf32>
    %22 = tpu.matmul %19, %21, %cst_23 {dimension_numbers = #tpu.dot_dimension_numbers<[1], [0], [0], [1], [0, 0, 1, 1], [], []>} : vector<4x256xf32>, vector<256x1024xf32>, vector<4x1024xf32> -> vector<4x1024xf32>
    %23 = arith.addf %16, %22 : vector<4x1024xf32>
    %c3 = arith.constant 3 : index
    %c0_24 = arith.constant 0 : index
    %c0_25 = arith.constant 0 : index
    %24 = vector.load %arg3[%c3, %c0_24, %c0_25] : memref<4x4x8xf32, #tpu.memory_space<vmem>>, vector<1x4x8xf32>
    %25 = vector.shape_cast %24 : vector<1x4x8xf32> to vector<4x8xf32>
    %cst_26 = arith.constant dense<0.000000e+00> : vector<4x256xf32>
    %26 = tpu.matmul %25, %1, %cst_26 {dimension_numbers = #tpu.dot_dimension_numbers<[1], [0], [0], [1], [0, 0, 1, 1], [], []>} : vector<4x8xf32>, vector<8x256xf32>, vector<4x256xf32> -> vector<4x256xf32>
    %c3_27 = arith.constant 3 : index
    %c0_28 = arith.constant 0 : index
    %c0_29 = arith.constant 0 : index
    %27 = vector.load %arg5[%c3_27, %c0_28, %c0_29] : memref<4x256x1024xf32, #tpu.memory_space<vmem>>, vector<1x256x1024xf32>
    %28 = vector.shape_cast %27 : vector<1x256x1024xf32> to vector<256x1024xf32>
    %cst_30 = arith.constant dense<0.000000e+00> : vector<4x1024xf32>
    %29 = tpu.matmul %26, %28, %cst_30 {dimension_numbers = #tpu.dot_dimension_numbers<[1], [0], [0], [1], [0, 0, 1, 1], [], []>} : vector<4x256xf32>, vector<256x1024xf32>, vector<4x1024xf32> -> vector<4x1024xf32>
    %30 = arith.addf %23, %29 : vector<4x1024xf32>
    %c0_31 = arith.constant 0 : index
    %c0_32 = arith.constant 0 : index
    %31 = vector.load %arg4[%c0_31, %c0_32] : memref<4x1xf32, #tpu.memory_space<vmem>>, vector<4x1xf32>
    %32 = vector.broadcast %31 : vector<4x1xf32> to vector<4x1024xf32>
    %33 = arith.addf %30, %32 : vector<4x1024xf32>
    %c0_33 = arith.constant 0 : index
    %c0_34 = arith.constant 0 : index
    %c0_35 = arith.constant 0 : index
    %34 = vector.load %arg6[%c0_33, %c0_34, %c0_35] : memref<1x8x1024xf32, #tpu.memory_space<vmem>>, vector<1x4x1024xf32>
    %35 = vector.shape_cast %34 : vector<1x4x1024xf32> to vector<4x1024xf32>
    %36 = vector.shape_cast %33 : vector<4x1024xf32> to vector<1x4x1024xf32>
    tpu.vector_store %arg6[%c0_33, %c0_34, %c0_35], %36 {strides = array<i32>} : memref<1x8x1024xf32, #tpu.memory_space<vmem>>, vector<1x4x1024xf32>,
    %c0_36 = arith.constant 0 : index
    %c0_37 = arith.constant 0 : index
    %c0_38 = arith.constant 0 : index
    %37 = vector.load %arg2[%c0_36, %c0_37, %c0_38] : memref<1x4x1024xf32, #tpu.memory_space<vmem>>, vector<1x4x1024xf32>
    %38 = vector.shape_cast %37 : vector<1x4x1024xf32> to vector<4x1024xf32>
    %c0_39 = arith.constant 0 : index
    %c4 = arith.constant 4 : index
    %c0_40 = arith.constant 0 : index
    %39 = vector.load %arg6[%c0_39, %c4, %c0_40] : memref<1x8x1024xf32, #tpu.memory_space<vmem>>, vector<1x4x1024xf32>
    %40 = vector.shape_cast %39 : vector<1x4x1024xf32> to vector<4x1024xf32>
    %41 = vector.shape_cast %38 : vector<4x1024xf32> to vector<1x4x1024xf32>
    tpu.vector_store %arg6[%c0_39, %c4, %c0_40], %41 {strides = array<i32>} : memref<1x8x1024xf32, #tpu.memory_space<vmem>>, vector<1x4x1024xf32>,
    return
  }
  func.func @transform_0(%arg0: i32) -> (i32, i32, i32) {
    %c0_i32 = arith.constant 0 : i32
    %c0_i32_0 = arith.constant 0 : i32
    %c0_i32_1 = arith.constant 0 : i32
    return %arg0, %c0_i32, %c0_i32_0 : i32, i32, i32
  }
  func.func @transform_1(%arg0: i32) -> (i32, i32, i32) {
    %c0_i32 = arith.constant 0 : i32
    %c0_i32_0 = arith.constant 0 : i32
    %c0_i32_1 = arith.constant 0 : i32
    return %arg0, %c0_i32, %c0_i32_0 : i32, i32, i32
  }
  func.func @transform_2(%arg0: i32) -> (i32, i32, i32) {
    %c0_i32 = arith.constant 0 : i32
    %c0_i32_0 = arith.constant 0 : i32
    %c0_i32_1 = arith.constant 0 : i32
    %c0_i32_2 = arith.constant 0 : i32
    return %c0_i32, %c0_i32_0, %c0_i32_1 : i32, i32, i32
  }
  func.func @transform_3(%arg0: i32) -> (i32, i32) {
    %c0_i32 = arith.constant 0 : i32
    %c0_i32_0 = arith.constant 0 : i32
    %c0_i32_1 = arith.constant 0 : i32
    return %c0_i32, %c0_i32_0 : i32, i32
  }
  func.func @transform_4(%arg0: i32) -> (i32, i32, i32) {
    %c0_i32 = arith.constant 0 : i32
    %c0_i32_0 = arith.constant 0 : i32
    %c0_i32_1 = arith.constant 0 : i32
    %c0_i32_2 = arith.constant 0 : i32
    return %c0_i32, %c0_i32_0, %c0_i32_1 : i32, i32, i32
  }
  func.func @transform_5(%arg0: i32) -> (i32, i32, i32) {
    %c0_i32 = arith.constant 0 : i32
    %c0_i32_0 = arith.constant 0 : i32
    %c0_i32_1 = arith.constant 0 : i32
    return %arg0, %c0_i32, %c0_i32_0 : i32, i32, i32
  }
}

</mosaic_0001>

<llo_original>
// kernel: tpu_custom_call.1
$region0: #{tpu_custom_call.1}
  #allocation0 [shape = 'u32[]', space=smem, size = 0x4, offset = 0x4, fixed_abs, tag = 'smem constant byte address 0x4 - core index']
  #allocation1 [shape = 'u32[72,128]{1,0:T(1,128)}', space=vmem, size = 0x9000, scoped, tag = 'internal scratch']
  %s0 = inlined_call_operand.hbm [shape: f32[2,8,256], index: 0, kind: input, shape index: {}]
  %s1 = inlined_call_operand.hbm [shape: f32[2,4,1024], index: 1, kind: input, shape index: {}]
  %s2 = inlined_call_operand.hbm [shape: f32[4,4,8], index: 2, kind: input, shape index: {}]
  %s3 = inlined_call_operand.vmem [shape: f32[4,1], index: 3, kind: input, shape index: {}]
  %s4 = inlined_call_operand.hbm [shape: f32[4,256,1024], index: 4, kind: input, shape index: {}]
  %s5 = inlined_call_operand.hbm [shape: f32[2,8,1024], index: 5, kind: output, shape index: {}]
  %s6 = sld [smem:[#allocation0]]
  $region69: #{tpu_custom_call.1} parent=0
    _
  %s8 = ssub.s32 1, %s6
  %s9 = scalar_select 0, %s8, %s6
  $region1: #{tpu_custom_call.1} parent=0
    #allocation2 [shape = 'u8[16384]{0}', space=vmem, size = 0x4000, scoped, tag = 'input window, operand 0']
    #allocation3 [shape = 's32[2]{0}', space=sflag, size = 0x8, scoped, tag = 'scoped memory for tpu_custom_call.1']
    #allocation4 [shape = 's32[2]{0}', space=sflag, size = 0x8, scoped, tag = 'scoped memory for tpu_custom_call.1']
    #allocation5 [shape = 'u8[32768]{0}', space=vmem, size = 0x8000, scoped, tag = 'input window, operand 1']
    #allocation6 [shape = 's32[2]{0}', space=sflag, size = 0x8, scoped, tag = 'scoped memory for tpu_custom_call.1']
    #allocation7 [shape = 'u8[8192]{0}', space=vmem, size = 0x2000, scoped, tag = 'input window, operand 2, single buffered']
    #allocation8 [shape = 'u8[4194304]{0}', space=vmem, size = 0x400000, scoped, tag = 'input window, operand 4, single buffered']
    #allocation9 [shape = 's32[1]{0}', space=sflag, size = 0x4, scoped, tag = 'scoped memory for tpu_custom_call.1']
    #allocation10 [shape = 'u8[65536]{0}', space=vmem, size = 0x10000, scoped, tag = 'output window, operand 0']
    %10 = vsyncpa [#allocation3], 0
    %s11 = scalar_lea.sflag [#allocation3], 1
    %12 = vsyncpa %s11, 0
    %13 = vsyncpa [#allocation6], 0
    %s14 = scalar_lea.sflag [#allocation6], 1
    %15 = vsyncpa %s14, 0
    %16 = vsyncpa [#allocation9], 0
    %17 = vsyncpa [#allocation4], 0
    %s18 = scalar_lea.sflag [#allocation4], 1
    %19 = vsyncpa %s18, 0
    loop: start=0, step=1, limit=4
    $region2: #{tpu_custom_call.1} parent=1 // loop_pre_header
      _
    $region3: #{tpu_custom_call.1} parent=1 // loop_header
      %s21 = sphi 0, %s25
      %p22 = scmp.ge.s32.totalorder %s21, 4
      %s31 = sphi 0, %s33
      %s34 = sphi 0, %s31
      %s35 = sphi 0, %s34
      %s51 = sphi 0, %s35
      %s57 = sphi 0, %s59
      %s60 = sphi 0, %s57
      %s61 = sphi 0, %s60
      %s77 = sphi 0, %s61
      %s81 = sphi 0, %s81
      %s83 = sphi 0, %s81
      %s84 = sphi 0, %s83
      %s98 = sphi 0, %s84
      %s102 = sphi 0, %s102
      %s104 = sphi 0, %s102
      %s105 = sphi 0, %s104
      %s119 = sphi 0, %s105
      %s123 = sphi 0, %s123
      %s125 = sphi 0, %s123
      %s126 = sphi 0, %s125
      %s140 = sphi 0, %s126
      %s146 = sphi 0, %s148
      %s149 = sphi 0, %s146
      %s150 = sphi 0, %s149
      %s166 = sphi 0, %s150
    $region4: #{tpu_custom_call.1} parent=1 // loop_header_branch
      %24 = sbr.rel (%p22) target = $region8
    $region5: #{tpu_custom_call.1} parent=1 // loop_body
      %s26 = ssub.s32 %s21, 1
      %s27 = ssub.s32 %s21, 2
      %s28 = sadd.s32 %s21, 1
      %s29 = ssub.s32 %s21, %s28
      %p30 = scmp.eq.s32.totalorder %s29, 0
      %s32 = sadd.s32 %s31, 1
      %s33 = scalar_select %p30, %s31, %s32
      %p36 = pneg %p30
      %p37 = scmp.eq.s32.totalorder %s21, 1
      %p38 = por %p36, %p37
      %p39 = scmp.ne.s32.totalorder %s31, %s34
      %p40 = scmp.eq.s32.totalorder %s21, 0
      %p41 = por %p39, %p40
      %p42 = scmp.ne.s32.totalorder %s31, %s34
      %p43 = scmp.eq.s32.totalorder %s26, 1
      %p44 = por %p42, %p43
      %p45 = scmp.ne.s32.totalorder %s34, %s35
      %p46 = scmp.eq.s32.totalorder %s26, 0
      %p47 = por %p45, %p46
      %p48 = scmp.ne.s32.totalorder %s34, %s35
      %p49 = scmp.eq.s32.totalorder %s27, 1
      %p50 = por %p48, %p49
      %p52 = scmp.ne.s32.totalorder %s35, %s51
      %p53 = scmp.eq.s32.totalorder %s27, 0
      %p54 = por %p52, %p53
      %s55 = ssub.s32 %s21, %s28
      %p56 = scmp.eq.s32.totalorder %s55, 0
      %s58 = sadd.s32 %s57, 1
      %s59 = scalar_select %p56, %s57, %s58
      %p62 = pneg %p56
      %p63 = scmp.eq.s32.totalorder %s21, 1
      %p64 = por %p62, %p63
      %p65 = scmp.ne.s32.totalorder %s57, %s60
      %p66 = scmp.eq.s32.totalorder %s21, 0
      %p67 = por %p65, %p66
      %p68 = scmp.ne.s32.totalorder %s57, %s60
      %p69 = scmp.eq.s32.totalorder %s26, 1
      %p70 = por %p68, %p69
      %p71 = scmp.ne.s32.totalorder %s60, %s61
      %p72 = scmp.eq.s32.totalorder %s26, 0
      %p73 = por %p71, %p72
      %p74 = scmp.ne.s32.totalorder %s60, %s61
      %p75 = scmp.eq.s32.totalorder %s27, 1
      %p76 = por %p74, %p75
      %p78 = scmp.ne.s32.totalorder %s61, %s77
      %p79 = scmp.eq.s32.totalorder %s27, 0
      %p80 = por %p78, %p79
      %s82 = sadd.s32 %s81, 1
      %p85 = scmp.eq.s32.totalorder %s21, 1
      %p86 = scmp.ne.s32.totalorder %s81, %s83
      %p87 = scmp.eq.s32.totalorder %s21, 0
      %p88 = por %p86, %p87
      %p89 = scmp.ne.s32.totalorder %s81, %s83
      %p90 = scmp.eq.s32.totalorder %s26, 1
      %p91 = por %p89, %p90
      %p92 = scmp.ne.s32.totalorder %s83, %s84
      %p93 = scmp.eq.s32.totalorder %s26, 0
      %p94 = por %p92, %p93
      %p95 = scmp.ne.s32.totalorder %s83, %s84
      %p96 = scmp.eq.s32.totalorder %s27, 1
      %p97 = por %p95, %p96
      %p99 = scmp.ne.s32.totalorder %s84, %s98
      %p100 = scmp.eq.s32.totalorder %s27, 0
      %p101 = por %p99, %p100
      %s103 = sadd.s32 %s102, 1
      %p106 = scmp.eq.s32.totalorder %s21, 1
      %p107 = scmp.ne.s32.totalorder %s102, %s104
      %p108 = scmp.eq.s32.totalorder %s21, 0
      %p109 = por %p107, %p108
      %p110 = scmp.ne.s32.totalorder %s102, %s104
      %p111 = scmp.eq.s32.totalorder %s26, 1
      %p112 = por %p110, %p111
      %p113 = scmp.ne.s32.totalorder %s104, %s105
      %p114 = scmp.eq.s32.totalorder %s26, 0
      %p115 = por %p113, %p114
      %p116 = scmp.ne.s32.totalorder %s104, %s105
      %p117 = scmp.eq.s32.totalorder %s27, 1
      %p118 = por %p116, %p117
      %p120 = scmp.ne.s32.totalorder %s105, %s119
      %p121 = scmp.eq.s32.totalorder %s27, 0
      %p122 = por %p120, %p121
      %s124 = sadd.s32 %s123, 1
      %p127 = scmp.eq.s32.totalorder %s21, 1
      %p128 = scmp.ne.s32.totalorder %s123, %s125
      %p129 = scmp.eq.s32.totalorder %s21, 0
      %p130 = por %p128, %p129
      %p131 = scmp.ne.s32.totalorder %s123, %s125
      %p132 = scmp.eq.s32.totalorder %s26, 1
      %p133 = por %p131, %p132
      %p134 = scmp.ne.s32.totalorder %s125, %s126
      %p135 = scmp.eq.s32.totalorder %s26, 0
      %p136 = por %p134, %p135
      %p137 = scmp.ne.s32.totalorder %s125, %s126
      %p138 = scmp.eq.s32.totalorder %s27, 1
      %p139 = por %p137, %p138
      %p141 = scmp.ne.s32.totalorder %s126, %s140
      %p142 = scmp.eq.s32.totalorder %s27, 0
      %p143 = por %p141, %p142
      %s144 = ssub.s32 %s21, %s28
      %p145 = scmp.eq.s32.totalorder %s144, 0
      %s147 = sadd.s32 %s146, 1
      %s148 = scalar_select %p145, %s146, %s147
      %p151 = pneg %p145
      %p152 = scmp.eq.s32.totalorder %s21, 1
      %p153 = por %p151, %p152
      %p154 = scmp.ne.s32.totalorder %s146, %s149
      %p155 = scmp.eq.s32.totalorder %s21, 0
      %p156 = por %p154, %p155
      %p157 = scmp.ne.s32.totalorder %s146, %s149
      %p158 = scmp.eq.s32.totalorder %s26, 1
      %p159 = por %p157, %p158
      %p160 = scmp.ne.s32.totalorder %s149, %s150
      %p161 = scmp.eq.s32.totalorder %s26, 0
      %p162 = por %p160, %p161
      %p163 = scmp.ne.s32.totalorder %s149, %s150
      %p164 = scmp.eq.s32.totalorder %s27, 1
      %p165 = por %p163, %p164
      %p167 = scmp.ne.s32.totalorder %s150, %s166
      %p168 = scmp.eq.s32.totalorder %s27, 0
      %p169 = por %p167, %p168
      %p170 = scmp.le.s32.totalorder 1, %s21
      %p171 = scmp.lt.s32.totalorder %s21, 3
      %p172 = pnand %p170, %p171
      %p173 = pneg %p172
      // Predicated region
      $region9: #{tpu_custom_call.1} parent=5 // pred_check
        _
      $region10: #{tpu_custom_call.1} parent=5 // pred_check_branch
        %175 = sbr.rel (%p172) target = $region12
      $region11: #{tpu_custom_call.1} parent=5 // pred_region
        %s176 = ssub.s32 %s21, 1
        // Predicated region
        $region13: #{tpu_custom_call.1} parent=11 // pred_check
          %p177 = pneg %p94
        $region14: #{tpu_custom_call.1} parent=11 // pred_check_branch
          %179 = sbr.rel (%p177) target = $region16
        $region15: #{tpu_custom_call.1} parent=11 // pred_region
          %181 = vsyncadd [#allocation6], 0
          %s182 = sshll.u32 %s2, 4
          %s183 = int_to_ptr.hbm [resolvable:$true] %s182
          %s184 = sshll.u32 [#allocation7], 4
          %s185 = int_to_ptr.vmem [resolvable:$true] %s184
          %190 = dma.hbm_to_vmem [thread:$0]  %s183, 256, %s185, [#allocation6], 64, 64, 4
        $region16: #{tpu_custom_call.1} parent=11 // pred_fallthru
          _
        // Predicated region
        $region17: #{tpu_custom_call.1} parent=11 // pred_check
          %p191 = pneg %p115
        $region18: #{tpu_custom_call.1} parent=11 // pred_check_branch
          %193 = sbr.rel (%p191) target = $region20
        $region19: #{tpu_custom_call.1} parent=11 // pred_region
          _
        $region20: #{tpu_custom_call.1} parent=11 // pred_fallthru
          _
        // Predicated region
        $region21: #{tpu_custom_call.1} parent=11 // pred_check
          %p194 = pneg %p136
        $region22: #{tpu_custom_call.1} parent=11 // pred_check_branch
          %196 = sbr.rel (%p194) target = $region24
        $region23: #{tpu_custom_call.1} parent=11 // pred_region
          %198 = vsyncadd [#allocation9], 0
          %s199 = sshll.u32 %s4, 4
          %s200 = int_to_ptr.hbm [resolvable:$true] %s199
          %s201 = sshll.u32 [#allocation8], 4
          %s202 = int_to_ptr.vmem [resolvable:$true] %s201
          %207 = dma.hbm_to_vmem [thread:$0]  %s200, 131072, %s202, [#allocation9], 1024, 1024, 64
        $region24: #{tpu_custom_call.1} parent=11 // pred_fallthru
          _
      $region12: #{tpu_custom_call.1} parent=5 // pred_fallthru
        _
      %p208 = scmp.lt.s32.totalorder %s21, 2
      // Predicated region
      $region25: #{tpu_custom_call.1} parent=5 // pred_check
        %p209 = pneg %p208
      $region26: #{tpu_custom_call.1} parent=5 // pred_check_branch
        %211 = sbr.rel (%p209) target = $region28
      $region27: #{tpu_custom_call.1} parent=5 // pred_region
        // Predicated region
        $region29: #{tpu_custom_call.1} parent=27 // pred_check
          %p212 = pneg %p41
        $region30: #{tpu_custom_call.1} parent=27 // pred_check_branch
          %214 = sbr.rel (%p212) target = $region32
        $region31: #{tpu_custom_call.1} parent=27 // pred_region
          %s215 = sand.u32 %s31, 1
          %s216 = scalar_lea.sflag [#allocation3], %s215
          %s217 = sand.u32 %s31, 1
          %s218 = smul.addr %s217, 16
          %s219 = scalar_lea.vmem [#allocation2], %s218
          %221 = vsyncadd %s216, 0
          %s222 = smul.addr %s21, 2
          %s223 = smul.addr %s222, 8
          %s224 = scalar_lea.hbm %s0, %s223
          %s226 = sshll.u32 %s224, 4
          %s227 = int_to_ptr.hbm [resolvable:$true] %s226
          %s228 = sshll.u32 %s219, 4
          %s229 = int_to_ptr.vmem [resolvable:$true] %s228
          %231 = dma.hbm_to_vmem [thread:$0]  %s227, 256, %s229, %s216
        $region32: #{tpu_custom_call.1} parent=27 // pred_fallthru
          _
        // Predicated region
        $region33: #{tpu_custom_call.1} parent=27 // pred_check
          %p232 = pneg %p67
        $region34: #{tpu_custom_call.1} parent=27 // pred_check_branch
          %234 = sbr.rel (%p232) target = $region36
        $region35: #{tpu_custom_call.1} parent=27 // pred_region
          %s235 = sand.u32 %s21, 1
          %s236 = scalar_lea.sflag [#allocation6], %s235
          %s237 = sand.u32 %s57, 1
          %s238 = smul.addr %s237, 32
          %s239 = scalar_lea.vmem [#allocation5], %s238
          %241 = vsyncadd %s236, 0
          %s242 = smul.addr %s21, 8
          %s243 = smul.addr %s242, 4
          %s244 = scalar_lea.hbm %s1, %s243
          %s246 = sshll.u32 %s244, 4
          %s247 = int_to_ptr.hbm [resolvable:$true] %s246
          %s248 = sshll.u32 %s239, 4
          %s249 = int_to_ptr.vmem [resolvable:$true] %s248
          %251 = dma.hbm_to_vmem [thread:$0]  %s247, 512, %s249, %s236
        $region36: #{tpu_custom_call.1} parent=27 // pred_fallthru
          _
      $region28: #{tpu_custom_call.1} parent=5 // pred_fallthru
        _
      %p252 = scmp.le.s32.totalorder 1, %s21
      %p253 = scmp.lt.s32.totalorder %s21, 3
      %p254 = pnand %p252, %p253
      %p255 = pneg %p254
      // Predicated region
      $region37: #{tpu_custom_call.1} parent=5 // pred_check
        _
      $region38: #{tpu_custom_call.1} parent=5 // pred_check_branch
        %257 = sbr.rel (%p254) target = $region40
      $region39: #{tpu_custom_call.1} parent=5 // pred_region
        %s258 = ssub.s32 %s21, 1
        %s259 = sand.u32 %s34, 1
        %s260 = scalar_lea.sflag [#allocation3], %s259
        %s261 = sand.u32 %s34, 1
        %s262 = smul.addr %s261, 16
        %s263 = scalar_lea.vmem [#allocation2], %s262
        // Predicated region
        $region41: #{tpu_custom_call.1} parent=39 // pred_check
          %p264 = pneg %p47
        $region42: #{tpu_custom_call.1} parent=39 // pred_check_branch
          %266 = sbr.rel (%p264) target = $region44
        $region43: #{tpu_custom_call.1} parent=39 // pred_region
          %268 = dma.done %s260, 256
        $region44: #{tpu_custom_call.1} parent=39 // pred_fallthru
          _
        %s269 = sand.u32 %s26, 1
        %s270 = scalar_lea.sflag [#allocation6], %s269
        %s271 = sand.u32 %s60, 1
        %s272 = smul.addr %s271, 32
        %s273 = scalar_lea.vmem [#allocation5], %s272
        // Predicated region
        $region45: #{tpu_custom_call.1} parent=39 // pred_check
          %p274 = pneg %p73
        $region46: #{tpu_custom_call.1} parent=39 // pred_check_branch
          %276 = sbr.rel (%p274) target = $region48
        $region47: #{tpu_custom_call.1} parent=39 // pred_region
          %278 = dma.done %s270, 512
        $region48: #{tpu_custom_call.1} parent=39 // pred_fallthru
          _
        // Predicated region
        $region49: #{tpu_custom_call.1} parent=39 // pred_check
          %p279 = pneg %p94
        $region50: #{tpu_custom_call.1} parent=39 // pred_check_branch
          %281 = sbr.rel (%p279) target = $region52
        $region51: #{tpu_custom_call.1} parent=39 // pred_region
          %283 = dma.done [#allocation6], 256
        $region52: #{tpu_custom_call.1} parent=39 // pred_fallthru
          _
        // Predicated region
        $region53: #{tpu_custom_call.1} parent=39 // pred_check
          %p284 = pneg %p136
        $region54: #{tpu_custom_call.1} parent=39 // pred_check_branch
          %286 = sbr.rel (%p284) target = $region56
        $region55: #{tpu_custom_call.1} parent=39 // pred_region
          %288 = dma.done [#allocation9], 131072
        $region56: #{tpu_custom_call.1} parent=39 // pred_fallthru
          _
        %s289 = sand.u32 %s34, 1
        %s290 = scalar_lea.sflag [#allocation3], %s289
        %s291 = sand.u32 %s34, 1
        %s292 = smul.addr %s291, 16
        %s293 = scalar_lea.vmem [#allocation2], %s292
        %p294 = pneg %p47
        %p295 = pneg %p44
        %s296 = sand.u32 %s26, 1
        %s297 = scalar_lea.sflag [#allocation6], %s296
        %s298 = sand.u32 %s60, 1
        %s299 = smul.addr %s298, 32
        %s300 = scalar_lea.vmem [#allocation5], %s299
        %p301 = pneg %p73
        %p302 = pneg %p70
        %p303 = pneg %p94
        %p304 = pneg %p91
        %p305 = pneg %p115
        %p306 = pneg %p112
        %p307 = pneg %p136
        %p308 = pneg %p133
        %p309 = pneg %p162
        %p310 = pneg %p159
        %s311 = sand.u32 %s149, 1
        %s312 = scalar_lea.sflag [#allocation4], %s311
        %s313 = sand.u32 %s149, 1
        %s314 = smul.addr %s313, 64
        %s315 = scalar_lea.vmem [#allocation10], %s314
        %v316 = vld [vmem:[%s263] sm:$0xff]
        %v317 = vld [vmem:[%s263 + $0x8] sm:$0xff]
        %v318 = vld [vmem:[#allocation7] sm:$0xf]
        %vm319 = vcmask 64512
        %v321 = vsel %vm319, %v318, 0
        %323 = vmatpush.msra.mxu0 0.0
        %324 = vmatpush.msra.mxu0 0.0
        %325 = vmatpush.msra.mxu0 0.0
        %326 = vmatpush.msra.mxu0 0.0
        %327 = vmatpush.msra.mxu0 0.0
        %328 = vmatpush.msra.mxu0 0.0
        %329 = vmatpush.msra.mxu0 0.0
        %330 = vmatpush.msra.mxu0 0.0
        %331 = vmatpush.msra.mxu0 0.0
        %332 = vmatpush.msra.mxu0 0.0
        %333 = vmatpush.msra.mxu0 0.0
        %334 = vmatpush.msra.mxu0 0.0
        %335 = vmatpush.msra.mxu0 0.0
        %336 = vmatpush.msra.mxu0 0.0
        %337 = vmatpush.msra.mxu0 0.0
        %338 = vmatpush.msra.mxu0 %v316
        %339 = vmatmul.f32.gmra.mxu0 %v321
        %v340 = vpop.f32.mrf.mxu0
        %v341 = vadd.f32 0.0, %v340
        %342 = vdwg.mxu0
        %343 = vmatpush.msra.mxu0 0.0
        %344 = vmatpush.msra.mxu0 0.0
        %345 = vmatpush.msra.mxu0 0.0
        %346 = vmatpush.msra.mxu0 0.0
        %347 = vmatpush.msra.mxu0 0.0
        %348 = vmatpush.msra.mxu0 0.0
        %349 = vmatpush.msra.mxu0 0.0
        %350 = vmatpush.msra.mxu0 0.0
        %351 = vmatpush.msra.mxu0 0.0
        %352 = vmatpush.msra.mxu0 0.0
        %353 = vmatpush.msra.mxu0 0.0
        %354 = vmatpush.msra.mxu0 0.0
        %355 = vmatpush.msra.mxu0 0.0
        %356 = vmatpush.msra.mxu0 0.0
        %357 = vmatpush.msra.mxu0 0.0
        %358 = vmatpush.msra.mxu0 %v317
        %359 = vmatmul.f32.gmra.mxu0 %v321
        %v360 = vpop.f32.mrf.mxu0
        %v361 = vadd.f32 0.0, %v360
        %362 = vdwg.mxu0
        %v363 = vld [vmem:[#allocation8] sm:$0xff]
        %v364 = vld [vmem:[#allocation8 + $0x8] sm:$0xff]
        %v365 = vld [vmem:[#allocation8 + $0x10] sm:$0xff]
        %v366 = vld [vmem:[#allocation8 + $0x18] sm:$0xff]
        %v367 = vld [vmem:[#allocation8 + $0x20] sm:$0xff]
        %v368 = vld [vmem:[#allocation8 + $0x28] sm:$0xff]
        %v369 = vld [vmem:[#allocation8 + $0x30] sm:$0xff]
        %v370 = vld [vmem:[#allocation8 + $0x38] sm:$0xff]
        %v371 = vld [vmem:[#allocation8 + $0x40] sm:$0xff]
        %v372 = vld [vmem:[#allocation8 + $0x48] sm:$0xff]
        %v373 = vld [vmem:[#allocation8 + $0x50] sm:$0xff]
        %v374 = vld [vmem:[#allocation8 + $0x58] sm:$0xff]
        %v375 = vld [vmem:[#allocation8 + $0x60] sm:$0xff]
        %v376 = vld [vmem:[#allocation8 + $0x68] sm:$0xff]
        %v377 = vld [vmem:[#allocation8 + $0x70] sm:$0xff]
        %v378 = vld [vmem:[#allocation8 + $0x78] sm:$0xff]
        %v379 = vld [vmem:[#allocation8 + $0x80] sm:$0xff]
        %v380 = vld [vmem:[#allocation8 + $0x88] sm:$0xff]
        %v381 = vld [vmem:[#allocation8 + $0x90] sm:$0xff]
        %v382 = vld [vmem:[#allocation8 + $0x98] sm:$0xff]
        %v383 = vld [vmem:[#allocation8 + $0xa0] sm:$0xff]
        %v384 = vld [vmem:[#allocation8 + $0xa8] sm:$0xff]
        %v385 = vld [vmem:[#allocation8 + $0xb0] sm:$0xff]
        %v386 = vld [vmem:[#allocation8 + $0xb8] sm:$0xff]
        %v387 = vld [vmem:[#allocation8 + $0xc0] sm:$0xff]
        %v388 = vld [vmem:[#allocation8 + $0xc8] sm:$0xff]
        %v389 = vld [vmem:[#allocation8 + $0xd0] sm:$0xff]
        %v390 = vld [vmem:[#allocation8 + $0xd8] sm:$0xff]
        %v391 = vld [vmem:[#allocation8 + $0xe0] sm:$0xff]
        %v392 = vld [vmem:[#allocation8 + $0xe8] sm:$0xff]
        %v393 = vld [vmem:[#allocation8 + $0xf0] sm:$0xff]
        %v394 = vld [vmem:[#allocation8 + $0xf8] sm:$0xff]
        %v395 = vld [vmem:[#allocation8 + $0x100] sm:$0xff]
        %v396 = vld [vmem:[#allocation8 + $0x108] sm:$0xff]
        %v397 = vld [vmem:[#allocation8 + $0x110] sm:$0xff]
        %v398 = vld [vmem:[#allocation8 + $0x118] sm:$0xff]
        %v399 = vld [vmem:[#allocation8 + $0x120] sm:$0xff]
        %v400 = vld [vmem:[#allocation8 + $0x128] sm:$0xff]
        %v401 = vld [vmem:[#allocation8 + $0x130] sm:$0xff]
        %v402 = vld [vmem:[#allocation8 + $0x138] sm:$0xff]
        %v403 = vld [vmem:[#allocation8 + $0x140] sm:$0xff]
        %v404 = vld [vmem:[#allocation8 + $0x148] sm:$0xff]
        %v405 = vld [vmem:[#allocation8 + $0x150] sm:$0xff]
        %v406 = vld [vmem:[#allocation8 + $0x158] sm:$0xff]
        %v407 = vld [vmem:[#allocation8 + $0x160] sm:$0xff]
        %v408 = vld [vmem:[#allocation8 + $0x168] sm:$0xff]
        %v409 = vld [vmem:[#allocation8 + $0x170] sm:$0xff]
        %v410 = vld [vmem:[#allocation8 + $0x178] sm:$0xff]
        %v411 = vld [vmem:[#allocation8 + $0x180] sm:$0xff]
        %v412 = vld [vmem:[#allocation8 + $0x188] sm:$0xff]
        %v413 = vld [vmem:[#allocation8 + $0x190] sm:$0xff]
        %v414 = vld [vmem:[#allocation8 + $0x198] sm:$0xff]
        %v415 = vld [vmem:[#allocation8 + $0x1a0] sm:$0xff]
        %v416 = vld [vmem:[#allocation8 + $0x1a8] sm:$0xff]
        %v417 = vld [vmem:[#allocation8 + $0x1b0] sm:$0xff]
        %v418 = vld [vmem:[#allocation8 + $0x1b8] sm:$0xff]
        %v419 = vld [vmem:[#allocation8 + $0x1c0] sm:$0xff]
        %v420 = vld [vmem:[#allocation8 + $0x1c8] sm:$0xff]
        %v421 = vld [vmem:[#allocation8 + $0x1d0] sm:$0xff]
        %v422 = vld [vmem:[#allocation8 + $0x1d8] sm:$0xff]
        %v423 = vld [vmem:[#allocation8 + $0x1e0] sm:$0xff]
        %v424 = vld [vmem:[#allocation8 + $0x1e8] sm:$0xff]
        %v425 = vld [vmem:[#allocation8 + $0x1f0] sm:$0xff]
        %v426 = vld [vmem:[#allocation8 + $0x1f8] sm:$0xff]
        %v427 = vld [vmem:[#allocation8 + $0x200] sm:$0xff]
        %v428 = vld [vmem:[#allocation8 + $0x208] sm:$0xff]
        %v429 = vld [vmem:[#allocation8 + $0x210] sm:$0xff]
        %v430 = vld [vmem:[#allocation8 + $0x218] sm:$0xff]
        %v431 = vld [vmem:[#allocation8 + $0x220] sm:$0xff]
        %v432 = vld [vmem:[#allocation8 + $0x228] sm:$0xff]
        %v433 = vld [vmem:[#allocation8 + $0x230] sm:$0xff]
        %v434 = vld [vmem:[#allocation8 + $0x238] sm:$0xff]
        %v435 = vld [vmem:[#allocation8 + $0x240] sm:$0xff]
        %v436 = vld [vmem:[#allocation8 + $0x248] sm:$0xff]
        %v437 = vld [vmem:[#allocation8 + $0x250] sm:$0xff]
        %v438 = vld [vmem:[#allocation8 + $0x258] sm:$0xff]
        %v439 = vld [vmem:[#allocation8 + $0x260] sm:$0xff]
        %v440 = vld [vmem:[#allocation8 + $0x268] sm:$0xff]
        %v441 = vld [vmem:[#allocation8 + $0x270] sm:$0xff]
        %v442 = vld [vmem:[#allocation8 + $0x278] sm:$0xff]
        %v443 = vld [vmem:[#allocation8 + $0x280] sm:$0xff]
        %v444 = vld [vmem:[#allocation8 + $0x288] sm:$0xff]
        %v445 = vld [vmem:[#allocation8 + $0x290] sm:$0xff]
        %v446 = vld [vmem:[#allocation8 + $0x298] sm:$0xff]
        %v447 = vld [vmem:[#allocation8 + $0x2a0] sm:$0xff]
        %v448 = vld [vmem:[#allocation8 + $0x2a8] sm:$0xff]
        %v449 = vld [vmem:[#allocation8 + $0x2b0] sm:$0xff]
        %v450 = vld [vmem:[#allocation8 + $0x2b8] sm:$0xff]
        %v451 = vld [vmem:[#allocation8 + $0x2c0] sm:$0xff]
        %v452 = vld [vmem:[#allocation8 + $0x2c8] sm:$0xff]
        %v453 = vld [vmem:[#allocation8 + $0x2d0] sm:$0xff]
        %v454 = vld [vmem:[#allocation8 + $0x2d8] sm:$0xff]
        %v455 = vld [vmem:[#allocation8 + $0x2e0] sm:$0xff]
        %v456 = vld [vmem:[#allocation8 + $0x2e8] sm:$0xff]
        %v457 = vld [vmem:[#allocation8 + $0x2f0] sm:$0xff]
        %v458 = vld [vmem:[#allocation8 + $0x2f8] sm:$0xff]
        %v459 = vld [vmem:[#allocation8 + $0x300] sm:$0xff]
        %v460 = vld [vmem:[#allocation8 + $0x308] sm:$0xff]
        %v461 = vld [vmem:[#allocation8 + $0x310] sm:$0xff]
        %v462 = vld [vmem:[#allocation8 + $0x318] sm:$0xff]
        %v463 = vld [vmem:[#allocation8 + $0x320] sm:$0xff]
        %v464 = vld [vmem:[#allocation8 + $0x328] sm:$0xff]
        %v465 = vld [vmem:[#allocation8 + $0x330] sm:$0xff]
        %v466 = vld [vmem:[#allocation8 + $0x338] sm:$0xff]
        %v467 = vld [vmem:[#allocation8 + $0x340] sm:$0xff]
        %v468 = vld [vmem:[#allocation8 + $0x348] sm:$0xff]
        %v469 = vld [vmem:[#allocation8 + $0x350] sm:$0xff]
        %v470 = vld [vmem:[#allocation8 + $0x358] sm:$0xff]
        %v471 = vld [vmem:[#allocation8 + $0x360] sm:$0xff]
        %v472 = vld [vmem:[#allocation8 + $0x368] sm:$0xff]
        %v473 = vld [vmem:[#allocation8 + $0x370] sm:$0xff]
        %v474 = vld [vmem:[#allocation8 + $0x378] sm:$0xff]
        %v475 = vld [vmem:[#allocation8 + $0x380] sm:$0xff]
        %v476 = vld [vmem:[#allocation8 + $0x388] sm:$0xff]
        %v477 = vld [vmem:[#allocation8 + $0x390] sm:$0xff]
        %v478 = vld [vmem:[#allocation8 + $0x398] sm:$0xff]
        %v479 = vld [vmem:[#allocation8 + $0x3a0] sm:$0xff]
        %v480 = vld [vmem:[#allocation8 + $0x3a8] sm:$0xff]
        %v481 = vld [vmem:[#allocation8 + $0x3b0] sm:$0xff]
        %v482 = vld [vmem:[#allocation8 + $0x3b8] sm:$0xff]
        %v483 = vld [vmem:[#allocation8 + $0x3c0] sm:$0xff]
        %v484 = vld [vmem:[#allocation8 + $0x3c8] sm:$0xff]
        %v485 = vld [vmem:[#allocation8 + $0x3d0] sm:$0xff]
        %v486 = vld [vmem:[#allocation8 + $0x3d8] sm:$0xff]
        %v487 = vld [vmem:[#allocation8 + $0x3e0] sm:$0xff]
        %v488 = vld [vmem:[#allocation8 + $0x3e8] sm:$0xff]
        %v489 = vld [vmem:[#allocation8 + $0x3f0] sm:$0xff]
        %v490 = vld [vmem:[#allocation8 + $0x3f8] sm:$0xff]
        %v491 = vld [vmem:[#allocation8 + $0x400] sm:$0xff]
        %v492 = vld [vmem:[#allocation8 + $0x408] sm:$0xff]
        %v493 = vld [vmem:[#allocation8 + $0x410] sm:$0xff]
        %v494 = vld [vmem:[#allocation8 + $0x418] sm:$0xff]
        %v495 = vld [vmem:[#allocation8 + $0x420] sm:$0xff]
        %v496 = vld [vmem:[#allocation8 + $0x428] sm:$0xff]
        %v497 = vld [vmem:[#allocation8 + $0x430] sm:$0xff]
        %v498 = vld [vmem:[#allocation8 + $0x438] sm:$0xff]
        %v499 = vld [vmem:[#allocation8 + $0x440] sm:$0xff]
        %v500 = vld [vmem:[#allocation8 + $0x448] sm:$0xff]
        %v501 = vld [vmem:[#allocation8 + $0x450] sm:$0xff]
        %v502 = vld [vmem:[#allocation8 + $0x458] sm:$0xff]
        %v503 = vld [vmem:[#allocation8 + $0x460] sm:$0xff]
        %v504 = vld [vmem:[#allocation8 + $0x468] sm:$0xff]
        %v505 = vld [vmem:[#allocation8 + $0x470] sm:$0xff]
        %v506 = vld [vmem:[#allocation8 + $0x478] sm:$0xff]
        %v507 = vld [vmem:[#allocation8 + $0x480] sm:$0xff]
        %v508 = vld [vmem:[#allocation8 + $0x488] sm:$0xff]
        %v509 = vld [vmem:[#allocation8 + $0x490] sm:$0xff]
        %v510 = vld [vmem:[#allocation8 + $0x498] sm:$0xff]
        %v511 = vld [vmem:[#allocation8 + $0x4a0] sm:$0xff]
        %v512 = vld [vmem:[#allocation8 + $0x4a8] sm:$0xff]
        %v513 = vld [vmem:[#allocation8 + $0x4b0] sm:$0xff]
        %v514 = vld [vmem:[#allocation8 + $0x4b8] sm:$0xff]
        %v515 = vld [vmem:[#allocation8 + $0x4c0] sm:$0xff]
        %v516 = vld [vmem:[#allocation8 + $0x4c8] sm:$0xff]
        %v517 = vld [vmem:[#allocation8 + $0x4d0] sm:$0xff]
        %v518 = vld [vmem:[#allocation8 + $0x4d8] sm:$0xff]
        %v519 = vld [vmem:[#allocation8 + $0x4e0] sm:$0xff]
        %v520 = vld [vmem:[#allocation8 + $0x4e8] sm:$0xff]
        %v521 = vld [vmem:[#allocation8 + $0x4f0] sm:$0xff]
        %v522 = vld [vmem:[#allocation8 + $0x4f8] sm:$0xff]
        %v523 = vld [vmem:[#allocation8 + $0x500] sm:$0xff]
        %v524 = vld [vmem:[#allocation8 + $0x508] sm:$0xff]
        %v525 = vld [vmem:[#allocation8 + $0x510] sm:$0xff]
        %v526 = vld [vmem:[#allocation8 + $0x518] sm:$0xff]
        %v527 = vld [vmem:[#allocation8 + $0x520] sm:$0xff]
        %v528 = vld [vmem:[#allocation8 + $0x528] sm:$0xff]
        %v529 = vld [vmem:[#allocation8 + $0x530] sm:$0xff]
        %v530 = vld [vmem:[#allocation8 + $0x538] sm:$0xff]
        %v531 = vld [vmem:[#allocation8 + $0x540] sm:$0xff]
        %v532 = vld [vmem:[#allocation8 + $0x548] sm:$0xff]
        %v533 = vld [vmem:[#allocation8 + $0x550] sm:$0xff]
        %v534 = vld [vmem:[#allocation8 + $0x558] sm:$0xff]
        %v535 = vld [vmem:[#allocation8 + $0x560] sm:$0xff]
        %v536 = vld [vmem:[#allocation8 + $0x568] sm:$0xff]
        %v537 = vld [vmem:[#allocation8 + $0x570] sm:$0xff]
        %v538 = vld [vmem:[#allocation8 + $0x578] sm:$0xff]
        %v539 = vld [vmem:[#allocation8 + $0x580] sm:$0xff]
        %v540 = vld [vmem:[#allocation8 + $0x588] sm:$0xff]
        %v541 = vld [vmem:[#allocation8 + $0x590] sm:$0xff]
        %v542 = vld [vmem:[#allocation8 + $0x598] sm:$0xff]
        %v543 = vld [vmem:[#allocation8 + $0x5a0] sm:$0xff]
        %v544 = vld [vmem:[#allocation8 + $0x5a8] sm:$0xff]
        %v545 = vld [vmem:[#allocation8 + $0x5b0] sm:$0xff]
        %v546 = vld [vmem:[#allocation8 + $0x5b8] sm:$0xff]
        %v547 = vld [vmem:[#allocation8 + $0x5c0] sm:$0xff]
        %v548 = vld [vmem:[#allocation8 + $0x5c8] sm:$0xff]
        %v549 = vld [vmem:[#allocation8 + $0x5d0] sm:$0xff]
        %v550 = vld [vmem:[#allocation8 + $0x5d8] sm:$0xff]
        %v551 = vld [vmem:[#allocation8 + $0x5e0] sm:$0xff]
        %v552 = vld [vmem:[#allocation8 + $0x5e8] sm:$0xff]
        %v553 = vld [vmem:[#allocation8 + $0x5f0] sm:$0xff]
        %v554 = vld [vmem:[#allocation8 + $0x5f8] sm:$0xff]
        %v555 = vld [vmem:[#allocation8 + $0x600] sm:$0xff]
        %v556 = vld [vmem:[#allocation8 + $0x608] sm:$0xff]
        %v557 = vld [vmem:[#allocation8 + $0x610] sm:$0xff]
        %v558 = vld [vmem:[#allocation8 + $0x618] sm:$0xff]
        %v559 = vld [vmem:[#allocation8 + $0x620] sm:$0xff]
        %v560 = vld [vmem:[#allocation8 + $0x628] sm:$0xff]
        %v561 = vld [vmem:[#allocation8 + $0x630] sm:$0xff]
        %v562 = vld [vmem:[#allocation8 + $0x638] sm:$0xff]
        %v563 = vld [vmem:[#allocation8 + $0x640] sm:$0xff]
        %v564 = vld [vmem:[#allocation8 + $0x648] sm:$0xff]
        %v565 = vld [vmem:[#allocation8 + $0x650] sm:$0xff]
        %v566 = vld [vmem:[#allocation8 + $0x658] sm:$0xff]
        %v567 = vld [vmem:[#allocation8 + $0x660] sm:$0xff]
        %v568 = vld [vmem:[#allocation8 + $0x668] sm:$0xff]
        %v569 = vld [vmem:[#allocation8 + $0x670] sm:$0xff]
        %v570 = vld [vmem:[#allocation8 + $0x678] sm:$0xff]
        %v571 = vld [vmem:[#allocation8 + $0x680] sm:$0xff]
        %v572 = vld [vmem:[#allocation8 + $0x688] sm:$0xff]
        %v573 = vld [vmem:[#allocation8 + $0x690] sm:$0xff]
        %v574 = vld [vmem:[#allocation8 + $0x698] sm:$0xff]
        %v575 = vld [vmem:[#allocation8 + $0x6a0] sm:$0xff]
        %v576 = vld [vmem:[#allocation8 + $0x6a8] sm:$0xff]
        %v577 = vld [vmem:[#allocation8 + $0x6b0] sm:$0xff]
        %v578 = vld [vmem:[#allocation8 + $0x6b8] sm:$0xff]
        %v579 = vld [vmem:[#allocation8 + $0x6c0] sm:$0xff]
        %v580 = vld [vmem:[#allocation8 + $0x6c8] sm:$0xff]
        %v581 = vld [vmem:[#allocation8 + $0x6d0] sm:$0xff]
        %v582 = vld [vmem:[#allocation8 + $0x6d8] sm:$0xff]
        %v583 = vld [vmem:[#allocation8 + $0x6e0] sm:$0xff]
        %v584 = vld [vmem:[#allocation8 + $0x6e8] sm:$0xff]
        %v585 = vld [vmem:[#allocation8 + $0x6f0] sm:$0xff]
        %v586 = vld [vmem:[#allocation8 + $0x6f8] sm:$0xff]
        %v587 = vld [vmem:[#allocation8 + $0x700] sm:$0xff]
        %v588 = vld [vmem:[#allocation8 + $0x708] sm:$0xff]
        %v589 = vld [vmem:[#allocation8 + $0x710] sm:$0xff]
        %v590 = vld [vmem:[#allocation8 + $0x718] sm:$0xff]
        %v591 = vld [vmem:[#allocation8 + $0x720] sm:$0xff]
        %v592 = vld [vmem:[#allocation8 + $0x728] sm:$0xff]
        %v593 = vld [vmem:[#allocation8 + $0x730] sm:$0xff]
        %v594 = vld [vmem:[#allocation8 + $0x738] sm:$0xff]
        %v595 = vld [vmem:[#allocation8 + $0x740] sm:$0xff]
        %v596 = vld [vmem:[#allocation8 + $0x748] sm:$0xff]
        %v597 = vld [vmem:[#allocation8 + $0x750] sm:$0xff]
        %v598 = vld [vmem:[#allocation8 + $0x758] sm:$0xff]
        %v599 = vld [vmem:[#allocation8 + $0x760] sm:$0xff]
        %v600 = vld [vmem:[#allocation8 + $0x768] sm:$0xff]
        %v601 = vld [vmem:[#allocation8 + $0x770] sm:$0xff]
        %v602 = vld [vmem:[#allocation8 + $0x778] sm:$0xff]
        %v603 = vld [vmem:[#allocation8 + $0x780] sm:$0xff]
        %v604 = vld [vmem:[#allocation8 + $0x788] sm:$0xff]
        %v605 = vld [vmem:[#allocation8 + $0x790] sm:$0xff]
        %v606 = vld [vmem:[#allocation8 + $0x798] sm:$0xff]
        %v607 = vld [vmem:[#allocation8 + $0x7a0] sm:$0xff]
        %v608 = vld [vmem:[#allocation8 + $0x7a8] sm:$0xff]
        %v609 = vld [vmem:[#allocation8 + $0x7b0] sm:$0xff]
        %v610 = vld [vmem:[#allocation8 + $0x7b8] sm:$0xff]
        %v611 = vld [vmem:[#allocation8 + $0x7c0] sm:$0xff]
        %v612 = vld [vmem:[#allocation8 + $0x7c8] sm:$0xff]
        %v613 = vld [vmem:[#allocation8 + $0x7d0] sm:$0xff]
        %v614 = vld [vmem:[#allocation8 + $0x7d8] sm:$0xff]
        %v615 = vld [vmem:[#allocation8 + $0x7e0] sm:$0xff]
        %v616 = vld [vmem:[#allocation8 + $0x7e8] sm:$0xff]
        %v617 = vld [vmem:[#allocation8 + $0x7f0] sm:$0xff]
        %v618 = vld [vmem:[#allocation8 + $0x7f8] sm:$0xff]
        %s619 = scalar_lea.vmem [#allocation7], 4
        %v620 = vld [vmem:[%s619] sm:$0xf]
        %v622 = vsel %vm319, %v620, 0
        %624 = vmatpush.msra.mxu0 0.0
        %625 = vmatpush.msra.mxu0 0.0
        %626 = vmatpush.msra.mxu0 0.0
        %627 = vmatpush.msra.mxu0 0.0
        %628 = vmatpush.msra.mxu0 0.0
        %629 = vmatpush.msra.mxu0 0.0
        %630 = vmatpush.msra.mxu0 0.0
        %631 = vmatpush.msra.mxu0 0.0
        %632 = vmatpush.msra.mxu0 0.0
        %633 = vmatpush.msra.mxu0 0.0
        %634 = vmatpush.msra.mxu0 0.0
        %635 = vmatpush.msra.mxu0 0.0
        %636 = vmatpush.msra.mxu0 0.0
        %637 = vmatpush.msra.mxu0 0.0
        %638 = vmatpush.msra.mxu0 0.0
        %639 = vmatpush.msra.mxu0 %v316
        %640 = vmatmul.f32.gmra.mxu0 %v622
        %v641 = vpop.f32.mrf.mxu0
        %v642 = vadd.f32 0.0, %v641
        %643 = vdwg.mxu0
        %644 = vmatpush.msra.mxu0 0.0
        %645 = vmatpush.msra.mxu0 0.0
        %646 = vmatpush.msra.mxu0 0.0
        %647 = vmatpush.msra.mxu0 0.0
        %648 = vmatpush.msra.mxu0 0.0
        %649 = vmatpush.msra.mxu0 0.0
        %650 = vmatpush.msra.mxu0 0.0
        %651 = vmatpush.msra.mxu0 0.0
        %652 = vmatpush.msra.mxu0 0.0
        %653 = vmatpush.msra.mxu0 0.0
        %654 = vmatpush.msra.mxu0 0.0
        %655 = vmatpush.msra.mxu0 0.0
        %656 = vmatpush.msra.mxu0 0.0
        %657 = vmatpush.msra.mxu0 0.0
        %658 = vmatpush.msra.mxu0 0.0
        %659 = vmatpush.msra.mxu0 %v317
        %660 = vmatmul.f32.gmra.mxu0 %v622
        %v661 = vpop.f32.mrf.mxu0
        %v662 = vadd.f32 0.0, %v661
        %663 = vdwg.mxu0
        %s664 = scalar_lea.vmem [#allocation8], 2048
        %v665 = vld [vmem:[%s664] sm:$0xff]
        %v666 = vld [vmem:[%s664 + $0x8] sm:$0xff]
        %v667 = vld [vmem:[%s664 + $0x10] sm:$0xff]
        %v668 = vld [vmem:[%s664 + $0x18] sm:$0xff]
        %v669 = vld [vmem:[%s664 + $0x20] sm:$0xff]
        %v670 = vld [vmem:[%s664 + $0x28] sm:$0xff]
        %v671 = vld [vmem:[%s664 + $0x30] sm:$0xff]
        %v672 = vld [vmem:[%s664 + $0x38] sm:$0xff]
        %v673 = vld [vmem:[%s664 + $0x40] sm:$0xff]
        %v674 = vld [vmem:[%s664 + $0x48] sm:$0xff]
        %v675 = vld [vmem:[%s664 + $0x50] sm:$0xff]
        %v676 = vld [vmem:[%s664 + $0x58] sm:$0xff]
        %v677 = vld [vmem:[%s664 + $0x60] sm:$0xff]
        %v678 = vld [vmem:[%s664 + $0x68] sm:$0xff]
        %v679 = vld [vmem:[%s664 + $0x70] sm:$0xff]
        %v680 = vld [vmem:[%s664 + $0x78] sm:$0xff]
        %v681 = vld [vmem:[%s664 + $0x80] sm:$0xff]
        %v682 = vld [vmem:[%s664 + $0x88] sm:$0xff]
        %v683 = vld [vmem:[%s664 + $0x90] sm:$0xff]
        %v684 = vld [vmem:[%s664 + $0x98] sm:$0xff]
        %v685 = vld [vmem:[%s664 + $0xa0] sm:$0xff]
        %v686 = vld [vmem:[%s664 + $0xa8] sm:$0xff]
        %v687 = vld [vmem:[%s664 + $0xb0] sm:$0xff]
        %v688 = vld [vmem:[%s664 + $0xb8] sm:$0xff]
        %v689 = vld [vmem:[%s664 + $0xc0] sm:$0xff]
        %v690 = vld [vmem:[%s664 + $0xc8] sm:$0xff]
        %v691 = vld [vmem:[%s664 + $0xd0] sm:$0xff]
        %v692 = vld [vmem:[%s664 + $0xd8] sm:$0xff]
        %v693 = vld [vmem:[%s664 + $0xe0] sm:$0xff]
        %v694 = vld [vmem:[%s664 + $0xe8] sm:$0xff]
        %v695 = vld [vmem:[%s664 + $0xf0] sm:$0xff]
        %v696 = vld [vmem:[%s664 + $0xf8] sm:$0xff]
        %v697 = vld [vmem:[%s664 + $0x100] sm:$0xff]
        %v698 = vld [vmem:[%s664 + $0x108] sm:$0xff]
        %v699 = vld [vmem:[%s664 + $0x110] sm:$0xff]
        %v700 = vld [vmem:[%s664 + $0x118] sm:$0xff]
        %v701 = vld [vmem:[%s664 + $0x120] sm:$0xff]
        %v702 = vld [vmem:[%s664 + $0x128] sm:$0xff]
        %v703 = vld [vmem:[%s664 + $0x130] sm:$0xff]
        %v704 = vld [vmem:[%s664 + $0x138] sm:$0xff]
        %v705 = vld [vmem:[%s664 + $0x140] sm:$0xff]
        %v706 = vld [vmem:[%s664 + $0x148] sm:$0xff]
        %v707 = vld [vmem:[%s664 + $0x150] sm:$0xff]
        %v708 = vld [vmem:[%s664 + $0x158] sm:$0xff]
        %v709 = vld [vmem:[%s664 + $0x160] sm:$0xff]
        %v710 = vld [vmem:[%s664 + $0x168] sm:$0xff]
        %v711 = vld [vmem:[%s664 + $0x170] sm:$0xff]
        %v712 = vld [vmem:[%s664 + $0x178] sm:$0xff]
        %v713 = vld [vmem:[%s664 + $0x180] sm:$0xff]
        %v714 = vld [vmem:[%s664 + $0x188] sm:$0xff]
        %v715 = vld [vmem:[%s664 + $0x190] sm:$0xff]
        %v716 = vld [vmem:[%s664 + $0x198] sm:$0xff]
        %v717 = vld [vmem:[%s664 + $0x1a0] sm:$0xff]
        %v718 = vld [vmem:[%s664 + $0x1a8] sm:$0xff]
        %v719 = vld [vmem:[%s664 + $0x1b0] sm:$0xff]
        %v720 = vld [vmem:[%s664 + $0x1b8] sm:$0xff]
        %v721 = vld [vmem:[%s664 + $0x1c0] sm:$0xff]
        %v722 = vld [vmem:[%s664 + $0x1c8] sm:$0xff]
        %v723 = vld [vmem:[%s664 + $0x1d0] sm:$0xff]
        %v724 = vld [vmem:[%s664 + $0x1d8] sm:$0xff]
        %v725 = vld [vmem:[%s664 + $0x1e0] sm:$0xff]
        %v726 = vld [vmem:[%s664 + $0x1e8] sm:$0xff]
        %v727 = vld [vmem:[%s664 + $0x1f0] sm:$0xff]
        %v728 = vld [vmem:[%s664 + $0x1f8] sm:$0xff]
        %v729 = vld [vmem:[%s664 + $0x200] sm:$0xff]
        %v730 = vld [vmem:[%s664 + $0x208] sm:$0xff]
        %v731 = vld [vmem:[%s664 + $0x210] sm:$0xff]
        %v732 = vld [vmem:[%s664 + $0x218] sm:$0xff]
        %v733 = vld [vmem:[%s664 + $0x220] sm:$0xff]
        %v734 = vld [vmem:[%s664 + $0x228] sm:$0xff]
        %v735 = vld [vmem:[%s664 + $0x230] sm:$0xff]
        %v736 = vld [vmem:[%s664 + $0x238] sm:$0xff]
        %v737 = vld [vmem:[%s664 + $0x240] sm:$0xff]
        %v738 = vld [vmem:[%s664 + $0x248] sm:$0xff]
        %v739 = vld [vmem:[%s664 + $0x250] sm:$0xff]
        %v740 = vld [vmem:[%s664 + $0x258] sm:$0xff]
        %v741 = vld [vmem:[%s664 + $0x260] sm:$0xff]
        %v742 = vld [vmem:[%s664 + $0x268] sm:$0xff]
        %v743 = vld [vmem:[%s664 + $0x270] sm:$0xff]
        %v744 = vld [vmem:[%s664 + $0x278] sm:$0xff]
        %v745 = vld [vmem:[%s664 + $0x280] sm:$0xff]
        %v746 = vld [vmem:[%s664 + $0x288] sm:$0xff]
        %v747 = vld [vmem:[%s664 + $0x290] sm:$0xff]
        %v748 = vld [vmem:[%s664 + $0x298] sm:$0xff]
        %v749 = vld [vmem:[%s664 + $0x2a0] sm:$0xff]
        %v750 = vld [vmem:[%s664 + $0x2a8] sm:$0xff]
        %v751 = vld [vmem:[%s664 + $0x2b0] sm:$0xff]
        %v752 = vld [vmem:[%s664 + $0x2b8] sm:$0xff]
        %v753 = vld [vmem:[%s664 + $0x2c0] sm:$0xff]
        %v754 = vld [vmem:[%s664 + $0x2c8] sm:$0xff]
        %v755 = vld [vmem:[%s664 + $0x2d0] sm:$0xff]
        %v756 = vld [vmem:[%s664 + $0x2d8] sm:$0xff]
        %v757 = vld [vmem:[%s664 + $0x2e0] sm:$0xff]
        %v758 = vld [vmem:[%s664 + $0x2e8] sm:$0xff]
        %v759 = vld [vmem:[%s664 + $0x2f0] sm:$0xff]
        %v760 = vld [vmem:[%s664 + $0x2f8] sm:$0xff]
        %v761 = vld [vmem:[%s664 + $0x300] sm:$0xff]
        %v762 = vld [vmem:[%s664 + $0x308] sm:$0xff]
        %v763 = vld [vmem:[%s664 + $0x310] sm:$0xff]
        %v764 = vld [vmem:[%s664 + $0x318] sm:$0xff]
        %v765 = vld [vmem:[%s664 + $0x320] sm:$0xff]
        %v766 = vld [vmem:[%s664 + $0x328] sm:$0xff]
        %v767 = vld [vmem:[%s664 + $0x330] sm:$0xff]
        %v768 = vld [vmem:[%s664 + $0x338] sm:$0xff]
        %v769 = vld [vmem:[%s664 + $0x340] sm:$0xff]
        %v770 = vld [vmem:[%s664 + $0x348] sm:$0xff]
        %v771 = vld [vmem:[%s664 + $0x350] sm:$0xff]
        %v772 = vld [vmem:[%s664 + $0x358] sm:$0xff]
        %v773 = vld [vmem:[%s664 + $0x360] sm:$0xff]
        %v774 = vld [vmem:[%s664 + $0x368] sm:$0xff]
        %v775 = vld [vmem:[%s664 + $0x370] sm:$0xff]
        %v776 = vld [vmem:[%s664 + $0x378] sm:$0xff]
        %v777 = vld [vmem:[%s664 + $0x380] sm:$0xff]
        %v778 = vld [vmem:[%s664 + $0x388] sm:$0xff]
        %v779 = vld [vmem:[%s664 + $0x390] sm:$0xff]
        %v780 = vld [vmem:[%s664 + $0x398] sm:$0xff]
        %v781 = vld [vmem:[%s664 + $0x3a0] sm:$0xff]
        %v782 = vld [vmem:[%s664 + $0x3a8] sm:$0xff]
        %v783 = vld [vmem:[%s664 + $0x3b0] sm:$0xff]
        %v784 = vld [vmem:[%s664 + $0x3b8] sm:$0xff]
        %v785 = vld [vmem:[%s664 + $0x3c0] sm:$0xff]
        %v786 = vld [vmem:[%s664 + $0x3c8] sm:$0xff]
        %v787 = vld [vmem:[%s664 + $0x3d0] sm:$0xff]
        %v788 = vld [vmem:[%s664 + $0x3d8] sm:$0xff]
        %v789 = vld [vmem:[%s664 + $0x3e0] sm:$0xff]
        %v790 = vld [vmem:[%s664 + $0x3e8] sm:$0xff]
        %v791 = vld [vmem:[%s664 + $0x3f0] sm:$0xff]
        %v792 = vld [vmem:[%s664 + $0x3f8] sm:$0xff]
        %v793 = vld [vmem:[%s664 + $0x400] sm:$0xff]
        %v794 = vld [vmem:[%s664 + $0x408] sm:$0xff]
        %v795 = vld [vmem:[%s664 + $0x410] sm:$0xff]
        %v796 = vld [vmem:[%s664 + $0x418] sm:$0xff]
        %v797 = vld [vmem:[%s664 + $0x420] sm:$0xff]
        %v798 = vld [vmem:[%s664 + $0x428] sm:$0xff]
        %v799 = vld [vmem:[%s664 + $0x430] sm:$0xff]
        %v800 = vld [vmem:[%s664 + $0x438] sm:$0xff]
        %v801 = vld [vmem:[%s664 + $0x440] sm:$0xff]
        %v802 = vld [vmem:[%s664 + $0x448] sm:$0xff]
        %v803 = vld [vmem:[%s664 + $0x450] sm:$0xff]
        %v804 = vld [vmem:[%s664 + $0x458] sm:$0xff]
        %v805 = vld [vmem:[%s664 + $0x460] sm:$0xff]
        %v806 = vld [vmem:[%s664 + $0x468] sm:$0xff]
        %v807 = vld [vmem:[%s664 + $0x470] sm:$0xff]
        %v808 = vld [vmem:[%s664 + $0x478] sm:$0xff]
        %v809 = vld [vmem:[%s664 + $0x480] sm:$0xff]
        %v810 = vld [vmem:[%s664 + $0x488] sm:$0xff]
        %v811 = vld [vmem:[%s664 + $0x490] sm:$0xff]
        %v812 = vld [vmem:[%s664 + $0x498] sm:$0xff]
        %v813 = vld [vmem:[%s664 + $0x4a0] sm:$0xff]
        %v814 = vld [vmem:[%s664 + $0x4a8] sm:$0xff]
        %v815 = vld [vmem:[%s664 + $0x4b0] sm:$0xff]
        %v816 = vld [vmem:[%s664 + $0x4b8] sm:$0xff]
        %v817 = vld [vmem:[%s664 + $0x4c0] sm:$0xff]
        %v818 = vld [vmem:[%s664 + $0x4c8] sm:$0xff]
        %v819 = vld [vmem:[%s664 + $0x4d0] sm:$0xff]
        %v820 = vld [vmem:[%s664 + $0x4d8] sm:$0xff]
        %v821 = vld [vmem:[%s664 + $0x4e0] sm:$0xff]
        %v822 = vld [vmem:[%s664 + $0x4e8] sm:$0xff]
        %v823 = vld [vmem:[%s664 + $0x4f0] sm:$0xff]
        %v824 = vld [vmem:[%s664 + $0x4f8] sm:$0xff]
        %v825 = vld [vmem:[%s664 + $0x500] sm:$0xff]
        %v826 = vld [vmem:[%s664 + $0x508] sm:$0xff]
        %v827 = vld [vmem:[%s664 + $0x510] sm:$0xff]
        %v828 = vld [vmem:[%s664 + $0x518] sm:$0xff]
        %v829 = vld [vmem:[%s664 + $0x520] sm:$0xff]
        %v830 = vld [vmem:[%s664 + $0x528] sm:$0xff]
        %v831 = vld [vmem:[%s664 + $0x530] sm:$0xff]
        %v832 = vld [vmem:[%s664 + $0x538] sm:$0xff]
        %v833 = vld [vmem:[%s664 + $0x540] sm:$0xff]
        %v834 = vld [vmem:[%s664 + $0x548] sm:$0xff]
        %v835 = vld [vmem:[%s664 + $0x550] sm:$0xff]
        %v836 = vld [vmem:[%s664 + $0x558] sm:$0xff]
        %v837 = vld [vmem:[%s664 + $0x560] sm:$0xff]
        %v838 = vld [vmem:[%s664 + $0x568] sm:$0xff]
        %v839 = vld [vmem:[%s664 + $0x570] sm:$0xff]
        %v840 = vld [vmem:[%s664 + $0x578] sm:$0xff]
        %v841 = vld [vmem:[%s664 + $0x580] sm:$0xff]
        %v842 = vld [vmem:[%s664 + $0x588] sm:$0xff]
        %v843 = vld [vmem:[%s664 + $0x590] sm:$0xff]
        %v844 = vld [vmem:[%s664 + $0x598] sm:$0xff]
        %v845 = vld [vmem:[%s664 + $0x5a0] sm:$0xff]
        %v846 = vld [vmem:[%s664 + $0x5a8] sm:$0xff]
        %v847 = vld [vmem:[%s664 + $0x5b0] sm:$0xff]
        %v848 = vld [vmem:[%s664 + $0x5b8] sm:$0xff]
        %v849 = vld [vmem:[%s664 + $0x5c0] sm:$0xff]
        %v850 = vld [vmem:[%s664 + $0x5c8] sm:$0xff]
        %v851 = vld [vmem:[%s664 + $0x5d0] sm:$0xff]
        %v852 = vld [vmem:[%s664 + $0x5d8] sm:$0xff]
        %v853 = vld [vmem:[%s664 + $0x5e0] sm:$0xff]
        %v854 = vld [vmem:[%s664 + $0x5e8] sm:$0xff]
        %v855 = vld [vmem:[%s664 + $0x5f0] sm:$0xff]
        %v856 = vld [vmem:[%s664 + $0x5f8] sm:$0xff]
        %v857 = vld [vmem:[%s664 + $0x600] sm:$0xff]
        %v858 = vld [vmem:[%s664 + $0x608] sm:$0xff]
        %v859 = vld [vmem:[%s664 + $0x610] sm:$0xff]
        %v860 = vld [vmem:[%s664 + $0x618] sm:$0xff]
        %v861 = vld [vmem:[%s664 + $0x620] sm:$0xff]
        %v862 = vld [vmem:[%s664 + $0x628] sm:$0xff]
        %v863 = vld [vmem:[%s664 + $0x630] sm:$0xff]
        %v864 = vld [vmem:[%s664 + $0x638] sm:$0xff]
        %v865 = vld [vmem:[%s664 + $0x640] sm:$0xff]
        %v866 = vld [vmem:[%s664 + $0x648] sm:$0xff]
        %v867 = vld [vmem:[%s664 + $0x650] sm:$0xff]
        %v868 = vld [vmem:[%s664 + $0x658] sm:$0xff]
        %v869 = vld [vmem:[%s664 + $0x660] sm:$0xff]
        %v870 = vld [vmem:[%s664 + $0x668] sm:$0xff]
        %v871 = vld [vmem:[%s664 + $0x670] sm:$0xff]
        %v872 = vld [vmem:[%s664 + $0x678] sm:$0xff]
        %v873 = vld [vmem:[%s664 + $0x680] sm:$0xff]
        %v874 = vld [vmem:[%s664 + $0x688] sm:$0xff]
        %v875 = vld [vmem:[%s664 + $0x690] sm:$0xff]
        %v876 = vld [vmem:[%s664 + $0x698] sm:$0xff]
        %v877 = vld [vmem:[%s664 + $0x6a0] sm:$0xff]
        %v878 = vld [vmem:[%s664 + $0x6a8] sm:$0xff]
        %v879 = vld [vmem:[%s664 + $0x6b0] sm:$0xff]
        %v880 = vld [vmem:[%s664 + $0x6b8] sm:$0xff]
        %v881 = vld [vmem:[%s664 + $0x6c0] sm:$0xff]
        %v882 = vld [vmem:[%s664 + $0x6c8] sm:$0xff]
        %v883 = vld [vmem:[%s664 + $0x6d0] sm:$0xff]
        %v884 = vld [vmem:[%s664 + $0x6d8] sm:$0xff]
        %v885 = vld [vmem:[%s664 + $0x6e0] sm:$0xff]
        %v886 = vld [vmem:[%s664 + $0x6e8] sm:$0xff]
        %v887 = vld [vmem:[%s664 + $0x6f0] sm:$0xff]
        %v888 = vld [vmem:[%s664 + $0x6f8] sm:$0xff]
        %v889 = vld [vmem:[%s664 + $0x700] sm:$0xff]
        %v890 = vld [vmem:[%s664 + $0x708] sm:$0xff]
        %v891 = vld [vmem:[%s664 + $0x710] sm:$0xff]
        %v892 = vld [vmem:[%s664 + $0x718] sm:$0xff]
        %v893 = vld [vmem:[%s664 + $0x720] sm:$0xff]
        %v894 = vld [vmem:[%s664 + $0x728] sm:$0xff]
        %v895 = vld [vmem:[%s664 + $0x730] sm:$0xff]
        %v896 = vld [vmem:[%s664 + $0x738] sm:$0xff]
        %v897 = vld [vmem:[%s664 + $0x740] sm:$0xff]
        %v898 = vld [vmem:[%s664 + $0x748] sm:$0xff]
        %v899 = vld [vmem:[%s664 + $0x750] sm:$0xff]
        %v900 = vld [vmem:[%s664 + $0x758] sm:$0xff]
        %v901 = vld [vmem:[%s664 + $0x760] sm:$0xff]
        %v902 = vld [vmem:[%s664 + $0x768] sm:$0xff]
        %v903 = vld [vmem:[%s664 + $0x770] sm:$0xff]
        %v904 = vld [vmem:[%s664 + $0x778] sm:$0xff]
        %v905 = vld [vmem:[%s664 + $0x780] sm:$0xff]
        %v906 = vld [vmem:[%s664 + $0x788] sm:$0xff]
        %v907 = vld [vmem:[%s664 + $0x790] sm:$0xff]
        %v908 = vld [vmem:[%s664 + $0x798] sm:$0xff]
        %v909 = vld [vmem:[%s664 + $0x7a0] sm:$0xff]
        %v910 = vld [vmem:[%s664 + $0x7a8] sm:$0xff]
        %v911 = vld [vmem:[%s664 + $0x7b0] sm:$0xff]
        %v912 = vld [vmem:[%s664 + $0x7b8] sm:$0xff]
        %v913 = vld [vmem:[%s664 + $0x7c0] sm:$0xff]
        %v914 = vld [vmem:[%s664 + $0x7c8] sm:$0xff]
        %v915 = vld [vmem:[%s664 + $0x7d0] sm:$0xff]
        %v916 = vld [vmem:[%s664 + $0x7d8] sm:$0xff]
        %v917 = vld [vmem:[%s664 + $0x7e0] sm:$0xff]
        %v918 = vld [vmem:[%s664 + $0x7e8] sm:$0xff]
        %v919 = vld [vmem:[%s664 + $0x7f0] sm:$0xff]
        %v920 = vld [vmem:[%s664 + $0x7f8] sm:$0xff]
        %921 = vmatpush.msra.mxu0 %v785
        %922 = vmatpush.msra.mxu0 %v777
        %923 = vmatpush.msra.mxu0 %v769
        %924 = vmatpush.msra.mxu0 %v761
        %925 = vmatpush.msra.mxu0 %v753
        %926 = vmatpush.msra.mxu0 %v745
        %927 = vmatpush.msra.mxu0 %v737
        %928 = vmatpush.msra.mxu0 %v729
        %929 = vmatpush.msra.mxu0 %v721
        %930 = vmatpush.msra.mxu0 %v713
        %931 = vmatpush.msra.mxu0 %v705
        %932 = vmatpush.msra.mxu0 %v697
        %933 = vmatpush.msra.mxu0 %v689
        %934 = vmatpush.msra.mxu0 %v681
        %935 = vmatpush.msra.mxu0 %v673
        %936 = vmatpush.msra.mxu0 %v665
        %937 = vmatmul.f32.gmra.mxu0 %v642
        %v938 = vpop.f32.mrf.mxu0
        %v939 = vadd.f32 0.0, %v938
        %940 = vdwg.mxu0
        %941 = vmatpush.msra.mxu0 %v913
        %942 = vmatpush.msra.mxu0 %v905
        %943 = vmatpush.msra.mxu0 %v897
        %944 = vmatpush.msra.mxu0 %v889
        %945 = vmatpush.msra.mxu0 %v881
        %946 = vmatpush.msra.mxu0 %v873
        %947 = vmatpush.msra.mxu0 %v865
        %948 = vmatpush.msra.mxu0 %v857
        %949 = vmatpush.msra.mxu0 %v849
        %950 = vmatpush.msra.mxu0 %v841
        %951 = vmatpush.msra.mxu0 %v833
        %952 = vmatpush.msra.mxu0 %v825
        %953 = vmatpush.msra.mxu0 %v817
        %954 = vmatpush.msra.mxu0 %v809
        %955 = vmatpush.msra.mxu0 %v801
        %956 = vmatpush.msra.mxu0 %v793
        %957 = vmatmul.f32.gmra.mxu0 %v662
        %v958 = vpop.f32.mrf.mxu0
        %v959 = vadd.f32 %v939, %v958
        %960 = vdwg.mxu0
        %961 = vmatpush.msra.mxu0 %v786
        %962 = vmatpush.msra.mxu0 %v778
        %963 = vmatpush.msra.mxu0 %v770
        %964 = vmatpush.msra.mxu0 %v762
        %965 = vmatpush.msra.mxu0 %v754
        %966 = vmatpush.msra.mxu0 %v746
        %967 = vmatpush.msra.mxu0 %v738
        %968 = vmatpush.msra.mxu0 %v730
        %969 = vmatpush.msra.mxu0 %v722
        %970 = vmatpush.msra.mxu0 %v714
        %971 = vmatpush.msra.mxu0 %v706
        %972 = vmatpush.msra.mxu0 %v698
        %973 = vmatpush.msra.mxu0 %v690
        %974 = vmatpush.msra.mxu0 %v682
        %975 = vmatpush.msra.mxu0 %v674
        %976 = vmatpush.msra.mxu0 %v666
        %977 = vmatmul.f32.gmra.mxu0 %v642
        %v978 = vpop.f32.mrf.mxu0
        %v979 = vadd.f32 0.0, %v978
        %980 = vdwg.mxu0
        %981 = vmatpush.msra.mxu0 %v914
        %982 = vmatpush.msra.mxu0 %v906
        %983 = vmatpush.msra.mxu0 %v898
        %984 = vmatpush.msra.mxu0 %v890
        %985 = vmatpush.msra.mxu0 %v882
        %986 = vmatpush.msra.mxu0 %v874
        %987 = vmatpush.msra.mxu0 %v866
        %988 = vmatpush.msra.mxu0 %v858
        %989 = vmatpush.msra.mxu0 %v850
        %990 = vmatpush.msra.mxu0 %v842
        %991 = vmatpush.msra.mxu0 %v834
        %992 = vmatpush.msra.mxu0 %v826
        %993 = vmatpush.msra.mxu0 %v818
        %994 = vmatpush.msra.mxu0 %v810
        %995 = vmatpush.msra.mxu0 %v802
        %996 = vmatpush.msra.mxu0 %v794
        %997 = vmatmul.f32.gmra.mxu0 %v662
        %v998 = vpop.f32.mrf.mxu0
        %v999 = vadd.f32 %v979, %v998
        %1000 = vdwg.mxu0
        %1001 = vmatpush.msra.mxu0 %v787
        %1002 = vmatpush.msra.mxu0 %v779
        %1003 = vmatpush.msra.mxu0 %v771
        %1004 = vmatpush.msra.mxu0 %v763
        %1005 = vmatpush.msra.mxu0 %v755
        %1006 = vmatpush.msra.mxu0 %v747
        %1007 = vmatpush.msra.mxu0 %v739
        %1008 = vmatpush.msra.mxu0 %v731
        %1009 = vmatpush.msra.mxu0 %v723
        %1010 = vmatpush.msra.mxu0 %v715
        %1011 = vmatpush.msra.mxu0 %v707
        %1012 = vmatpush.msra.mxu0 %v699
        %1013 = vmatpush.msra.mxu0 %v691
        %1014 = vmatpush.msra.mxu0 %v683
        %1015 = vmatpush.msra.mxu0 %v675
        %1016 = vmatpush.msra.mxu0 %v667
        %1017 = vmatmul.f32.gmra.mxu0 %v642
        %v1018 = vpop.f32.mrf.mxu0
        %v1019 = vadd.f32 0.0, %v1018
        %1020 = vdwg.mxu0
        %1021 = vmatpush.msra.mxu0 %v915
        %1022 = vmatpush.msra.mxu0 %v907
        %1023 = vmatpush.msra.mxu0 %v899
        %1024 = vmatpush.msra.mxu0 %v891
        %1025 = vmatpush.msra.mxu0 %v883
        %1026 = vmatpush.msra.mxu0 %v875
        %1027 = vmatpush.msra.mxu0 %v867
        %1028 = vmatpush.msra.mxu0 %v859
        %1029 = vmatpush.msra.mxu0 %v851
        %1030 = vmatpush.msra.mxu0 %v843
        %1031 = vmatpush.msra.mxu0 %v835
        %1032 = vmatpush.msra.mxu0 %v827
        %1033 = vmatpush.msra.mxu0 %v819
        %1034 = vmatpush.msra.mxu0 %v811
        %1035 = vmatpush.msra.mxu0 %v803
        %1036 = vmatpush.msra.mxu0 %v795
        %1037 = vmatmul.f32.gmra.mxu0 %v662
        %v1038 = vpop.f32.mrf.mxu0
        %v1039 = vadd.f32 %v1019, %v1038
        %1040 = vdwg.mxu0
        %1041 = vmatpush.msra.mxu0 %v788
        %1042 = vmatpush.msra.mxu0 %v780
        %1043 = vmatpush.msra.mxu0 %v772
        %1044 = vmatpush.msra.mxu0 %v764
        %1045 = vmatpush.msra.mxu0 %v756
        %1046 = vmatpush.msra.mxu0 %v748
        %1047 = vmatpush.msra.mxu0 %v740
        %1048 = vmatpush.msra.mxu0 %v732
        %1049 = vmatpush.msra.mxu0 %v724
        %1050 = vmatpush.msra.mxu0 %v716
        %1051 = vmatpush.msra.mxu0 %v708
        %1052 = vmatpush.msra.mxu0 %v700
        %1053 = vmatpush.msra.mxu0 %v692
        %1054 = vmatpush.msra.mxu0 %v684
        %1055 = vmatpush.msra.mxu0 %v676
        %1056 = vmatpush.msra.mxu0 %v668
        %1057 = vmatmul.f32.gmra.mxu0 %v642
        %v1058 = vpop.f32.mrf.mxu0
        %v1059 = vadd.f32 0.0, %v1058
        %1060 = vdwg.mxu0
        %1061 = vmatpush.msra.mxu0 %v916
        %1062 = vmatpush.msra.mxu0 %v908
        %1063 = vmatpush.msra.mxu0 %v900
        %1064 = vmatpush.msra.mxu0 %v892
        %1065 = vmatpush.msra.mxu0 %v884
        %1066 = vmatpush.msra.mxu0 %v876
        %1067 = vmatpush.msra.mxu0 %v868
        %1068 = vmatpush.msra.mxu0 %v860
        %1069 = vmatpush.msra.mxu0 %v852
        %1070 = vmatpush.msra.mxu0 %v844
        %1071 = vmatpush.msra.mxu0 %v836
        %1072 = vmatpush.msra.mxu0 %v828
        %1073 = vmatpush.msra.mxu0 %v820
        %1074 = vmatpush.msra.mxu0 %v812
        %1075 = vmatpush.msra.mxu0 %v804
        %1076 = vmatpush.msra.mxu0 %v796
        %1077 = vmatmul.f32.gmra.mxu0 %v662
        %v1078 = vpop.f32.mrf.mxu0
        %v1079 = vadd.f32 %v1059, %v1078
        %1080 = vdwg.mxu0
        %1081 = vmatpush.msra.mxu0 %v789
        %1082 = vmatpush.msra.mxu0 %v781
        %1083 = vmatpush.msra.mxu0 %v773
        %1084 = vmatpush.msra.mxu0 %v765
        %1085 = vmatpush.msra.mxu0 %v757
        %1086 = vmatpush.msra.mxu0 %v749
        %1087 = vmatpush.msra.mxu0 %v741
        %1088 = vmatpush.msra.mxu0 %v733
        %1089 = vmatpush.msra.mxu0 %v725
        %1090 = vmatpush.msra.mxu0 %v717
        %1091 = vmatpush.msra.mxu0 %v709
        %1092 = vmatpush.msra.mxu0 %v701
        %1093 = vmatpush.msra.mxu0 %v693
        %1094 = vmatpush.msra.mxu0 %v685
        %1095 = vmatpush.msra.mxu0 %v677
        %1096 = vmatpush.msra.mxu0 %v669
        %1097 = vmatmul.f32.gmra.mxu0 %v642
        %v1098 = vpop.f32.mrf.mxu0
        %v1099 = vadd.f32 0.0, %v1098
        %1100 = vdwg.mxu0
        %1101 = vmatpush.msra.mxu0 %v917
        %1102 = vmatpush.msra.mxu0 %v909
        %1103 = vmatpush.msra.mxu0 %v901
        %1104 = vmatpush.msra.mxu0 %v893
        %1105 = vmatpush.msra.mxu0 %v885
        %1106 = vmatpush.msra.mxu0 %v877
        %1107 = vmatpush.msra.mxu0 %v869
        %1108 = vmatpush.msra.mxu0 %v861
        %1109 = vmatpush.msra.mxu0 %v853
        %1110 = vmatpush.msra.mxu0 %v845
        %1111 = vmatpush.msra.mxu0 %v837
        %1112 = vmatpush.msra.mxu0 %v829
        %1113 = vmatpush.msra.mxu0 %v821
        %1114 = vmatpush.msra.mxu0 %v813
        %1115 = vmatpush.msra.mxu0 %v805
        %1116 = vmatpush.msra.mxu0 %v797
        %1117 = vmatmul.f32.gmra.mxu0 %v662
        %v1118 = vpop.f32.mrf.mxu0
        %v1119 = vadd.f32 %v1099, %v1118
        %1120 = vdwg.mxu0
        %1121 = vmatpush.msra.mxu0 %v790
        %1122 = vmatpush.msra.mxu0 %v782
        %1123 = vmatpush.msra.mxu0 %v774
        %1124 = vmatpush.msra.mxu0 %v766
        %1125 = vmatpush.msra.mxu0 %v758
        %1126 = vmatpush.msra.mxu0 %v750
        %1127 = vmatpush.msra.mxu0 %v742
        %1128 = vmatpush.msra.mxu0 %v734
        %1129 = vmatpush.msra.mxu0 %v726
        %1130 = vmatpush.msra.mxu0 %v718
        %1131 = vmatpush.msra.mxu0 %v710
        %1132 = vmatpush.msra.mxu0 %v702
        %1133 = vmatpush.msra.mxu0 %v694
        %1134 = vmatpush.msra.mxu0 %v686
        %1135 = vmatpush.msra.mxu0 %v678
        %1136 = vmatpush.msra.mxu0 %v670
        %1137 = vmatmul.f32.gmra.mxu0 %v642
        %v1138 = vpop.f32.mrf.mxu0
        %v1139 = vadd.f32 0.0, %v1138
        %1140 = vdwg.mxu0
        %1141 = vmatpush.msra.mxu0 %v918
        %1142 = vmatpush.msra.mxu0 %v910
        %1143 = vmatpush.msra.mxu0 %v902
        %1144 = vmatpush.msra.mxu0 %v894
        %1145 = vmatpush.msra.mxu0 %v886
        %1146 = vmatpush.msra.mxu0 %v878
        %1147 = vmatpush.msra.mxu0 %v870
        %1148 = vmatpush.msra.mxu0 %v862
        %1149 = vmatpush.msra.mxu0 %v854
        %1150 = vmatpush.msra.mxu0 %v846
        %1151 = vmatpush.msra.mxu0 %v838
        %1152 = vmatpush.msra.mxu0 %v830
        %1153 = vmatpush.msra.mxu0 %v822
        %1154 = vmatpush.msra.mxu0 %v814
        %1155 = vmatpush.msra.mxu0 %v806
        %1156 = vmatpush.msra.mxu0 %v798
        %1157 = vmatmul.f32.gmra.mxu0 %v662
        %v1158 = vpop.f32.mrf.mxu0
        %v1159 = vadd.f32 %v1139, %v1158
        %1160 = vdwg.mxu0
        %1161 = vmatpush.msra.mxu0 %v791
        %1162 = vmatpush.msra.mxu0 %v783
        %1163 = vmatpush.msra.mxu0 %v775
        %1164 = vmatpush.msra.mxu0 %v767
        %1165 = vmatpush.msra.mxu0 %v759
        %1166 = vmatpush.msra.mxu0 %v751
        %1167 = vmatpush.msra.mxu0 %v743
        %1168 = vmatpush.msra.mxu0 %v735
        %1169 = vmatpush.msra.mxu0 %v727
        %1170 = vmatpush.msra.mxu0 %v719
        %1171 = vmatpush.msra.mxu0 %v711
        %1172 = vmatpush.msra.mxu0 %v703
        %1173 = vmatpush.msra.mxu0 %v695
        %1174 = vmatpush.msra.mxu0 %v687
        %1175 = vmatpush.msra.mxu0 %v679
        %1176 = vmatpush.msra.mxu0 %v671
        %1177 = vmatmul.f32.gmra.mxu0 %v642
        %v1178 = vpop.f32.mrf.mxu0
        %v1179 = vadd.f32 0.0, %v1178
        %1180 = vdwg.mxu0
        %1181 = vmatpush.msra.mxu0 %v919
        %1182 = vmatpush.msra.mxu0 %v911
        %1183 = vmatpush.msra.mxu0 %v903
        %1184 = vmatpush.msra.mxu0 %v895
        %1185 = vmatpush.msra.mxu0 %v887
        %1186 = vmatpush.msra.mxu0 %v879
        %1187 = vmatpush.msra.mxu0 %v871
        %1188 = vmatpush.msra.mxu0 %v863
        %1189 = vmatpush.msra.mxu0 %v855
        %1190 = vmatpush.msra.mxu0 %v847
        %1191 = vmatpush.msra.mxu0 %v839
        %1192 = vmatpush.msra.mxu0 %v831
        %1193 = vmatpush.msra.mxu0 %v823
        %1194 = vmatpush.msra.mxu0 %v815
        %1195 = vmatpush.msra.mxu0 %v807
        %1196 = vmatpush.msra.mxu0 %v799
        %1197 = vmatmul.f32.gmra.mxu0 %v662
        %v1198 = vpop.f32.mrf.mxu0
        %v1199 = vadd.f32 %v1179, %v1198
        %1200 = vdwg.mxu0
        %1201 = vmatpush.msra.mxu0 %v792
        %1202 = vmatpush.msra.mxu0 %v784
        %1203 = vmatpush.msra.mxu0 %v776
        %1204 = vmatpush.msra.mxu0 %v768
        %1205 = vmatpush.msra.mxu0 %v760
        %1206 = vmatpush.msra.mxu0 %v752
        %1207 = vmatpush.msra.mxu0 %v744
        %1208 = vmatpush.msra.mxu0 %v736
        %1209 = vmatpush.msra.mxu0 %v728
        %1210 = vmatpush.msra.mxu0 %v720
        %1211 = vmatpush.msra.mxu0 %v712
        %1212 = vmatpush.msra.mxu0 %v704
        %1213 = vmatpush.msra.mxu0 %v696
        %1214 = vmatpush.msra.mxu0 %v688
        %1215 = vmatpush.msra.mxu0 %v680
        %1216 = vmatpush.msra.mxu0 %v672
        %1217 = vmatmul.f32.gmra.mxu0 %v642
        %v1218 = vpop.f32.mrf.mxu0
        %v1219 = vadd.f32 0.0, %v1218
        %1220 = vdwg.mxu0
        %1221 = vmatpush.msra.mxu0 %v920
        %1222 = vmatpush.msra.mxu0 %v912
        %1223 = vmatpush.msra.mxu0 %v904
        %1224 = vmatpush.msra.mxu0 %v896
        %1225 = vmatpush.msra.mxu0 %v888
        %1226 = vmatpush.msra.mxu0 %v880
        %1227 = vmatpush.msra.mxu0 %v872
        %1228 = vmatpush.msra.mxu0 %v864
        %1229 = vmatpush.msra.mxu0 %v856
        %1230 = vmatpush.msra.mxu0 %v848
        %1231 = vmatpush.msra.mxu0 %v840
        %1232 = vmatpush.msra.mxu0 %v832
        %1233 = vmatpush.msra.mxu0 %v824
        %1234 = vmatpush.msra.mxu0 %v816
        %1235 = vmatpush.msra.mxu0 %v808
        %1236 = vmatpush.msra.mxu0 %v800
        %1237 = vmatmul.f32.gmra.mxu0 %v662
        %v1238 = vpop.f32.mrf.mxu0
        %v1239 = vadd.f32 %v1219, %v1238
        %1240 = vdwg.mxu0
        %1241 = vmatpush.msra.mxu0 %v483
        %1242 = vmatpush.msra.mxu0 %v475
        %1243 = vmatpush.msra.mxu0 %v467
        %1244 = vmatpush.msra.mxu0 %v459
        %1245 = vmatpush.msra.mxu0 %v451
        %1246 = vmatpush.msra.mxu0 %v443
        %1247 = vmatpush.msra.mxu0 %v435
        %1248 = vmatpush.msra.mxu0 %v427
        %1249 = vmatpush.msra.mxu0 %v419
        %1250 = vmatpush.msra.mxu0 %v411
        %1251 = vmatpush.msra.mxu0 %v403
        %1252 = vmatpush.msra.mxu0 %v395
        %1253 = vmatpush.msra.mxu0 %v387
        %1254 = vmatpush.msra.mxu0 %v379
        %1255 = vmatpush.msra.mxu0 %v371
        %1256 = vmatpush.msra.mxu0 %v363
        %1257 = vmatmul.f32.gmra.mxu0 %v341
        %v1258 = vpop.f32.mrf.mxu0
        %v1259 = vadd.f32 %v959, %v1258
        %1260 = vdwg.mxu0
        %1261 = vmatpush.msra.mxu0 %v611
        %1262 = vmatpush.msra.mxu0 %v603
        %1263 = vmatpush.msra.mxu0 %v595
        %1264 = vmatpush.msra.mxu0 %v587
        %1265 = vmatpush.msra.mxu0 %v579
        %1266 = vmatpush.msra.mxu0 %v571
        %1267 = vmatpush.msra.mxu0 %v563
        %1268 = vmatpush.msra.mxu0 %v555
        %1269 = vmatpush.msra.mxu0 %v547
        %1270 = vmatpush.msra.mxu0 %v539
        %1271 = vmatpush.msra.mxu0 %v531
        %1272 = vmatpush.msra.mxu0 %v523
        %1273 = vmatpush.msra.mxu0 %v515
        %1274 = vmatpush.msra.mxu0 %v507
        %1275 = vmatpush.msra.mxu0 %v499
        %1276 = vmatpush.msra.mxu0 %v491
        %1277 = vmatmul.f32.gmra.mxu0 %v361
        %v1278 = vpop.f32.mrf.mxu0
        %v1279 = vadd.f32 %v1259, %v1278
        %1280 = vdwg.mxu0
        %1281 = vmatpush.msra.mxu0 %v484
        %1282 = vmatpush.msra.mxu0 %v476
        %1283 = vmatpush.msra.mxu0 %v468
        %1284 = vmatpush.msra.mxu0 %v460
        %1285 = vmatpush.msra.mxu0 %v452
        %1286 = vmatpush.msra.mxu0 %v444
        %1287 = vmatpush.msra.mxu0 %v436
        %1288 = vmatpush.msra.mxu0 %v428
        %1289 = vmatpush.msra.mxu0 %v420
        %1290 = vmatpush.msra.mxu0 %v412
        %1291 = vmatpush.msra.mxu0 %v404
        %1292 = vmatpush.msra.mxu0 %v396
        %1293 = vmatpush.msra.mxu0 %v388
        %1294 = vmatpush.msra.mxu0 %v380
        %1295 = vmatpush.msra.mxu0 %v372
        %1296 = vmatpush.msra.mxu0 %v364
        %1297 = vmatmul.f32.gmra.mxu0 %v341
        %v1298 = vpop.f32.mrf.mxu0
        %v1299 = vadd.f32 %v999, %v1298
        %1300 = vdwg.mxu0
        %1301 = vmatpush.msra.mxu0 %v612
        %1302 = vmatpush.msra.mxu0 %v604
        %1303 = vmatpush.msra.mxu0 %v596
        %1304 = vmatpush.msra.mxu0 %v588
        %1305 = vmatpush.msra.mxu0 %v580
        %1306 = vmatpush.msra.mxu0 %v572
        %1307 = vmatpush.msra.mxu0 %v564
        %1308 = vmatpush.msra.mxu0 %v556
        %1309 = vmatpush.msra.mxu0 %v548
        %1310 = vmatpush.msra.mxu0 %v540
        %1311 = vmatpush.msra.mxu0 %v532
        %1312 = vmatpush.msra.mxu0 %v524
        %1313 = vmatpush.msra.mxu0 %v516
        %1314 = vmatpush.msra.mxu0 %v508
        %1315 = vmatpush.msra.mxu0 %v500
        %1316 = vmatpush.msra.mxu0 %v492
        %1317 = vmatmul.f32.gmra.mxu0 %v361
        %v1318 = vpop.f32.mrf.mxu0
        %v1319 = vadd.f32 %v1299, %v1318
        %1320 = vdwg.mxu0
        %1321 = vmatpush.msra.mxu0 %v485
        %1322 = vmatpush.msra.mxu0 %v477
        %1323 = vmatpush.msra.mxu0 %v469
        %1324 = vmatpush.msra.mxu0 %v461
        %1325 = vmatpush.msra.mxu0 %v453
        %1326 = vmatpush.msra.mxu0 %v445
        %1327 = vmatpush.msra.mxu0 %v437
        %1328 = vmatpush.msra.mxu0 %v429
        %1329 = vmatpush.msra.mxu0 %v421
        %1330 = vmatpush.msra.mxu0 %v413
        %1331 = vmatpush.msra.mxu0 %v405
        %1332 = vmatpush.msra.mxu0 %v397
        %1333 = vmatpush.msra.mxu0 %v389
        %1334 = vmatpush.msra.mxu0 %v381
        %1335 = vmatpush.msra.mxu0 %v373
        %1336 = vmatpush.msra.mxu0 %v365
        %1337 = vmatmul.f32.gmra.mxu0 %v341
        %v1338 = vpop.f32.mrf.mxu0
        %v1339 = vadd.f32 %v1039, %v1338
        %1340 = vdwg.mxu0
        %1341 = vmatpush.msra.mxu0 %v613
        %1342 = vmatpush.msra.mxu0 %v605
        %1343 = vmatpush.msra.mxu0 %v597
        %1344 = vmatpush.msra.mxu0 %v589
        %1345 = vmatpush.msra.mxu0 %v581
        %1346 = vmatpush.msra.mxu0 %v573
        %1347 = vmatpush.msra.mxu0 %v565
        %1348 = vmatpush.msra.mxu0 %v557
        %1349 = vmatpush.msra.mxu0 %v549
        %1350 = vmatpush.msra.mxu0 %v541
        %1351 = vmatpush.msra.mxu0 %v533
        %1352 = vmatpush.msra.mxu0 %v525
        %1353 = vmatpush.msra.mxu0 %v517
        %1354 = vmatpush.msra.mxu0 %v509
        %1355 = vmatpush.msra.mxu0 %v501
        %1356 = vmatpush.msra.mxu0 %v493
        %1357 = vmatmul.f32.gmra.mxu0 %v361
        %v1358 = vpop.f32.mrf.mxu0
        %v1359 = vadd.f32 %v1339, %v1358
        %1360 = vdwg.mxu0
        %1361 = vmatpush.msra.mxu0 %v486
        %1362 = vmatpush.msra.mxu0 %v478
        %1363 = vmatpush.msra.mxu0 %v470
        %1364 = vmatpush.msra.mxu0 %v462
        %1365 = vmatpush.msra.mxu0 %v454
        %1366 = vmatpush.msra.mxu0 %v446
        %1367 = vmatpush.msra.mxu0 %v438
        %1368 = vmatpush.msra.mxu0 %v430
        %1369 = vmatpush.msra.mxu0 %v422
        %1370 = vmatpush.msra.mxu0 %v414
        %1371 = vmatpush.msra.mxu0 %v406
        %1372 = vmatpush.msra.mxu0 %v398
        %1373 = vmatpush.msra.mxu0 %v390
        %1374 = vmatpush.msra.mxu0 %v382
        %1375 = vmatpush.msra.mxu0 %v374
        %1376 = vmatpush.msra.mxu0 %v366
        %1377 = vmatmul.f32.gmra.mxu0 %v341
        %v1378 = vpop.f32.mrf.mxu0
        %v1379 = vadd.f32 %v1079, %v1378
        %1380 = vdwg.mxu0
        %1381 = vmatpush.msra.mxu0 %v614
        %1382 = vmatpush.msra.mxu0 %v606
        %1383 = vmatpush.msra.mxu0 %v598
        %1384 = vmatpush.msra.mxu0 %v590
        %1385 = vmatpush.msra.mxu0 %v582
        %1386 = vmatpush.msra.mxu0 %v574
        %1387 = vmatpush.msra.mxu0 %v566
        %1388 = vmatpush.msra.mxu0 %v558
        %1389 = vmatpush.msra.mxu0 %v550
        %1390 = vmatpush.msra.mxu0 %v542
        %1391 = vmatpush.msra.mxu0 %v534
        %1392 = vmatpush.msra.mxu0 %v526
        %1393 = vmatpush.msra.mxu0 %v518
        %1394 = vmatpush.msra.mxu0 %v510
        %1395 = vmatpush.msra.mxu0 %v502
        %1396 = vmatpush.msra.mxu0 %v494
        %1397 = vmatmul.f32.gmra.mxu0 %v361
        %v1398 = vpop.f32.mrf.mxu0
        %v1399 = vadd.f32 %v1379, %v1398
        %1400 = vdwg.mxu0
        %1401 = vmatpush.msra.mxu0 %v487
        %1402 = vmatpush.msra.mxu0 %v479
        %1403 = vmatpush.msra.mxu0 %v471
        %1404 = vmatpush.msra.mxu0 %v463
        %1405 = vmatpush.msra.mxu0 %v455
        %1406 = vmatpush.msra.mxu0 %v447
        %1407 = vmatpush.msra.mxu0 %v439
        %1408 = vmatpush.msra.mxu0 %v431
        %1409 = vmatpush.msra.mxu0 %v423
        %1410 = vmatpush.msra.mxu0 %v415
        %1411 = vmatpush.msra.mxu0 %v407
        %1412 = vmatpush.msra.mxu0 %v399
        %1413 = vmatpush.msra.mxu0 %v391
        %1414 = vmatpush.msra.mxu0 %v383
        %1415 = vmatpush.msra.mxu0 %v375
        %1416 = vmatpush.msra.mxu0 %v367
        %1417 = vmatmul.f32.gmra.mxu0 %v341
        %v1418 = vpop.f32.mrf.mxu0
        %v1419 = vadd.f32 %v1119, %v1418
        %1420 = vdwg.mxu0
        %1421 = vmatpush.msra.mxu0 %v615
        %1422 = vmatpush.msra.mxu0 %v607
        %1423 = vmatpush.msra.mxu0 %v599
        %1424 = vmatpush.msra.mxu0 %v591
        %1425 = vmatpush.msra.mxu0 %v583
        %1426 = vmatpush.msra.mxu0 %v575
        %1427 = vmatpush.msra.mxu0 %v567
        %1428 = vmatpush.msra.mxu0 %v559
        %1429 = vmatpush.msra.mxu0 %v551
        %1430 = vmatpush.msra.mxu0 %v543
        %1431 = vmatpush.msra.mxu0 %v535
        %1432 = vmatpush.msra.mxu0 %v527
        %1433 = vmatpush.msra.mxu0 %v519
        %1434 = vmatpush.msra.mxu0 %v511
        %1435 = vmatpush.msra.mxu0 %v503
        %1436 = vmatpush.msra.mxu0 %v495
        %1437 = vmatmul.f32.gmra.mxu0 %v361
        %v1438 = vpop.f32.mrf.mxu0
        %v1439 = vadd.f32 %v1419, %v1438
        %1440 = vdwg.mxu0
        %1441 = vmatpush.msra.mxu0 %v488
        %1442 = vmatpush.msra.mxu0 %v480
        %1443 = vmatpush.msra.mxu0 %v472
        %1444 = vmatpush.msra.mxu0 %v464
        %1445 = vmatpush.msra.mxu0 %v456
        %1446 = vmatpush.msra.mxu0 %v448
        %1447 = vmatpush.msra.mxu0 %v440
        %1448 = vmatpush.msra.mxu0 %v432
        %1449 = vmatpush.msra.mxu0 %v424
        %1450 = vmatpush.msra.mxu0 %v416
        %1451 = vmatpush.msra.mxu0 %v408
        %1452 = vmatpush.msra.mxu0 %v400
        %1453 = vmatpush.msra.mxu0 %v392
        %1454 = vmatpush.msra.mxu0 %v384
        %1455 = vmatpush.msra.mxu0 %v376
        %1456 = vmatpush.msra.mxu0 %v368
        %1457 = vmatmul.f32.gmra.mxu0 %v341
        %v1458 = vpop.f32.mrf.mxu0
        %v1459 = vadd.f32 %v1159, %v1458
        %1460 = vdwg.mxu0
        %1461 = vmatpush.msra.mxu0 %v616
        %1462 = vmatpush.msra.mxu0 %v608
        %1463 = vmatpush.msra.mxu0 %v600
        %1464 = vmatpush.msra.mxu0 %v592
        %1465 = vmatpush.msra.mxu0 %v584
        %1466 = vmatpush.msra.mxu0 %v576
        %1467 = vmatpush.msra.mxu0 %v568
        %1468 = vmatpush.msra.mxu0 %v560
        %1469 = vmatpush.msra.mxu0 %v552
        %1470 = vmatpush.msra.mxu0 %v544
        %1471 = vmatpush.msra.mxu0 %v536
        %1472 = vmatpush.msra.mxu0 %v528
        %1473 = vmatpush.msra.mxu0 %v520
        %1474 = vmatpush.msra.mxu0 %v512
        %1475 = vmatpush.msra.mxu0 %v504
        %1476 = vmatpush.msra.mxu0 %v496
        %1477 = vmatmul.f32.gmra.mxu0 %v361
        %v1478 = vpop.f32.mrf.mxu0
        %v1479 = vadd.f32 %v1459, %v1478
        %1480 = vdwg.mxu0
        %1481 = vmatpush.msra.mxu0 %v489
        %1482 = vmatpush.msra.mxu0 %v481
        %1483 = vmatpush.msra.mxu0 %v473
        %1484 = vmatpush.msra.mxu0 %v465
        %1485 = vmatpush.msra.mxu0 %v457
        %1486 = vmatpush.msra.mxu0 %v449
        %1487 = vmatpush.msra.mxu0 %v441
        %1488 = vmatpush.msra.mxu0 %v433
        %1489 = vmatpush.msra.mxu0 %v425
        %1490 = vmatpush.msra.mxu0 %v417
        %1491 = vmatpush.msra.mxu0 %v409
        %1492 = vmatpush.msra.mxu0 %v401
        %1493 = vmatpush.msra.mxu0 %v393
        %1494 = vmatpush.msra.mxu0 %v385
        %1495 = vmatpush.msra.mxu0 %v377
        %1496 = vmatpush.msra.mxu0 %v369
        %1497 = vmatmul.f32.gmra.mxu0 %v341
        %v1498 = vpop.f32.mrf.mxu0
        %v1499 = vadd.f32 %v1199, %v1498
        %1500 = vdwg.mxu0
        %1501 = vmatpush.msra.mxu0 %v617
        %1502 = vmatpush.msra.mxu0 %v609
        %1503 = vmatpush.msra.mxu0 %v601
        %1504 = vmatpush.msra.mxu0 %v593
        %1505 = vmatpush.msra.mxu0 %v585
        %1506 = vmatpush.msra.mxu0 %v577
        %1507 = vmatpush.msra.mxu0 %v569
        %1508 = vmatpush.msra.mxu0 %v561
        %1509 = vmatpush.msra.mxu0 %v553
        %1510 = vmatpush.msra.mxu0 %v545
        %1511 = vmatpush.msra.mxu0 %v537
        %1512 = vmatpush.msra.mxu0 %v529
        %1513 = vmatpush.msra.mxu0 %v521
        %1514 = vmatpush.msra.mxu0 %v513
        %1515 = vmatpush.msra.mxu0 %v505
        %1516 = vmatpush.msra.mxu0 %v497
        %1517 = vmatmul.f32.gmra.mxu0 %v361
        %v1518 = vpop.f32.mrf.mxu0
        %v1519 = vadd.f32 %v1499, %v1518
        %1520 = vdwg.mxu0
        %1521 = vmatpush.msra.mxu0 %v490
        %1522 = vmatpush.msra.mxu0 %v482
        %1523 = vmatpush.msra.mxu0 %v474
        %1524 = vmatpush.msra.mxu0 %v466
        %1525 = vmatpush.msra.mxu0 %v458
        %1526 = vmatpush.msra.mxu0 %v450
        %1527 = vmatpush.msra.mxu0 %v442
        %1528 = vmatpush.msra.mxu0 %v434
        %1529 = vmatpush.msra.mxu0 %v426
        %1530 = vmatpush.msra.mxu0 %v418
        %1531 = vmatpush.msra.mxu0 %v410
        %1532 = vmatpush.msra.mxu0 %v402
        %1533 = vmatpush.msra.mxu0 %v394
        %1534 = vmatpush.msra.mxu0 %v386
        %1535 = vmatpush.msra.mxu0 %v378
        %1536 = vmatpush.msra.mxu0 %v370
        %1537 = vmatmul.f32.gmra.mxu0 %v341
        %v1538 = vpop.f32.mrf.mxu0
        %v1539 = vadd.f32 %v1239, %v1538
        %1540 = vdwg.mxu0
        %1541 = vmatpush.msra.mxu0 %v618
        %1542 = vmatpush.msra.mxu0 %v610
        %1543 = vmatpush.msra.mxu0 %v602
        %1544 = vmatpush.msra.mxu0 %v594
        %1545 = vmatpush.msra.mxu0 %v586
        %1546 = vmatpush.msra.mxu0 %v578
        %1547 = vmatpush.msra.mxu0 %v570
        %1548 = vmatpush.msra.mxu0 %v562
        %1549 = vmatpush.msra.mxu0 %v554
        %1550 = vmatpush.msra.mxu0 %v546
        %1551 = vmatpush.msra.mxu0 %v538
        %1552 = vmatpush.msra.mxu0 %v530
        %1553 = vmatpush.msra.mxu0 %v522
        %1554 = vmatpush.msra.mxu0 %v514
        %1555 = vmatpush.msra.mxu0 %v506
        %1556 = vmatpush.msra.mxu0 %v498
        %1557 = vmatmul.f32.gmra.mxu0 %v361
        %v1558 = vpop.f32.mrf.mxu0
        %v1559 = vadd.f32 %v1539, %v1558
        %1560 = vdwg.mxu0
        %s1561 = scalar_lea.vmem [#allocation7], 8
        %v1562 = vld [vmem:[%s1561] sm:$0xf]
        %v1564 = vsel %vm319, %v1562, 0
        %1566 = vmatpush.msra.mxu0 0.0
        %1567 = vmatpush.msra.mxu0 0.0
        %1568 = vmatpush.msra.mxu0 0.0
        %1569 = vmatpush.msra.mxu0 0.0
        %1570 = vmatpush.msra.mxu0 0.0
        %1571 = vmatpush.msra.mxu0 0.0
        %1572 = vmatpush.msra.mxu0 0.0
        %1573 = vmatpush.msra.mxu0 0.0
        %1574 = vmatpush.msra.mxu0 0.0
        %1575 = vmatpush.msra.mxu0 0.0
        %1576 = vmatpush.msra.mxu0 0.0
        %1577 = vmatpush.msra.mxu0 0.0
        %1578 = vmatpush.msra.mxu0 0.0
        %1579 = vmatpush.msra.mxu0 0.0
        %1580 = vmatpush.msra.mxu0 0.0
        %1581 = vmatpush.msra.mxu0 %v316
        %1582 = vmatmul.f32.gmra.mxu0 %v1564
        %v1583 = vpop.f32.mrf.mxu0
        %v1584 = vadd.f32 0.0, %v1583
        %1585 = vdwg.mxu0
        %1586 = vmatpush.msra.mxu0 0.0
        %1587 = vmatpush.msra.mxu0 0.0
        %1588 = vmatpush.msra.mxu0 0.0
        %1589 = vmatpush.msra.mxu0 0.0
        %1590 = vmatpush.msra.mxu0 0.0
        %1591 = vmatpush.msra.mxu0 0.0
        %1592 = vmatpush.msra.mxu0 0.0
        %1593 = vmatpush.msra.mxu0 0.0
        %1594 = vmatpush.msra.mxu0 0.0
        %1595 = vmatpush.msra.mxu0 0.0
        %1596 = vmatpush.msra.mxu0 0.0
        %1597 = vmatpush.msra.mxu0 0.0
        %1598 = vmatpush.msra.mxu0 0.0
        %1599 = vmatpush.msra.mxu0 0.0
        %1600 = vmatpush.msra.mxu0 0.0
        %1601 = vmatpush.msra.mxu0 %v317
        %1602 = vmatmul.f32.gmra.mxu0 %v1564
        %v1603 = vpop.f32.mrf.mxu0
        %v1604 = vadd.f32 0.0, %v1603
        %1605 = vdwg.mxu0
        %s1606 = scalar_lea.vmem [#allocation8], 4096
        %v1607 = vld [vmem:[%s1606] sm:$0xff]
        %v1608 = vld [vmem:[%s1606 + $0x8] sm:$0xff]
        %v1609 = vld [vmem:[%s1606 + $0x10] sm:$0xff]
        %v1610 = vld [vmem:[%s1606 + $0x18] sm:$0xff]
        %v1611 = vld [vmem:[%s1606 + $0x20] sm:$0xff]
        %v1612 = vld [vmem:[%s1606 + $0x28] sm:$0xff]
        %v1613 = vld [vmem:[%s1606 + $0x30] sm:$0xff]
        %v1614 = vld [vmem:[%s1606 + $0x38] sm:$0xff]
        %v1615 = vld [vmem:[%s1606 + $0x40] sm:$0xff]
        %v1616 = vld [vmem:[%s1606 + $0x48] sm:$0xff]
        %v1617 = vld [vmem:[%s1606 + $0x50] sm:$0xff]
        %v1618 = vld [vmem:[%s1606 + $0x58] sm:$0xff]
        %v1619 = vld [vmem:[%s1606 + $0x60] sm:$0xff]
        %v1620 = vld [vmem:[%s1606 + $0x68] sm:$0xff]
        %v1621 = vld [vmem:[%s1606 + $0x70] sm:$0xff]
        %v1622 = vld [vmem:[%s1606 + $0x78] sm:$0xff]
        %v1623 = vld [vmem:[%s1606 + $0x80] sm:$0xff]
        %v1624 = vld [vmem:[%s1606 + $0x88] sm:$0xff]
        %v1625 = vld [vmem:[%s1606 + $0x90] sm:$0xff]
        %v1626 = vld [vmem:[%s1606 + $0x98] sm:$0xff]
        %v1627 = vld [vmem:[%s1606 + $0xa0] sm:$0xff]
        %v1628 = vld [vmem:[%s1606 + $0xa8] sm:$0xff]
        %v1629 = vld [vmem:[%s1606 + $0xb0] sm:$0xff]
        %v1630 = vld [vmem:[%s1606 + $0xb8] sm:$0xff]
        %v1631 = vld [vmem:[%s1606 + $0xc0] sm:$0xff]
        %v1632 = vld [vmem:[%s1606 + $0xc8] sm:$0xff]
        %v1633 = vld [vmem:[%s1606 + $0xd0] sm:$0xff]
        %v1634 = vld [vmem:[%s1606 + $0xd8] sm:$0xff]
        %v1635 = vld [vmem:[%s1606 + $0xe0] sm:$0xff]
        %v1636 = vld [vmem:[%s1606 + $0xe8] sm:$0xff]
        %v1637 = vld [vmem:[%s1606 + $0xf0] sm:$0xff]
        %v1638 = vld [vmem:[%s1606 + $0xf8] sm:$0xff]
        %v1639 = vld [vmem:[%s1606 + $0x100] sm:$0xff]
        %v1640 = vld [vmem:[%s1606 + $0x108] sm:$0xff]
        %v1641 = vld [vmem:[%s1606 + $0x110] sm:$0xff]
        %v1642 = vld [vmem:[%s1606 + $0x118] sm:$0xff]
        %v1643 = vld [vmem:[%s1606 + $0x120] sm:$0xff]
        %v1644 = vld [vmem:[%s1606 + $0x128] sm:$0xff]
        %v1645 = vld [vmem:[%s1606 + $0x130] sm:$0xff]
        %v1646 = vld [vmem:[%s1606 + $0x138] sm:$0xff]
        %v1647 = vld [vmem:[%s1606 + $0x140] sm:$0xff]
        %v1648 = vld [vmem:[%s1606 + $0x148] sm:$0xff]
        %v1649 = vld [vmem:[%s1606 + $0x150] sm:$0xff]
        %v1650 = vld [vmem:[%s1606 + $0x158] sm:$0xff]
        %v1651 = vld [vmem:[%s1606 + $0x160] sm:$0xff]
        %v1652 = vld [vmem:[%s1606 + $0x168] sm:$0xff]
        %v1653 = vld [vmem:[%s1606 + $0x170] sm:$0xff]
        %v1654 = vld [vmem:[%s1606 + $0x178] sm:$0xff]
        %v1655 = vld [vmem:[%s1606 + $0x180] sm:$0xff]
        %v1656 = vld [vmem:[%s1606 + $0x188] sm:$0xff]
        %v1657 = vld [vmem:[%s1606 + $0x190] sm:$0xff]
        %v1658 = vld [vmem:[%s1606 + $0x198] sm:$0xff]
        %v1659 = vld [vmem:[%s1606 + $0x1a0] sm:$0xff]
        %v1660 = vld [vmem:[%s1606 + $0x1a8] sm:$0xff]
        %v1661 = vld [vmem:[%s1606 + $0x1b0] sm:$0xff]
        %v1662 = vld [vmem:[%s1606 + $0x1b8] sm:$0xff]
        %v1663 = vld [vmem:[%s1606 + $0x1c0] sm:$0xff]
        %v1664 = vld [vmem:[%s1606 + $0x1c8] sm:$0xff]
        %v1665 = vld [vmem:[%s1606 + $0x1d0] sm:$0xff]
        %v1666 = vld [vmem:[%s1606 + $0x1d8] sm:$0xff]
        %v1667 = vld [vmem:[%s1606 + $0x1e0] sm:$0xff]
        %v1668 = vld [vmem:[%s1606 + $0x1e8] sm:$0xff]
        %v1669 = vld [vmem:[%s1606 + $0x1f0] sm:$0xff]
        %v1670 = vld [vmem:[%s1606 + $0x1f8] sm:$0xff]
        %v1671 = vld [vmem:[%s1606 + $0x200] sm:$0xff]
        %v1672 = vld [vmem:[%s1606 + $0x208] sm:$0xff]
        %v1673 = vld [vmem:[%s1606 + $0x210] sm:$0xff]
        %v1674 = vld [vmem:[%s1606 + $0x218] sm:$0xff]
        %v1675 = vld [vmem:[%s1606 + $0x220] sm:$0xff]
        %v1676 = vld [vmem:[%s1606 + $0x228] sm:$0xff]
        %v1677 = vld [vmem:[%s1606 + $0x230] sm:$0xff]
        %v1678 = vld [vmem:[%s1606 + $0x238] sm:$0xff]
        %v1679 = vld [vmem:[%s1606 + $0x240] sm:$0xff]
        %v1680 = vld [vmem:[%s1606 + $0x248] sm:$0xff]
        %v1681 = vld [vmem:[%s1606 + $0x250] sm:$0xff]
        %v1682 = vld [vmem:[%s1606 + $0x258] sm:$0xff]
        %v1683 = vld [vmem:[%s1606 + $0x260] sm:$0xff]
        %v1684 = vld [vmem:[%s1606 + $0x268] sm:$0xff]
        %v1685 = vld [vmem:[%s1606 + $0x270] sm:$0xff]
        %v1686 = vld [vmem:[%s1606 + $0x278] sm:$0xff]
        %v1687 = vld [vmem:[%s1606 + $0x280] sm:$0xff]
        %v1688 = vld [vmem:[%s1606 + $0x288] sm:$0xff]
        %v1689 = vld [vmem:[%s1606 + $0x290] sm:$0xff]
        %v1690 = vld [vmem:[%s1606 + $0x298] sm:$0xff]
        %v1691 = vld [vmem:[%s1606 + $0x2a0] sm:$0xff]
        %v1692 = vld [vmem:[%s1606 + $0x2a8] sm:$0xff]
        %v1693 = vld [vmem:[%s1606 + $0x2b0] sm:$0xff]
        %v1694 = vld [vmem:[%s1606 + $0x2b8] sm:$0xff]
        %v1695 = vld [vmem:[%s1606 + $0x2c0] sm:$0xff]
        %v1696 = vld [vmem:[%s1606 + $0x2c8] sm:$0xff]
        %v1697 = vld [vmem:[%s1606 + $0x2d0] sm:$0xff]
        %v1698 = vld [vmem:[%s1606 + $0x2d8] sm:$0xff]
        %v1699 = vld [vmem:[%s1606 + $0x2e0] sm:$0xff]
        %v1700 = vld [vmem:[%s1606 + $0x2e8] sm:$0xff]
        %v1701 = vld [vmem:[%s1606 + $0x2f0] sm:$0xff]
        %v1702 = vld [vmem:[%s1606 + $0x2f8] sm:$0xff]
        %v1703 = vld [vmem:[%s1606 + $0x300] sm:$0xff]
        %v1704 = vld [vmem:[%s1606 + $0x308] sm:$0xff]
        %v1705 = vld [vmem:[%s1606 + $0x310] sm:$0xff]
        %v1706 = vld [vmem:[%s1606 + $0x318] sm:$0xff]
        %v1707 = vld [vmem:[%s1606 + $0x320] sm:$0xff]
        %v1708 = vld [vmem:[%s1606 + $0x328] sm:$0xff]
        %v1709 = vld [vmem:[%s1606 + $0x330] sm:$0xff]
        %v1710 = vld [vmem:[%s1606 + $0x338] sm:$0xff]
        %v1711 = vld [vmem:[%s1606 + $0x340] sm:$0xff]
        %v1712 = vld [vmem:[%s1606 + $0x348] sm:$0xff]
        %v1713 = vld [vmem:[%s1606 + $0x350] sm:$0xff]
        %v1714 = vld [vmem:[%s1606 + $0x358] sm:$0xff]
        %v1715 = vld [vmem:[%s1606 + $0x360] sm:$0xff]
        %v1716 = vld [vmem:[%s1606 + $0x368] sm:$0xff]
        %v1717 = vld [vmem:[%s1606 + $0x370] sm:$0xff]
        %v1718 = vld [vmem:[%s1606 + $0x378] sm:$0xff]
        %v1719 = vld [vmem:[%s1606 + $0x380] sm:$0xff]
        %v1720 = vld [vmem:[%s1606 + $0x388] sm:$0xff]
        %v1721 = vld [vmem:[%s1606 + $0x390] sm:$0xff]
        %v1722 = vld [vmem:[%s1606 + $0x398] sm:$0xff]
        %v1723 = vld [vmem:[%s1606 + $0x3a0] sm:$0xff]
        %v1724 = vld [vmem:[%s1606 + $0x3a8] sm:$0xff]
        %v1725 = vld [vmem:[%s1606 + $0x3b0] sm:$0xff]
        %v1726 = vld [vmem:[%s1606 + $0x3b8] sm:$0xff]
        %v1727 = vld [vmem:[%s1606 + $0x3c0] sm:$0xff]
        %v1728 = vld [vmem:[%s1606 + $0x3c8] sm:$0xff]
        %v1729 = vld [vmem:[%s1606 + $0x3d0] sm:$0xff]
        %v1730 = vld [vmem:[%s1606 + $0x3d8] sm:$0xff]
        %v1731 = vld [vmem:[%s1606 + $0x3e0] sm:$0xff]
        %v1732 = vld [vmem:[%s1606 + $0x3e8] sm:$0xff]
        %v1733 = vld [vmem:[%s1606 + $0x3f0] sm:$0xff]
        %v1734 = vld [vmem:[%s1606 + $0x3f8] sm:$0xff]
        %v1735 = vld [vmem:[%s1606 + $0x400] sm:$0xff]
        %v1736 = vld [vmem:[%s1606 + $0x408] sm:$0xff]
        %v1737 = vld [vmem:[%s1606 + $0x410] sm:$0xff]
        %v1738 = vld [vmem:[%s1606 + $0x418] sm:$0xff]
        %v1739 = vld [vmem:[%s1606 + $0x420] sm:$0xff]
        %v1740 = vld [vmem:[%s1606 + $0x428] sm:$0xff]
        %v1741 = vld [vmem:[%s1606 + $0x430] sm:$0xff]
        %v1742 = vld [vmem:[%s1606 + $0x438] sm:$0xff]
        %v1743 = vld [vmem:[%s1606 + $0x440] sm:$0xff]
        %v1744 = vld [vmem:[%s1606 + $0x448] sm:$0xff]
        %v1745 = vld [vmem:[%s1606 + $0x450] sm:$0xff]
        %v1746 = vld [vmem:[%s1606 + $0x458] sm:$0xff]
        %v1747 = vld [vmem:[%s1606 + $0x460] sm:$0xff]
        %v1748 = vld [vmem:[%s1606 + $0x468] sm:$0xff]
        %v1749 = vld [vmem:[%s1606 + $0x470] sm:$0xff]
        %v1750 = vld [vmem:[%s1606 + $0x478] sm:$0xff]
        %v1751 = vld [vmem:[%s1606 + $0x480] sm:$0xff]
        %v1752 = vld [vmem:[%s1606 + $0x488] sm:$0xff]
        %v1753 = vld [vmem:[%s1606 + $0x490] sm:$0xff]
        %v1754 = vld [vmem:[%s1606 + $0x498] sm:$0xff]
        %v1755 = vld [vmem:[%s1606 + $0x4a0] sm:$0xff]
        %v1756 = vld [vmem:[%s1606 + $0x4a8] sm:$0xff]
        %v1757 = vld [vmem:[%s1606 + $0x4b0] sm:$0xff]
        %v1758 = vld [vmem:[%s1606 + $0x4b8] sm:$0xff]
        %v1759 = vld [vmem:[%s1606 + $0x4c0] sm:$0xff]
        %v1760 = vld [vmem:[%s1606 + $0x4c8] sm:$0xff]
        %v1761 = vld [vmem:[%s1606 + $0x4d0] sm:$0xff]
        %v1762 = vld [vmem:[%s1606 + $0x4d8] sm:$0xff]
        %v1763 = vld [vmem:[%s1606 + $0x4e0] sm:$0xff]
        %v1764 = vld [vmem:[%s1606 + $0x4e8] sm:$0xff]
        %v1765 = vld [vmem:[%s1606 + $0x4f0] sm:$0xff]
        %v1766 = vld [vmem:[%s1606 + $0x4f8] sm:$0xff]
        %v1767 = vld [vmem:[%s1606 + $0x500] sm:$0xff]
        %v1768 = vld [vmem:[%s1606 + $0x508] sm:$0xff]
        %v1769 = vld [vmem:[%s1606 + $0x510] sm:$0xff]
        %v1770 = vld [vmem:[%s1606 + $0x518] sm:$0xff]
        %v1771 = vld [vmem:[%s1606 + $0x520] sm:$0xff]
        %v1772 = vld [vmem:[%s1606 + $0x528] sm:$0xff]
        %v1773 = vld [vmem:[%s1606 + $0x530] sm:$0xff]
        %v1774 = vld [vmem:[%s1606 + $0x538] sm:$0xff]
        %v1775 = vld [vmem:[%s1606 + $0x540] sm:$0xff]
        %v1776 = vld [vmem:[%s1606 + $0x548] sm:$0xff]
        %v1777 = vld [vmem:[%s1606 + $0x550] sm:$0xff]
        %v1778 = vld [vmem:[%s1606 + $0x558] sm:$0xff]
        %v1779 = vld [vmem:[%s1606 + $0x560] sm:$0xff]
        %v1780 = vld [vmem:[%s1606 + $0x568] sm:$0xff]
        %v1781 = vld [vmem:[%s1606 + $0x570] sm:$0xff]
        %v1782 = vld [vmem:[%s1606 + $0x578] sm:$0xff]
        %v1783 = vld [vmem:[%s1606 + $0x580] sm:$0xff]
        %v1784 = vld [vmem:[%s1606 + $0x588] sm:$0xff]
        %v1785 = vld [vmem:[%s1606 + $0x590] sm:$0xff]
        %v1786 = vld [vmem:[%s1606 + $0x598] sm:$0xff]
        %v1787 = vld [vmem:[%s1606 + $0x5a0] sm:$0xff]
        %v1788 = vld [vmem:[%s1606 + $0x5a8] sm:$0xff]
        %v1789 = vld [vmem:[%s1606 + $0x5b0] sm:$0xff]
        %v1790 = vld [vmem:[%s1606 + $0x5b8] sm:$0xff]
        %v1791 = vld [vmem:[%s1606 + $0x5c0] sm:$0xff]
        %v1792 = vld [vmem:[%s1606 + $0x5c8] sm:$0xff]
        %v1793 = vld [vmem:[%s1606 + $0x5d0] sm:$0xff]
        %v1794 = vld [vmem:[%s1606 + $0x5d8] sm:$0xff]
        %v1795 = vld [vmem:[%s1606 + $0x5e0] sm:$0xff]
        %v1796 = vld [vmem:[%s1606 + $0x5e8] sm:$0xff]
        %v1797 = vld [vmem:[%s1606 + $0x5f0] sm:$0xff]
        %v1798 = vld [vmem:[%s1606 + $0x5f8] sm:$0xff]
        %v1799 = vld [vmem:[%s1606 + $0x600] sm:$0xff]
        %v1800 = vld [vmem:[%s1606 + $0x608] sm:$0xff]
        %v1801 = vld [vmem:[%s1606 + $0x610] sm:$0xff]
        %v1802 = vld [vmem:[%s1606 + $0x618] sm:$0xff]
        %v1803 = vld [vmem:[%s1606 + $0x620] sm:$0xff]
        %v1804 = vld [vmem:[%s1606 + $0x628] sm:$0xff]
        %v1805 = vld [vmem:[%s1606 + $0x630] sm:$0xff]
        %v1806 = vld [vmem:[%s1606 + $0x638] sm:$0xff]
        %v1807 = vld [vmem:[%s1606 + $0x640] sm:$0xff]
        %v1808 = vld [vmem:[%s1606 + $0x648] sm:$0xff]
        %v1809 = vld [vmem:[%s1606 + $0x650] sm:$0xff]
        %v1810 = vld [vmem:[%s1606 + $0x658] sm:$0xff]
        %v1811 = vld [vmem:[%s1606 + $0x660] sm:$0xff]
        %v1812 = vld [vmem:[%s1606 + $0x668] sm:$0xff]
        %v1813 = vld [vmem:[%s1606 + $0x670] sm:$0xff]
        %v1814 = vld [vmem:[%s1606 + $0x678] sm:$0xff]
        %v1815 = vld [vmem:[%s1606 + $0x680] sm:$0xff]
        %v1816 = vld [vmem:[%s1606 + $0x688] sm:$0xff]
        %v1817 = vld [vmem:[%s1606 + $0x690] sm:$0xff]
        %v1818 = vld [vmem:[%s1606 + $0x698] sm:$0xff]
        %v1819 = vld [vmem:[%s1606 + $0x6a0] sm:$0xff]
        %v1820 = vld [vmem:[%s1606 + $0x6a8] sm:$0xff]
        %v1821 = vld [vmem:[%s1606 + $0x6b0] sm:$0xff]
        %v1822 = vld [vmem:[%s1606 + $0x6b8] sm:$0xff]
        %v1823 = vld [vmem:[%s1606 + $0x6c0] sm:$0xff]
        %v1824 = vld [vmem:[%s1606 + $0x6c8] sm:$0xff]
        %v1825 = vld [vmem:[%s1606 + $0x6d0] sm:$0xff]
        %v1826 = vld [vmem:[%s1606 + $0x6d8] sm:$0xff]
        %v1827 = vld [vmem:[%s1606 + $0x6e0] sm:$0xff]
        %v1828 = vld [vmem:[%s1606 + $0x6e8] sm:$0xff]
        %v1829 = vld [vmem:[%s1606 + $0x6f0] sm:$0xff]
        %v1830 = vld [vmem:[%s1606 + $0x6f8] sm:$0xff]
        %v1831 = vld [vmem:[%s1606 + $0x700] sm:$0xff]
        %v1832 = vld [vmem:[%s1606 + $0x708] sm:$0xff]
        %v1833 = vld [vmem:[%s1606 + $0x710] sm:$0xff]
        %v1834 = vld [vmem:[%s1606 + $0x718] sm:$0xff]
        %v1835 = vld [vmem:[%s1606 + $0x720] sm:$0xff]
        %v1836 = vld [vmem:[%s1606 + $0x728] sm:$0xff]
        %v1837 = vld [vmem:[%s1606 + $0x730] sm:$0xff]
        %v1838 = vld [vmem:[%s1606 + $0x738] sm:$0xff]
        %v1839 = vld [vmem:[%s1606 + $0x740] sm:$0xff]
        %v1840 = vld [vmem:[%s1606 + $0x748] sm:$0xff]
        %v1841 = vld [vmem:[%s1606 + $0x750] sm:$0xff]
        %v1842 = vld [vmem:[%s1606 + $0x758] sm:$0xff]
        %v1843 = vld [vmem:[%s1606 + $0x760] sm:$0xff]
        %v1844 = vld [vmem:[%s1606 + $0x768] sm:$0xff]
        %v1845 = vld [vmem:[%s1606 + $0x770] sm:$0xff]
        %v1846 = vld [vmem:[%s1606 + $0x778] sm:$0xff]
        %v1847 = vld [vmem:[%s1606 + $0x780] sm:$0xff]
        %v1848 = vld [vmem:[%s1606 + $0x788] sm:$0xff]
        %v1849 = vld [vmem:[%s1606 + $0x790] sm:$0xff]
        %v1850 = vld [vmem:[%s1606 + $0x798] sm:$0xff]
        %v1851 = vld [vmem:[%s1606 + $0x7a0] sm:$0xff]
        %v1852 = vld [vmem:[%s1606 + $0x7a8] sm:$0xff]
        %v1853 = vld [vmem:[%s1606 + $0x7b0] sm:$0xff]
        %v1854 = vld [vmem:[%s1606 + $0x7b8] sm:$0xff]
        %v1855 = vld [vmem:[%s1606 + $0x7c0] sm:$0xff]
        %v1856 = vld [vmem:[%s1606 + $0x7c8] sm:$0xff]
        %v1857 = vld [vmem:[%s1606 + $0x7d0] sm:$0xff]
        %v1858 = vld [vmem:[%s1606 + $0x7d8] sm:$0xff]
        %v1859 = vld [vmem:[%s1606 + $0x7e0] sm:$0xff]
        %v1860 = vld [vmem:[%s1606 + $0x7e8] sm:$0xff]
        %v1861 = vld [vmem:[%s1606 + $0x7f0] sm:$0xff]
        %v1862 = vld [vmem:[%s1606 + $0x7f8] sm:$0xff]
        %1863 = vmatpush.msra.mxu0 %v1727
        %1864 = vmatpush.msra.mxu0 %v1719
        %1865 = vmatpush.msra.mxu0 %v1711
        %1866 = vmatpush.msra.mxu0 %v1703
        %1867 = vmatpush.msra.mxu0 %v1695
        %1868 = vmatpush.msra.mxu0 %v1687
        %1869 = vmatpush.msra.mxu0 %v1679
        %1870 = vmatpush.msra.mxu0 %v1671
        %1871 = vmatpush.msra.mxu0 %v1663
        %1872 = vmatpush.msra.mxu0 %v1655
        %1873 = vmatpush.msra.mxu0 %v1647
        %1874 = vmatpush.msra.mxu0 %v1639
        %1875 = vmatpush.msra.mxu0 %v1631
        %1876 = vmatpush.msra.mxu0 %v1623
        %1877 = vmatpush.msra.mxu0 %v1615
        %1878 = vmatpush.msra.mxu0 %v1607
        %1879 = vmatmul.f32.gmra.mxu0 %v1584
        %v1880 = vpop.f32.mrf.mxu0
        %v1881 = vadd.f32 0.0, %v1880
        %1882 = vdwg.mxu0
        %1883 = vmatpush.msra.mxu0 %v1855
        %1884 = vmatpush.msra.mxu0 %v1847
        %1885 = vmatpush.msra.mxu0 %v1839
        %1886 = vmatpush.msra.mxu0 %v1831
        %1887 = vmatpush.msra.mxu0 %v1823
        %1888 = vmatpush.msra.mxu0 %v1815
        %1889 = vmatpush.msra.mxu0 %v1807
        %1890 = vmatpush.msra.mxu0 %v1799
        %1891 = vmatpush.msra.mxu0 %v1791
        %1892 = vmatpush.msra.mxu0 %v1783
        %1893 = vmatpush.msra.mxu0 %v1775
        %1894 = vmatpush.msra.mxu0 %v1767
        %1895 = vmatpush.msra.mxu0 %v1759
        %1896 = vmatpush.msra.mxu0 %v1751
        %1897 = vmatpush.msra.mxu0 %v1743
        %1898 = vmatpush.msra.mxu0 %v1735
        %1899 = vmatmul.f32.gmra.mxu0 %v1604
        %v1900 = vpop.f32.mrf.mxu0
        %v1901 = vadd.f32 %v1881, %v1900
        %1902 = vdwg.mxu0
        %1903 = vmatpush.msra.mxu0 %v1728
        %1904 = vmatpush.msra.mxu0 %v1720
        %1905 = vmatpush.msra.mxu0 %v1712
        %1906 = vmatpush.msra.mxu0 %v1704
        %1907 = vmatpush.msra.mxu0 %v1696
        %1908 = vmatpush.msra.mxu0 %v1688
        %1909 = vmatpush.msra.mxu0 %v1680
        %1910 = vmatpush.msra.mxu0 %v1672
        %1911 = vmatpush.msra.mxu0 %v1664
        %1912 = vmatpush.msra.mxu0 %v1656
        %1913 = vmatpush.msra.mxu0 %v1648
        %1914 = vmatpush.msra.mxu0 %v1640
        %1915 = vmatpush.msra.mxu0 %v1632
        %1916 = vmatpush.msra.mxu0 %v1624
        %1917 = vmatpush.msra.mxu0 %v1616
        %1918 = vmatpush.msra.mxu0 %v1608
        %1919 = vmatmul.f32.gmra.mxu0 %v1584
        %v1920 = vpop.f32.mrf.mxu0
        %v1921 = vadd.f32 0.0, %v1920
        %1922 = vdwg.mxu0
        %1923 = vmatpush.msra.mxu0 %v1856
        %1924 = vmatpush.msra.mxu0 %v1848
        %1925 = vmatpush.msra.mxu0 %v1840
        %1926 = vmatpush.msra.mxu0 %v1832
        %1927 = vmatpush.msra.mxu0 %v1824
        %1928 = vmatpush.msra.mxu0 %v1816
        %1929 = vmatpush.msra.mxu0 %v1808
        %1930 = vmatpush.msra.mxu0 %v1800
        %1931 = vmatpush.msra.mxu0 %v1792
        %1932 = vmatpush.msra.mxu0 %v1784
        %1933 = vmatpush.msra.mxu0 %v1776
        %1934 = vmatpush.msra.mxu0 %v1768
        %1935 = vmatpush.msra.mxu0 %v1760
        %1936 = vmatpush.msra.mxu0 %v1752
        %1937 = vmatpush.msra.mxu0 %v1744
        %1938 = vmatpush.msra.mxu0 %v1736
        %1939 = vmatmul.f32.gmra.mxu0 %v1604
        %v1940 = vpop.f32.mrf.mxu0
        %v1941 = vadd.f32 %v1921, %v1940
        %1942 = vdwg.mxu0
        %1943 = vmatpush.msra.mxu0 %v1729
        %1944 = vmatpush.msra.mxu0 %v1721
        %1945 = vmatpush.msra.mxu0 %v1713
        %1946 = vmatpush.msra.mxu0 %v1705
        %1947 = vmatpush.msra.mxu0 %v1697
        %1948 = vmatpush.msra.mxu0 %v1689
        %1949 = vmatpush.msra.mxu0 %v1681
        %1950 = vmatpush.msra.mxu0 %v1673
        %1951 = vmatpush.msra.mxu0 %v1665
        %1952 = vmatpush.msra.mxu0 %v1657
        %1953 = vmatpush.msra.mxu0 %v1649
        %1954 = vmatpush.msra.mxu0 %v1641
        %1955 = vmatpush.msra.mxu0 %v1633
        %1956 = vmatpush.msra.mxu0 %v1625
        %1957 = vmatpush.msra.mxu0 %v1617
        %1958 = vmatpush.msra.mxu0 %v1609
        %1959 = vmatmul.f32.gmra.mxu0 %v1584
        %v1960 = vpop.f32.mrf.mxu0
        %v1961 = vadd.f32 0.0, %v1960
        %1962 = vdwg.mxu0
        %1963 = vmatpush.msra.mxu0 %v1857
        %1964 = vmatpush.msra.mxu0 %v1849
        %1965 = vmatpush.msra.mxu0 %v1841
        %1966 = vmatpush.msra.mxu0 %v1833
        %1967 = vmatpush.msra.mxu0 %v1825
        %1968 = vmatpush.msra.mxu0 %v1817
        %1969 = vmatpush.msra.mxu0 %v1809
        %1970 = vmatpush.msra.mxu0 %v1801
        %1971 = vmatpush.msra.mxu0 %v1793
        %1972 = vmatpush.msra.mxu0 %v1785
        %1973 = vmatpush.msra.mxu0 %v1777
        %1974 = vmatpush.msra.mxu0 %v1769
        %1975 = vmatpush.msra.mxu0 %v1761
        %1976 = vmatpush.msra.mxu0 %v1753
        %1977 = vmatpush.msra.mxu0 %v1745
        %1978 = vmatpush.msra.mxu0 %v1737
        %1979 = vmatmul.f32.gmra.mxu0 %v1604
        %v1980 = vpop.f32.mrf.mxu0
        %v1981 = vadd.f32 %v1961, %v1980
        %1982 = vdwg.mxu0
        %1983 = vmatpush.msra.mxu0 %v1730
        %1984 = vmatpush.msra.mxu0 %v1722
        %1985 = vmatpush.msra.mxu0 %v1714
        %1986 = vmatpush.msra.mxu0 %v1706
        %1987 = vmatpush.msra.mxu0 %v1698
        %1988 = vmatpush.msra.mxu0 %v1690
        %1989 = vmatpush.msra.mxu0 %v1682
        %1990 = vmatpush.msra.mxu0 %v1674
        %1991 = vmatpush.msra.mxu0 %v1666
        %1992 = vmatpush.msra.mxu0 %v1658
        %1993 = vmatpush.msra.mxu0 %v1650
        %1994 = vmatpush.msra.mxu0 %v1642
        %1995 = vmatpush.msra.mxu0 %v1634
        %1996 = vmatpush.msra.mxu0 %v1626
        %1997 = vmatpush.msra.mxu0 %v1618
        %1998 = vmatpush.msra.mxu0 %v1610
        %1999 = vmatmul.f32.gmra.mxu0 %v1584
        %v2000 = vpop.f32.mrf.mxu0
        %v2001 = vadd.f32 0.0, %v2000
        %2002 = vdwg.mxu0
        %2003 = vmatpush.msra.mxu0 %v1858
        %2004 = vmatpush.msra.mxu0 %v1850
        %2005 = vmatpush.msra.mxu0 %v1842
        %2006 = vmatpush.msra.mxu0 %v1834
        %2007 = vmatpush.msra.mxu0 %v1826
        %2008 = vmatpush.msra.mxu0 %v1818
        %2009 = vmatpush.msra.mxu0 %v1810
        %2010 = vmatpush.msra.mxu0 %v1802
        %2011 = vmatpush.msra.mxu0 %v1794
        %2012 = vmatpush.msra.mxu0 %v1786
        %2013 = vmatpush.msra.mxu0 %v1778
        %2014 = vmatpush.msra.mxu0 %v1770
        %2015 = vmatpush.msra.mxu0 %v1762
        %2016 = vmatpush.msra.mxu0 %v1754
        %2017 = vmatpush.msra.mxu0 %v1746
        %2018 = vmatpush.msra.mxu0 %v1738
        %2019 = vmatmul.f32.gmra.mxu0 %v1604
        %v2020 = vpop.f32.mrf.mxu0
        %v2021 = vadd.f32 %v2001, %v2020
        %2022 = vdwg.mxu0
        %2023 = vmatpush.msra.mxu0 %v1731
        %2024 = vmatpush.msra.mxu0 %v1723
        %2025 = vmatpush.msra.mxu0 %v1715
        %2026 = vmatpush.msra.mxu0 %v1707
        %2027 = vmatpush.msra.mxu0 %v1699
        %2028 = vmatpush.msra.mxu0 %v1691
        %2029 = vmatpush.msra.mxu0 %v1683
        %2030 = vmatpush.msra.mxu0 %v1675
        %2031 = vmatpush.msra.mxu0 %v1667
        %2032 = vmatpush.msra.mxu0 %v1659
        %2033 = vmatpush.msra.mxu0 %v1651
        %2034 = vmatpush.msra.mxu0 %v1643
        %2035 = vmatpush.msra.mxu0 %v1635
        %2036 = vmatpush.msra.mxu0 %v1627
        %2037 = vmatpush.msra.mxu0 %v1619
        %2038 = vmatpush.msra.mxu0 %v1611
        %2039 = vmatmul.f32.gmra.mxu0 %v1584
        %v2040 = vpop.f32.mrf.mxu0
        %v2041 = vadd.f32 0.0, %v2040
        %2042 = vdwg.mxu0
        %2043 = vmatpush.msra.mxu0 %v1859
        %2044 = vmatpush.msra.mxu0 %v1851
        %2045 = vmatpush.msra.mxu0 %v1843
        %2046 = vmatpush.msra.mxu0 %v1835
        %2047 = vmatpush.msra.mxu0 %v1827
        %2048 = vmatpush.msra.mxu0 %v1819
        %2049 = vmatpush.msra.mxu0 %v1811
        %2050 = vmatpush.msra.mxu0 %v1803
        %2051 = vmatpush.msra.mxu0 %v1795
        %2052 = vmatpush.msra.mxu0 %v1787
        %2053 = vmatpush.msra.mxu0 %v1779
        %2054 = vmatpush.msra.mxu0 %v1771
        %2055 = vmatpush.msra.mxu0 %v1763
        %2056 = vmatpush.msra.mxu0 %v1755
        %2057 = vmatpush.msra.mxu0 %v1747
        %2058 = vmatpush.msra.mxu0 %v1739
        %2059 = vmatmul.f32.gmra.mxu0 %v1604
        %v2060 = vpop.f32.mrf.mxu0
        %v2061 = vadd.f32 %v2041, %v2060
        %2062 = vdwg.mxu0
        %2063 = vmatpush.msra.mxu0 %v1732
        %2064 = vmatpush.msra.mxu0 %v1724
        %2065 = vmatpush.msra.mxu0 %v1716
        %2066 = vmatpush.msra.mxu0 %v1708
        %2067 = vmatpush.msra.mxu0 %v1700
        %2068 = vmatpush.msra.mxu0 %v1692
        %2069 = vmatpush.msra.mxu0 %v1684
        %2070 = vmatpush.msra.mxu0 %v1676
        %2071 = vmatpush.msra.mxu0 %v1668
        %2072 = vmatpush.msra.mxu0 %v1660
        %2073 = vmatpush.msra.mxu0 %v1652
        %2074 = vmatpush.msra.mxu0 %v1644
        %2075 = vmatpush.msra.mxu0 %v1636
        %2076 = vmatpush.msra.mxu0 %v1628
        %2077 = vmatpush.msra.mxu0 %v1620
        %2078 = vmatpush.msra.mxu0 %v1612
        %2079 = vmatmul.f32.gmra.mxu0 %v1584
        %v2080 = vpop.f32.mrf.mxu0
        %v2081 = vadd.f32 0.0, %v2080
        %2082 = vdwg.mxu0
        %2083 = vmatpush.msra.mxu0 %v1860
        %2084 = vmatpush.msra.mxu0 %v1852
        %2085 = vmatpush.msra.mxu0 %v1844
        %2086 = vmatpush.msra.mxu0 %v1836
        %2087 = vmatpush.msra.mxu0 %v1828
        %2088 = vmatpush.msra.mxu0 %v1820
        %2089 = vmatpush.msra.mxu0 %v1812
        %2090 = vmatpush.msra.mxu0 %v1804
        %2091 = vmatpush.msra.mxu0 %v1796
        %2092 = vmatpush.msra.mxu0 %v1788
        %2093 = vmatpush.msra.mxu0 %v1780
        %2094 = vmatpush.msra.mxu0 %v1772
        %2095 = vmatpush.msra.mxu0 %v1764
        %2096 = vmatpush.msra.mxu0 %v1756
        %2097 = vmatpush.msra.mxu0 %v1748
        %2098 = vmatpush.msra.mxu0 %v1740
        %2099 = vmatmul.f32.gmra.mxu0 %v1604
        %v2100 = vpop.f32.mrf.mxu0
        %v2101 = vadd.f32 %v2081, %v2100
        %2102 = vdwg.mxu0
        %2103 = vmatpush.msra.mxu0 %v1733
        %2104 = vmatpush.msra.mxu0 %v1725
        %2105 = vmatpush.msra.mxu0 %v1717
        %2106 = vmatpush.msra.mxu0 %v1709
        %2107 = vmatpush.msra.mxu0 %v1701
        %2108 = vmatpush.msra.mxu0 %v1693
        %2109 = vmatpush.msra.mxu0 %v1685
        %2110 = vmatpush.msra.mxu0 %v1677
        %2111 = vmatpush.msra.mxu0 %v1669
        %2112 = vmatpush.msra.mxu0 %v1661
        %2113 = vmatpush.msra.mxu0 %v1653
        %2114 = vmatpush.msra.mxu0 %v1645
        %2115 = vmatpush.msra.mxu0 %v1637
        %2116 = vmatpush.msra.mxu0 %v1629
        %2117 = vmatpush.msra.mxu0 %v1621
        %2118 = vmatpush.msra.mxu0 %v1613
        %2119 = vmatmul.f32.gmra.mxu0 %v1584
        %v2120 = vpop.f32.mrf.mxu0
        %v2121 = vadd.f32 0.0, %v2120
        %2122 = vdwg.mxu0
        %2123 = vmatpush.msra.mxu0 %v1861
        %2124 = vmatpush.msra.mxu0 %v1853
        %2125 = vmatpush.msra.mxu0 %v1845
        %2126 = vmatpush.msra.mxu0 %v1837
        %2127 = vmatpush.msra.mxu0 %v1829
        %2128 = vmatpush.msra.mxu0 %v1821
        %2129 = vmatpush.msra.mxu0 %v1813
        %2130 = vmatpush.msra.mxu0 %v1805
        %2131 = vmatpush.msra.mxu0 %v1797
        %2132 = vmatpush.msra.mxu0 %v1789
        %2133 = vmatpush.msra.mxu0 %v1781
        %2134 = vmatpush.msra.mxu0 %v1773
        %2135 = vmatpush.msra.mxu0 %v1765
        %2136 = vmatpush.msra.mxu0 %v1757
        %2137 = vmatpush.msra.mxu0 %v1749
        %2138 = vmatpush.msra.mxu0 %v1741
        %2139 = vmatmul.f32.gmra.mxu0 %v1604
        %v2140 = vpop.f32.mrf.mxu0
        %v2141 = vadd.f32 %v2121, %v2140
        %2142 = vdwg.mxu0
        %2143 = vmatpush.msra.mxu0 %v1734
        %2144 = vmatpush.msra.mxu0 %v1726
        %2145 = vmatpush.msra.mxu0 %v1718
        %2146 = vmatpush.msra.mxu0 %v1710
        %2147 = vmatpush.msra.mxu0 %v1702
        %2148 = vmatpush.msra.mxu0 %v1694
        %2149 = vmatpush.msra.mxu0 %v1686
        %2150 = vmatpush.msra.mxu0 %v1678
        %2151 = vmatpush.msra.mxu0 %v1670
        %2152 = vmatpush.msra.mxu0 %v1662
        %2153 = vmatpush.msra.mxu0 %v1654
        %2154 = vmatpush.msra.mxu0 %v1646
        %2155 = vmatpush.msra.mxu0 %v1638
        %2156 = vmatpush.msra.mxu0 %v1630
        %2157 = vmatpush.msra.mxu0 %v1622
        %2158 = vmatpush.msra.mxu0 %v1614
        %2159 = vmatmul.f32.gmra.mxu0 %v1584
        %v2160 = vpop.f32.mrf.mxu0
        %v2161 = vadd.f32 0.0, %v2160
        %2162 = vdwg.mxu0
        %2163 = vmatpush.msra.mxu0 %v1862
        %2164 = vmatpush.msra.mxu0 %v1854
        %2165 = vmatpush.msra.mxu0 %v1846
        %2166 = vmatpush.msra.mxu0 %v1838
        %2167 = vmatpush.msra.mxu0 %v1830
        %2168 = vmatpush.msra.mxu0 %v1822
        %2169 = vmatpush.msra.mxu0 %v1814
        %2170 = vmatpush.msra.mxu0 %v1806
        %2171 = vmatpush.msra.mxu0 %v1798
        %2172 = vmatpush.msra.mxu0 %v1790
        %2173 = vmatpush.msra.mxu0 %v1782
        %2174 = vmatpush.msra.mxu0 %v1774
        %2175 = vmatpush.msra.mxu0 %v1766
        %2176 = vmatpush.msra.mxu0 %v1758
        %2177 = vmatpush.msra.mxu0 %v1750
        %2178 = vmatpush.msra.mxu0 %v1742
        %2179 = vmatmul.f32.gmra.mxu0 %v1604
        %v2180 = vpop.f32.mrf.mxu0
        %v2181 = vadd.f32 %v2161, %v2180
        %2182 = vdwg.mxu0
        %v2183 = vadd.f32 %v1279, %v1901
        %v2184 = vadd.f32 %v1319, %v1941
        %v2185 = vadd.f32 %v1359, %v1981
        %v2186 = vadd.f32 %v1399, %v2021
        %v2187 = vadd.f32 %v1439, %v2061
        %v2188 = vadd.f32 %v1479, %v2101
        %v2189 = vadd.f32 %v1519, %v2141
        %v2190 = vadd.f32 %v1559, %v2181
        %s2191 = scalar_lea.vmem [#allocation7], 12
        %v2192 = vld [vmem:[%s2191] sm:$0xf]
        %v2194 = vsel %vm319, %v2192, 0
        %2196 = vmatpush.msra.mxu0 0.0
        %2197 = vmatpush.msra.mxu0 0.0
        %2198 = vmatpush.msra.mxu0 0.0
        %2199 = vmatpush.msra.mxu0 0.0
        %2200 = vmatpush.msra.mxu0 0.0
        %2201 = vmatpush.msra.mxu0 0.0
        %2202 = vmatpush.msra.mxu0 0.0
        %2203 = vmatpush.msra.mxu0 0.0
        %2204 = vmatpush.msra.mxu0 0.0
        %2205 = vmatpush.msra.mxu0 0.0
        %2206 = vmatpush.msra.mxu0 0.0
        %2207 = vmatpush.msra.mxu0 0.0
        %2208 = vmatpush.msra.mxu0 0.0
        %2209 = vmatpush.msra.mxu0 0.0
        %2210 = vmatpush.msra.mxu0 0.0
        %2211 = vmatpush.msra.mxu0 %v316
        %2212 = vmatmul.f32.gmra.mxu0 %v2194
        %v2213 = vpop.f32.mrf.mxu0
        %v2214 = vadd.f32 0.0, %v2213
        %2215 = vdwg.mxu0
        %2216 = vmatpush.msra.mxu0 0.0
        %2217 = vmatpush.msra.mxu0 0.0
        %2218 = vmatpush.msra.mxu0 0.0
        %2219 = vmatpush.msra.mxu0 0.0
        %2220 = vmatpush.msra.mxu0 0.0
        %2221 = vmatpush.msra.mxu0 0.0
        %2222 = vmatpush.msra.mxu0 0.0
        %2223 = vmatpush.msra.mxu0 0.0
        %2224 = vmatpush.msra.mxu0 0.0
        %2225 = vmatpush.msra.mxu0 0.0
        %2226 = vmatpush.msra.mxu0 0.0
        %2227 = vmatpush.msra.mxu0 0.0
        %2228 = vmatpush.msra.mxu0 0.0
        %2229 = vmatpush.msra.mxu0 0.0
        %2230 = vmatpush.msra.mxu0 0.0
        %2231 = vmatpush.msra.mxu0 %v317
        %2232 = vmatmul.f32.gmra.mxu0 %v2194
        %v2233 = vpop.f32.mrf.mxu0
        %v2234 = vadd.f32 0.0, %v2233
        %2235 = vdwg.mxu0
        %s2236 = scalar_lea.vmem [#allocation8], 6144
        %v2237 = vld [vmem:[%s2236] sm:$0xff]
        %v2238 = vld [vmem:[%s2236 + $0x8] sm:$0xff]
        %v2239 = vld [vmem:[%s2236 + $0x10] sm:$0xff]
        %v2240 = vld [vmem:[%s2236 + $0x18] sm:$0xff]
        %v2241 = vld [vmem:[%s2236 + $0x20] sm:$0xff]
        %v2242 = vld [vmem:[%s2236 + $0x28] sm:$0xff]
        %v2243 = vld [vmem:[%s2236 + $0x30] sm:$0xff]
        %v2244 = vld [vmem:[%s2236 + $0x38] sm:$0xff]
        %v2245 = vld [vmem:[%s2236 + $0x40] sm:$0xff]
        %v2246 = vld [vmem:[%s2236 + $0x48] sm:$0xff]
        %v2247 = vld [vmem:[%s2236 + $0x50] sm:$0xff]
        %v2248 = vld [vmem:[%s2236 + $0x58] sm:$0xff]
        %v2249 = vld [vmem:[%s2236 + $0x60] sm:$0xff]
        %v2250 = vld [vmem:[%s2236 + $0x68] sm:$0xff]
        %v2251 = vld [vmem:[%s2236 + $0x70] sm:$0xff]
        %v2252 = vld [vmem:[%s2236 + $0x78] sm:$0xff]
        %v2253 = vld [vmem:[%s2236 + $0x80] sm:$0xff]
        %v2254 = vld [vmem:[%s2236 + $0x88] sm:$0xff]
        %v2255 = vld [vmem:[%s2236 + $0x90] sm:$0xff]
        %v2256 = vld [vmem:[%s2236 + $0x98] sm:$0xff]
        %v2257 = vld [vmem:[%s2236 + $0xa0] sm:$0xff]
        %v2258 = vld [vmem:[%s2236 + $0xa8] sm:$0xff]
        %v2259 = vld [vmem:[%s2236 + $0xb0] sm:$0xff]
        %v2260 = vld [vmem:[%s2236 + $0xb8] sm:$0xff]
        %v2261 = vld [vmem:[%s2236 + $0xc0] sm:$0xff]
        %v2262 = vld [vmem:[%s2236 + $0xc8] sm:$0xff]
        %v2263 = vld [vmem:[%s2236 + $0xd0] sm:$0xff]
        %v2264 = vld [vmem:[%s2236 + $0xd8] sm:$0xff]
        %v2265 = vld [vmem:[%s2236 + $0xe0] sm:$0xff]
        %v2266 = vld [vmem:[%s2236 + $0xe8] sm:$0xff]
        %v2267 = vld [vmem:[%s2236 + $0xf0] sm:$0xff]
        %v2268 = vld [vmem:[%s2236 + $0xf8] sm:$0xff]
        %v2269 = vld [vmem:[%s2236 + $0x100] sm:$0xff]
        %v2270 = vld [vmem:[%s2236 + $0x108] sm:$0xff]
        %v2271 = vld [vmem:[%s2236 + $0x110] sm:$0xff]
        %v2272 = vld [vmem:[%s2236 + $0x118] sm:$0xff]
        %v2273 = vld [vmem:[%s2236 + $0x120] sm:$0xff]
        %v2274 = vld [vmem:[%s2236 + $0x128] sm:$0xff]
        %v2275 = vld [vmem:[%s2236 + $0x130] sm:$0xff]
        %v2276 = vld [vmem:[%s2236 + $0x138] sm:$0xff]
        %v2277 = vld [vmem:[%s2236 + $0x140] sm:$0xff]
        %v2278 = vld [vmem:[%s2236 + $0x148] sm:$0xff]
        %v2279 = vld [vmem:[%s2236 + $0x150] sm:$0xff]
        %v2280 = vld [vmem:[%s2236 + $0x158] sm:$0xff]
        %v2281 = vld [vmem:[%s2236 + $0x160] sm:$0xff]
        %v2282 = vld [vmem:[%s2236 + $0x168] sm:$0xff]
        %v2283 = vld [vmem:[%s2236 + $0x170] sm:$0xff]
        %v2284 = vld [vmem:[%s2236 + $0x178] sm:$0xff]
        %v2285 = vld [vmem:[%s2236 + $0x180] sm:$0xff]
        %v2286 = vld [vmem:[%s2236 + $0x188] sm:$0xff]
        %v2287 = vld [vmem:[%s2236 + $0x190] sm:$0xff]
        %v2288 = vld [vmem:[%s2236 + $0x198] sm:$0xff]
        %v2289 = vld [vmem:[%s2236 + $0x1a0] sm:$0xff]
        %v2290 = vld [vmem:[%s2236 + $0x1a8] sm:$0xff]
        %v2291 = vld [vmem:[%s2236 + $0x1b0] sm:$0xff]
        %v2292 = vld [vmem:[%s2236 + $0x1b8] sm:$0xff]
        %v2293 = vld [vmem:[%s2236 + $0x1c0] sm:$0xff]
        %v2294 = vld [vmem:[%s2236 + $0x1c8] sm:$0xff]
        %v2295 = vld [vmem:[%s2236 + $0x1d0] sm:$0xff]
        %v2296 = vld [vmem:[%s2236 + $0x1d8] sm:$0xff]
        %v2297 = vld [vmem:[%s2236 + $0x1e0] sm:$0xff]
        %v2298 = vld [vmem:[%s2236 + $0x1e8] sm:$0xff]
        %v2299 = vld [vmem:[%s2236 + $0x1f0] sm:$0xff]
        %v2300 = vld [vmem:[%s2236 + $0x1f8] sm:$0xff]
        %v2301 = vld [vmem:[%s2236 + $0x200] sm:$0xff]
        %v2302 = vld [vmem:[%s2236 + $0x208] sm:$0xff]
        %v2303 = vld [vmem:[%s2236 + $0x210] sm:$0xff]
        %v2304 = vld [vmem:[%s2236 + $0x218] sm:$0xff]
        %v2305 = vld [vmem:[%s2236 + $0x220] sm:$0xff]
        %v2306 = vld [vmem:[%s2236 + $0x228] sm:$0xff]
        %v2307 = vld [vmem:[%s2236 + $0x230] sm:$0xff]
        %v2308 = vld [vmem:[%s2236 + $0x238] sm:$0xff]
        %v2309 = vld [vmem:[%s2236 + $0x240] sm:$0xff]
        %v2310 = vld [vmem:[%s2236 + $0x248] sm:$0xff]
        %v2311 = vld [vmem:[%s2236 + $0x250] sm:$0xff]
        %v2312 = vld [vmem:[%s2236 + $0x258] sm:$0xff]
        %v2313 = vld [vmem:[%s2236 + $0x260] sm:$0xff]
        %v2314 = vld [vmem:[%s2236 + $0x268] sm:$0xff]
        %v2315 = vld [vmem:[%s2236 + $0x270] sm:$0xff]
        %v2316 = vld [vmem:[%s2236 + $0x278] sm:$0xff]
        %v2317 = vld [vmem:[%s2236 + $0x280] sm:$0xff]
        %v2318 = vld [vmem:[%s2236 + $0x288] sm:$0xff]
        %v2319 = vld [vmem:[%s2236 + $0x290] sm:$0xff]
        %v2320 = vld [vmem:[%s2236 + $0x298] sm:$0xff]
        %v2321 = vld [vmem:[%s2236 + $0x2a0] sm:$0xff]
        %v2322 = vld [vmem:[%s2236 + $0x2a8] sm:$0xff]
        %v2323 = vld [vmem:[%s2236 + $0x2b0] sm:$0xff]
        %v2324 = vld [vmem:[%s2236 + $0x2b8] sm:$0xff]
        %v2325 = vld [vmem:[%s2236 + $0x2c0] sm:$0xff]
        %v2326 = vld [vmem:[%s2236 + $0x2c8] sm:$0xff]
        %v2327 = vld [vmem:[%s2236 + $0x2d0] sm:$0xff]
        %v2328 = vld [vmem:[%s2236 + $0x2d8] sm:$0xff]
        %v2329 = vld [vmem:[%s2236 + $0x2e0] sm:$0xff]
        %v2330 = vld [vmem:[%s2236 + $0x2e8] sm:$0xff]
        %v2331 = vld [vmem:[%s2236 + $0x2f0] sm:$0xff]
        %v2332 = vld [vmem:[%s2236 + $0x2f8] sm:$0xff]
        %v2333 = vld [vmem:[%s2236 + $0x300] sm:$0xff]
        %v2334 = vld [vmem:[%s2236 + $0x308] sm:$0xff]
        %v2335 = vld [vmem:[%s2236 + $0x310] sm:$0xff]
        %v2336 = vld [vmem:[%s2236 + $0x318] sm:$0xff]
        %v2337 = vld [vmem:[%s2236 + $0x320] sm:$0xff]
        %v2338 = vld [vmem:[%s2236 + $0x328] sm:$0xff]
        %v2339 = vld [vmem:[%s2236 + $0x330] sm:$0xff]
        %v2340 = vld [vmem:[%s2236 + $0x338] sm:$0xff]
        %v2341 = vld [vmem:[%s2236 + $0x340] sm:$0xff]
        %v2342 = vld [vmem:[%s2236 + $0x348] sm:$0xff]
        %v2343 = vld [vmem:[%s2236 + $0x350] sm:$0xff]
        %v2344 = vld [vmem:[%s2236 + $0x358] sm:$0xff]
        %v2345 = vld [vmem:[%s2236 + $0x360] sm:$0xff]
        %v2346 = vld [vmem:[%s2236 + $0x368] sm:$0xff]
        %v2347 = vld [vmem:[%s2236 + $0x370] sm:$0xff]
        %v2348 = vld [vmem:[%s2236 + $0x378] sm:$0xff]
        %v2349 = vld [vmem:[%s2236 + $0x380] sm:$0xff]
        %v2350 = vld [vmem:[%s2236 + $0x388] sm:$0xff]
        %v2351 = vld [vmem:[%s2236 + $0x390] sm:$0xff]
        %v2352 = vld [vmem:[%s2236 + $0x398] sm:$0xff]
        %v2353 = vld [vmem:[%s2236 + $0x3a0] sm:$0xff]
        %v2354 = vld [vmem:[%s2236 + $0x3a8] sm:$0xff]
        %v2355 = vld [vmem:[%s2236 + $0x3b0] sm:$0xff]
        %v2356 = vld [vmem:[%s2236 + $0x3b8] sm:$0xff]
        %v2357 = vld [vmem:[%s2236 + $0x3c0] sm:$0xff]
        %v2358 = vld [vmem:[%s2236 + $0x3c8] sm:$0xff]
        %v2359 = vld [vmem:[%s2236 + $0x3d0] sm:$0xff]
        %v2360 = vld [vmem:[%s2236 + $0x3d8] sm:$0xff]
        %v2361 = vld [vmem:[%s2236 + $0x3e0] sm:$0xff]
        %v2362 = vld [vmem:[%s2236 + $0x3e8] sm:$0xff]
        %v2363 = vld [vmem:[%s2236 + $0x3f0] sm:$0xff]
        %v2364 = vld [vmem:[%s2236 + $0x3f8] sm:$0xff]
        %v2365 = vld [vmem:[%s2236 + $0x400] sm:$0xff]
        %v2366 = vld [vmem:[%s2236 + $0x408] sm:$0xff]
        %v2367 = vld [vmem:[%s2236 + $0x410] sm:$0xff]
        %v2368 = vld [vmem:[%s2236 + $0x418] sm:$0xff]
        %v2369 = vld [vmem:[%s2236 + $0x420] sm:$0xff]
        %v2370 = vld [vmem:[%s2236 + $0x428] sm:$0xff]
        %v2371 = vld [vmem:[%s2236 + $0x430] sm:$0xff]
        %v2372 = vld [vmem:[%s2236 + $0x438] sm:$0xff]
        %v2373 = vld [vmem:[%s2236 + $0x440] sm:$0xff]
        %v2374 = vld [vmem:[%s2236 + $0x448] sm:$0xff]
        %v2375 = vld [vmem:[%s2236 + $0x450] sm:$0xff]
        %v2376 = vld [vmem:[%s2236 + $0x458] sm:$0xff]
        %v2377 = vld [vmem:[%s2236 + $0x460] sm:$0xff]
        %v2378 = vld [vmem:[%s2236 + $0x468] sm:$0xff]
        %v2379 = vld [vmem:[%s2236 + $0x470] sm:$0xff]
        %v2380 = vld [vmem:[%s2236 + $0x478] sm:$0xff]
        %v2381 = vld [vmem:[%s2236 + $0x480] sm:$0xff]
        %v2382 = vld [vmem:[%s2236 + $0x488] sm:$0xff]
        %v2383 = vld [vmem:[%s2236 + $0x490] sm:$0xff]
        %v2384 = vld [vmem:[%s2236 + $0x498] sm:$0xff]
        %v2385 = vld [vmem:[%s2236 + $0x4a0] sm:$0xff]
        %v2386 = vld [vmem:[%s2236 + $0x4a8] sm:$0xff]
        %v2387 = vld [vmem:[%s2236 + $0x4b0] sm:$0xff]
        %v2388 = vld [vmem:[%s2236 + $0x4b8] sm:$0xff]
        %v2389 = vld [vmem:[%s2236 + $0x4c0] sm:$0xff]
        %v2390 = vld [vmem:[%s2236 + $0x4c8] sm:$0xff]
        %v2391 = vld [vmem:[%s2236 + $0x4d0] sm:$0xff]
        %v2392 = vld [vmem:[%s2236 + $0x4d8] sm:$0xff]
        %v2393 = vld [vmem:[%s2236 + $0x4e0] sm:$0xff]
        %v2394 = vld [vmem:[%s2236 + $0x4e8] sm:$0xff]
        %v2395 = vld [vmem:[%s2236 + $0x4f0] sm:$0xff]
        %v2396 = vld [vmem:[%s2236 + $0x4f8] sm:$0xff]
        %v2397 = vld [vmem:[%s2236 + $0x500] sm:$0xff]
        %v2398 = vld [vmem:[%s2236 + $0x508] sm:$0xff]
        %v2399 = vld [vmem:[%s2236 + $0x510] sm:$0xff]
        %v2400 = vld [vmem:[%s2236 + $0x518] sm:$0xff]
        %v2401 = vld [vmem:[%s2236 + $0x520] sm:$0xff]
        %v2402 = vld [vmem:[%s2236 + $0x528] sm:$0xff]
        %v2403 = vld [vmem:[%s2236 + $0x530] sm:$0xff]
        %v2404 = vld [vmem:[%s2236 + $0x538] sm:$0xff]
        %v2405 = vld [vmem:[%s2236 + $0x540] sm:$0xff]
        %v2406 = vld [vmem:[%s2236 + $0x548] sm:$0xff]
        %v2407 = vld [vmem:[%s2236 + $0x550] sm:$0xff]
        %v2408 = vld [vmem:[%s2236 + $0x558] sm:$0xff]
        %v2409 = vld [vmem:[%s2236 + $0x560] sm:$0xff]
        %v2410 = vld [vmem:[%s2236 + $0x568] sm:$0xff]
        %v2411 = vld [vmem:[%s2236 + $0x570] sm:$0xff]
        %v2412 = vld [vmem:[%s2236 + $0x578] sm:$0xff]
        %v2413 = vld [vmem:[%s2236 + $0x580] sm:$0xff]
        %v2414 = vld [vmem:[%s2236 + $0x588] sm:$0xff]
        %v2415 = vld [vmem:[%s2236 + $0x590] sm:$0xff]
        %v2416 = vld [vmem:[%s2236 + $0x598] sm:$0xff]
        %v2417 = vld [vmem:[%s2236 + $0x5a0] sm:$0xff]
        %v2418 = vld [vmem:[%s2236 + $0x5a8] sm:$0xff]
        %v2419 = vld [vmem:[%s2236 + $0x5b0] sm:$0xff]
        %v2420 = vld [vmem:[%s2236 + $0x5b8] sm:$0xff]
        %v2421 = vld [vmem:[%s2236 + $0x5c0] sm:$0xff]
        %v2422 = vld [vmem:[%s2236 + $0x5c8] sm:$0xff]
        %v2423 = vld [vmem:[%s2236 + $0x5d0] sm:$0xff]
        %v2424 = vld [vmem:[%s2236 + $0x5d8] sm:$0xff]
        %v2425 = vld [vmem:[%s2236 + $0x5e0] sm:$0xff]
        %v2426 = vld [vmem:[%s2236 + $0x5e8] sm:$0xff]
        %v2427 = vld [vmem:[%s2236 + $0x5f0] sm:$0xff]
        %v2428 = vld [vmem:[%s2236 + $0x5f8] sm:$0xff]
        %v2429 = vld [vmem:[%s2236 + $0x600] sm:$0xff]
        %v2430 = vld [vmem:[%s2236 + $0x608] sm:$0xff]
        %v2431 = vld [vmem:[%s2236 + $0x610] sm:$0xff]
        %v2432 = vld [vmem:[%s2236 + $0x618] sm:$0xff]
        %v2433 = vld [vmem:[%s2236 + $0x620] sm:$0xff]
        %v2434 = vld [vmem:[%s2236 + $0x628] sm:$0xff]
        %v2435 = vld [vmem:[%s2236 + $0x630] sm:$0xff]
        %v2436 = vld [vmem:[%s2236 + $0x638] sm:$0xff]
        %v2437 = vld [vmem:[%s2236 + $0x640] sm:$0xff]
        %v2438 = vld [vmem:[%s2236 + $0x648] sm:$0xff]
        %v2439 = vld [vmem:[%s2236 + $0x650] sm:$0xff]
        %v2440 = vld [vmem:[%s2236 + $0x658] sm:$0xff]
        %v2441 = vld [vmem:[%s2236 + $0x660] sm:$0xff]
        %v2442 = vld [vmem:[%s2236 + $0x668] sm:$0xff]
        %v2443 = vld [vmem:[%s2236 + $0x670] sm:$0xff]
        %v2444 = vld [vmem:[%s2236 + $0x678] sm:$0xff]
        %v2445 = vld [vmem:[%s2236 + $0x680] sm:$0xff]
        %v2446 = vld [vmem:[%s2236 + $0x688] sm:$0xff]
        %v2447 = vld [vmem:[%s2236 + $0x690] sm:$0xff]
        %v2448 = vld [vmem:[%s2236 + $0x698] sm:$0xff]
        %v2449 = vld [vmem:[%s2236 + $0x6a0] sm:$0xff]
        %v2450 = vld [vmem:[%s2236 + $0x6a8] sm:$0xff]
        %v2451 = vld [vmem:[%s2236 + $0x6b0] sm:$0xff]
        %v2452 = vld [vmem:[%s2236 + $0x6b8] sm:$0xff]
        %v2453 = vld [vmem:[%s2236 + $0x6c0] sm:$0xff]
        %v2454 = vld [vmem:[%s2236 + $0x6c8] sm:$0xff]
        %v2455 = vld [vmem:[%s2236 + $0x6d0] sm:$0xff]
        %v2456 = vld [vmem:[%s2236 + $0x6d8] sm:$0xff]
        %v2457 = vld [vmem:[%s2236 + $0x6e0] sm:$0xff]
        %v2458 = vld [vmem:[%s2236 + $0x6e8] sm:$0xff]
        %v2459 = vld [vmem:[%s2236 + $0x6f0] sm:$0xff]
        %v2460 = vld [vmem:[%s2236 + $0x6f8] sm:$0xff]
        %v2461 = vld [vmem:[%s2236 + $0x700] sm:$0xff]
        %v2462 = vld [vmem:[%s2236 + $0x708] sm:$0xff]
        %v2463 = vld [vmem:[%s2236 + $0x710] sm:$0xff]
        %v2464 = vld [vmem:[%s2236 + $0x718] sm:$0xff]
        %v2465 = vld [vmem:[%s2236 + $0x720] sm:$0xff]
        %v2466 = vld [vmem:[%s2236 + $0x728] sm:$0xff]
        %v2467 = vld [vmem:[%s2236 + $0x730] sm:$0xff]
        %v2468 = vld [vmem:[%s2236 + $0x738] sm:$0xff]
        %v2469 = vld [vmem:[%s2236 + $0x740] sm:$0xff]
        %v2470 = vld [vmem:[%s2236 + $0x748] sm:$0xff]
        %v2471 = vld [vmem:[%s2236 + $0x750] sm:$0xff]
        %v2472 = vld [vmem:[%s2236 + $0x758] sm:$0xff]
        %v2473 = vld [vmem:[%s2236 + $0x760] sm:$0xff]
        %v2474 = vld [vmem:[%s2236 + $0x768] sm:$0xff]
        %v2475 = vld [vmem:[%s2236 + $0x770] sm:$0xff]
        %v2476 = vld [vmem:[%s2236 + $0x778] sm:$0xff]
        %v2477 = vld [vmem:[%s2236 + $0x780] sm:$0xff]
        %v2478 = vld [vmem:[%s2236 + $0x788] sm:$0xff]
        %v2479 = vld [vmem:[%s2236 + $0x790] sm:$0xff]
        %v2480 = vld [vmem:[%s2236 + $0x798] sm:$0xff]
        %v2481 = vld [vmem:[%s2236 + $0x7a0] sm:$0xff]
        %v2482 = vld [vmem:[%s2236 + $0x7a8] sm:$0xff]
        %v2483 = vld [vmem:[%s2236 + $0x7b0] sm:$0xff]
        %v2484 = vld [vmem:[%s2236 + $0x7b8] sm:$0xff]
        %v2485 = vld [vmem:[%s2236 + $0x7c0] sm:$0xff]
        %v2486 = vld [vmem:[%s2236 + $0x7c8] sm:$0xff]
        %v2487 = vld [vmem:[%s2236 + $0x7d0] sm:$0xff]
        %v2488 = vld [vmem:[%s2236 + $0x7d8] sm:$0xff]
        %v2489 = vld [vmem:[%s2236 + $0x7e0] sm:$0xff]
        %v2490 = vld [vmem:[%s2236 + $0x7e8] sm:$0xff]
        %v2491 = vld [vmem:[%s2236 + $0x7f0] sm:$0xff]
        %v2492 = vld [vmem:[%s2236 + $0x7f8] sm:$0xff]
        %2493 = vmatpush.msra.mxu0 %v2357
        %2494 = vmatpush.msra.mxu0 %v2349
        %2495 = vmatpush.msra.mxu0 %v2341
        %2496 = vmatpush.msra.mxu0 %v2333
        %2497 = vmatpush.msra.mxu0 %v2325
        %2498 = vmatpush.msra.mxu0 %v2317
        %2499 = vmatpush.msra.mxu0 %v2309
        %2500 = vmatpush.msra.mxu0 %v2301
        %2501 = vmatpush.msra.mxu0 %v2293
        %2502 = vmatpush.msra.mxu0 %v2285
        %2503 = vmatpush.msra.mxu0 %v2277
        %2504 = vmatpush.msra.mxu0 %v2269
        %2505 = vmatpush.msra.mxu0 %v2261
        %2506 = vmatpush.msra.mxu0 %v2253
        %2507 = vmatpush.msra.mxu0 %v2245
        %2508 = vmatpush.msra.mxu0 %v2237
        %2509 = vmatmul.f32.gmra.mxu0 %v2214
        %v2510 = vpop.f32.mrf.mxu0
        %v2511 = vadd.f32 0.0, %v2510
        %2512 = vdwg.mxu0
        %2513 = vmatpush.msra.mxu0 %v2485
        %2514 = vmatpush.msra.mxu0 %v2477
        %2515 = vmatpush.msra.mxu0 %v2469
        %2516 = vmatpush.msra.mxu0 %v2461
        %2517 = vmatpush.msra.mxu0 %v2453
        %2518 = vmatpush.msra.mxu0 %v2445
        %2519 = vmatpush.msra.mxu0 %v2437
        %2520 = vmatpush.msra.mxu0 %v2429
        %2521 = vmatpush.msra.mxu0 %v2421
        %2522 = vmatpush.msra.mxu0 %v2413
        %2523 = vmatpush.msra.mxu0 %v2405
        %2524 = vmatpush.msra.mxu0 %v2397
        %2525 = vmatpush.msra.mxu0 %v2389
        %2526 = vmatpush.msra.mxu0 %v2381
        %2527 = vmatpush.msra.mxu0 %v2373
        %2528 = vmatpush.msra.mxu0 %v2365
        %2529 = vmatmul.f32.gmra.mxu0 %v2234
        %v2530 = vpop.f32.mrf.mxu0
        %v2531 = vadd.f32 %v2511, %v2530
        %2532 = vdwg.mxu0
        %2533 = vmatpush.msra.mxu0 %v2358
        %2534 = vmatpush.msra.mxu0 %v2350
        %2535 = vmatpush.msra.mxu0 %v2342
        %2536 = vmatpush.msra.mxu0 %v2334
        %2537 = vmatpush.msra.mxu0 %v2326
        %2538 = vmatpush.msra.mxu0 %v2318
        %2539 = vmatpush.msra.mxu0 %v2310
        %2540 = vmatpush.msra.mxu0 %v2302
        %2541 = vmatpush.msra.mxu0 %v2294
        %2542 = vmatpush.msra.mxu0 %v2286
        %2543 = vmatpush.msra.mxu0 %v2278
        %2544 = vmatpush.msra.mxu0 %v2270
        %2545 = vmatpush.msra.mxu0 %v2262
        %2546 = vmatpush.msra.mxu0 %v2254
        %2547 = vmatpush.msra.mxu0 %v2246
        %2548 = vmatpush.msra.mxu0 %v2238
        %2549 = vmatmul.f32.gmra.mxu0 %v2214
        %v2550 = vpop.f32.mrf.mxu0
        %v2551 = vadd.f32 0.0, %v2550
        %2552 = vdwg.mxu0
        %2553 = vmatpush.msra.mxu0 %v2486
        %2554 = vmatpush.msra.mxu0 %v2478
        %2555 = vmatpush.msra.mxu0 %v2470
        %2556 = vmatpush.msra.mxu0 %v2462
        %2557 = vmatpush.msra.mxu0 %v2454
        %2558 = vmatpush.msra.mxu0 %v2446
        %2559 = vmatpush.msra.mxu0 %v2438
        %2560 = vmatpush.msra.mxu0 %v2430
        %2561 = vmatpush.msra.mxu0 %v2422
        %2562 = vmatpush.msra.mxu0 %v2414
        %2563 = vmatpush.msra.mxu0 %v2406
        %2564 = vmatpush.msra.mxu0 %v2398
        %2565 = vmatpush.msra.mxu0 %v2390
        %2566 = vmatpush.msra.mxu0 %v2382
        %2567 = vmatpush.msra.mxu0 %v2374
        %2568 = vmatpush.msra.mxu0 %v2366
        %2569 = vmatmul.f32.gmra.mxu0 %v2234
        %v2570 = vpop.f32.mrf.mxu0
        %v2571 = vadd.f32 %v2551, %v2570
        %2572 = vdwg.mxu0
        %2573 = vmatpush.msra.mxu0 %v2359
        %2574 = vmatpush.msra.mxu0 %v2351
        %2575 = vmatpush.msra.mxu0 %v2343
        %2576 = vmatpush.msra.mxu0 %v2335
        %2577 = vmatpush.msra.mxu0 %v2327
        %2578 = vmatpush.msra.mxu0 %v2319
        %2579 = vmatpush.msra.mxu0 %v2311
        %2580 = vmatpush.msra.mxu0 %v2303
        %2581 = vmatpush.msra.mxu0 %v2295
        %2582 = vmatpush.msra.mxu0 %v2287
        %2583 = vmatpush.msra.mxu0 %v2279
        %2584 = vmatpush.msra.mxu0 %v2271
        %2585 = vmatpush.msra.mxu0 %v2263
        %2586 = vmatpush.msra.mxu0 %v2255
        %2587 = vmatpush.msra.mxu0 %v2247
        %2588 = vmatpush.msra.mxu0 %v2239
        %2589 = vmatmul.f32.gmra.mxu0 %v2214
        %v2590 = vpop.f32.mrf.mxu0
        %v2591 = vadd.f32 0.0, %v2590
        %2592 = vdwg.mxu0
        %2593 = vmatpush.msra.mxu0 %v2487
        %2594 = vmatpush.msra.mxu0 %v2479
        %2595 = vmatpush.msra.mxu0 %v2471
        %2596 = vmatpush.msra.mxu0 %v2463
        %2597 = vmatpush.msra.mxu0 %v2455
        %2598 = vmatpush.msra.mxu0 %v2447
        %2599 = vmatpush.msra.mxu0 %v2439
        %2600 = vmatpush.msra.mxu0 %v2431
        %2601 = vmatpush.msra.mxu0 %v2423
        %2602 = vmatpush.msra.mxu0 %v2415
        %2603 = vmatpush.msra.mxu0 %v2407
        %2604 = vmatpush.msra.mxu0 %v2399
        %2605 = vmatpush.msra.mxu0 %v2391
        %2606 = vmatpush.msra.mxu0 %v2383
        %2607 = vmatpush.msra.mxu0 %v2375
        %2608 = vmatpush.msra.mxu0 %v2367
        %2609 = vmatmul.f32.gmra.mxu0 %v2234
        %v2610 = vpop.f32.mrf.mxu0
        %v2611 = vadd.f32 %v2591, %v2610
        %2612 = vdwg.mxu0
        %2613 = vmatpush.msra.mxu0 %v2360
        %2614 = vmatpush.msra.mxu0 %v2352
        %2615 = vmatpush.msra.mxu0 %v2344
        %2616 = vmatpush.msra.mxu0 %v2336
        %2617 = vmatpush.msra.mxu0 %v2328
        %2618 = vmatpush.msra.mxu0 %v2320
        %2619 = vmatpush.msra.mxu0 %v2312
        %2620 = vmatpush.msra.mxu0 %v2304
        %2621 = vmatpush.msra.mxu0 %v2296
        %2622 = vmatpush.msra.mxu0 %v2288
        %2623 = vmatpush.msra.mxu0 %v2280
        %2624 = vmatpush.msra.mxu0 %v2272
        %2625 = vmatpush.msra.mxu0 %v2264
        %2626 = vmatpush.msra.mxu0 %v2256
        %2627 = vmatpush.msra.mxu0 %v2248
        %2628 = vmatpush.msra.mxu0 %v2240
        %2629 = vmatmul.f32.gmra.mxu0 %v2214
        %v2630 = vpop.f32.mrf.mxu0
        %v2631 = vadd.f32 0.0, %v2630
        %2632 = vdwg.mxu0
        %2633 = vmatpush.msra.mxu0 %v2488
        %2634 = vmatpush.msra.mxu0 %v2480
        %2635 = vmatpush.msra.mxu0 %v2472
        %2636 = vmatpush.msra.mxu0 %v2464
        %2637 = vmatpush.msra.mxu0 %v2456
        %2638 = vmatpush.msra.mxu0 %v2448
        %2639 = vmatpush.msra.mxu0 %v2440
        %2640 = vmatpush.msra.mxu0 %v2432
        %2641 = vmatpush.msra.mxu0 %v2424
        %2642 = vmatpush.msra.mxu0 %v2416
        %2643 = vmatpush.msra.mxu0 %v2408
        %2644 = vmatpush.msra.mxu0 %v2400
        %2645 = vmatpush.msra.mxu0 %v2392
        %2646 = vmatpush.msra.mxu0 %v2384
        %2647 = vmatpush.msra.mxu0 %v2376
        %2648 = vmatpush.msra.mxu0 %v2368
        %2649 = vmatmul.f32.gmra.mxu0 %v2234
        %v2650 = vpop.f32.mrf.mxu0
        %v2651 = vadd.f32 %v2631, %v2650
        %2652 = vdwg.mxu0
        %2653 = vmatpush.msra.mxu0 %v2361
        %2654 = vmatpush.msra.mxu0 %v2353
        %2655 = vmatpush.msra.mxu0 %v2345
        %2656 = vmatpush.msra.mxu0 %v2337
        %2657 = vmatpush.msra.mxu0 %v2329
        %2658 = vmatpush.msra.mxu0 %v2321
        %2659 = vmatpush.msra.mxu0 %v2313
        %2660 = vmatpush.msra.mxu0 %v2305
        %2661 = vmatpush.msra.mxu0 %v2297
        %2662 = vmatpush.msra.mxu0 %v2289
        %2663 = vmatpush.msra.mxu0 %v2281
        %2664 = vmatpush.msra.mxu0 %v2273
        %2665 = vmatpush.msra.mxu0 %v2265
        %2666 = vmatpush.msra.mxu0 %v2257
        %2667 = vmatpush.msra.mxu0 %v2249
        %2668 = vmatpush.msra.mxu0 %v2241
        %2669 = vmatmul.f32.gmra.mxu0 %v2214
        %v2670 = vpop.f32.mrf.mxu0
        %v2671 = vadd.f32 0.0, %v2670
        %2672 = vdwg.mxu0
        %2673 = vmatpush.msra.mxu0 %v2489
        %2674 = vmatpush.msra.mxu0 %v2481
        %2675 = vmatpush.msra.mxu0 %v2473
        %2676 = vmatpush.msra.mxu0 %v2465
        %2677 = vmatpush.msra.mxu0 %v2457
        %2678 = vmatpush.msra.mxu0 %v2449
        %2679 = vmatpush.msra.mxu0 %v2441
        %2680 = vmatpush.msra.mxu0 %v2433
        %2681 = vmatpush.msra.mxu0 %v2425
        %2682 = vmatpush.msra.mxu0 %v2417
        %2683 = vmatpush.msra.mxu0 %v2409
        %2684 = vmatpush.msra.mxu0 %v2401
        %2685 = vmatpush.msra.mxu0 %v2393
        %2686 = vmatpush.msra.mxu0 %v2385
        %2687 = vmatpush.msra.mxu0 %v2377
        %2688 = vmatpush.msra.mxu0 %v2369
        %2689 = vmatmul.f32.gmra.mxu0 %v2234
        %v2690 = vpop.f32.mrf.mxu0
        %v2691 = vadd.f32 %v2671, %v2690
        %2692 = vdwg.mxu0
        %2693 = vmatpush.msra.mxu0 %v2362
        %2694 = vmatpush.msra.mxu0 %v2354
        %2695 = vmatpush.msra.mxu0 %v2346
        %2696 = vmatpush.msra.mxu0 %v2338
        %2697 = vmatpush.msra.mxu0 %v2330
        %2698 = vmatpush.msra.mxu0 %v2322
        %2699 = vmatpush.msra.mxu0 %v2314
        %2700 = vmatpush.msra.mxu0 %v2306
        %2701 = vmatpush.msra.mxu0 %v2298
        %2702 = vmatpush.msra.mxu0 %v2290
        %2703 = vmatpush.msra.mxu0 %v2282
        %2704 = vmatpush.msra.mxu0 %v2274
        %2705 = vmatpush.msra.mxu0 %v2266
        %2706 = vmatpush.msra.mxu0 %v2258
        %2707 = vmatpush.msra.mxu0 %v2250
        %2708 = vmatpush.msra.mxu0 %v2242
        %2709 = vmatmul.f32.gmra.mxu0 %v2214
        %v2710 = vpop.f32.mrf.mxu0
        %v2711 = vadd.f32 0.0, %v2710
        %2712 = vdwg.mxu0
        %2713 = vmatpush.msra.mxu0 %v2490
        %2714 = vmatpush.msra.mxu0 %v2482
        %2715 = vmatpush.msra.mxu0 %v2474
        %2716 = vmatpush.msra.mxu0 %v2466
        %2717 = vmatpush.msra.mxu0 %v2458
        %2718 = vmatpush.msra.mxu0 %v2450
        %2719 = vmatpush.msra.mxu0 %v2442
        %2720 = vmatpush.msra.mxu0 %v2434
        %2721 = vmatpush.msra.mxu0 %v2426
        %2722 = vmatpush.msra.mxu0 %v2418
        %2723 = vmatpush.msra.mxu0 %v2410
        %2724 = vmatpush.msra.mxu0 %v2402
        %2725 = vmatpush.msra.mxu0 %v2394
        %2726 = vmatpush.msra.mxu0 %v2386
        %2727 = vmatpush.msra.mxu0 %v2378
        %2728 = vmatpush.msra.mxu0 %v2370
        %2729 = vmatmul.f32.gmra.mxu0 %v2234
        %v2730 = vpop.f32.mrf.mxu0
        %v2731 = vadd.f32 %v2711, %v2730
        %2732 = vdwg.mxu0
        %2733 = vmatpush.msra.mxu0 %v2363
        %2734 = vmatpush.msra.mxu0 %v2355
        %2735 = vmatpush.msra.mxu0 %v2347
        %2736 = vmatpush.msra.mxu0 %v2339
        %2737 = vmatpush.msra.mxu0 %v2331
        %2738 = vmatpush.msra.mxu0 %v2323
        %2739 = vmatpush.msra.mxu0 %v2315
        %2740 = vmatpush.msra.mxu0 %v2307
        %2741 = vmatpush.msra.mxu0 %v2299
        %2742 = vmatpush.msra.mxu0 %v2291
        %2743 = vmatpush.msra.mxu0 %v2283
        %2744 = vmatpush.msra.mxu0 %v2275
        %2745 = vmatpush.msra.mxu0 %v2267
        %2746 = vmatpush.msra.mxu0 %v2259
        %2747 = vmatpush.msra.mxu0 %v2251
        %2748 = vmatpush.msra.mxu0 %v2243
        %2749 = vmatmul.f32.gmra.mxu0 %v2214
        %v2750 = vpop.f32.mrf.mxu0
        %v2751 = vadd.f32 0.0, %v2750
        %2752 = vdwg.mxu0
        %2753 = vmatpush.msra.mxu0 %v2491
        %2754 = vmatpush.msra.mxu0 %v2483
        %2755 = vmatpush.msra.mxu0 %v2475
        %2756 = vmatpush.msra.mxu0 %v2467
        %2757 = vmatpush.msra.mxu0 %v2459
        %2758 = vmatpush.msra.mxu0 %v2451
        %2759 = vmatpush.msra.mxu0 %v2443
        %2760 = vmatpush.msra.mxu0 %v2435
        %2761 = vmatpush.msra.mxu0 %v2427
        %2762 = vmatpush.msra.mxu0 %v2419
        %2763 = vmatpush.msra.mxu0 %v2411
        %2764 = vmatpush.msra.mxu0 %v2403
        %2765 = vmatpush.msra.mxu0 %v2395
        %2766 = vmatpush.msra.mxu0 %v2387
        %2767 = vmatpush.msra.mxu0 %v2379
        %2768 = vmatpush.msra.mxu0 %v2371
        %2769 = vmatmul.f32.gmra.mxu0 %v2234
        %v2770 = vpop.f32.mrf.mxu0
        %v2771 = vadd.f32 %v2751, %v2770
        %2772 = vdwg.mxu0
        %2773 = vmatpush.msra.mxu0 %v2364
        %2774 = vmatpush.msra.mxu0 %v2356
        %2775 = vmatpush.msra.mxu0 %v2348
        %2776 = vmatpush.msra.mxu0 %v2340
        %2777 = vmatpush.msra.mxu0 %v2332
        %2778 = vmatpush.msra.mxu0 %v2324
        %2779 = vmatpush.msra.mxu0 %v2316
        %2780 = vmatpush.msra.mxu0 %v2308
        %2781 = vmatpush.msra.mxu0 %v2300
        %2782 = vmatpush.msra.mxu0 %v2292
        %2783 = vmatpush.msra.mxu0 %v2284
        %2784 = vmatpush.msra.mxu0 %v2276
        %2785 = vmatpush.msra.mxu0 %v2268
        %2786 = vmatpush.msra.mxu0 %v2260
        %2787 = vmatpush.msra.mxu0 %v2252
        %2788 = vmatpush.msra.mxu0 %v2244
        %2789 = vmatmul.f32.gmra.mxu0 %v2214
        %v2790 = vpop.f32.mrf.mxu0
        %v2791 = vadd.f32 0.0, %v2790
        %2792 = vdwg.mxu0
        %2793 = vmatpush.msra.mxu0 %v2492
        %2794 = vmatpush.msra.mxu0 %v2484
        %2795 = vmatpush.msra.mxu0 %v2476
        %2796 = vmatpush.msra.mxu0 %v2468
        %2797 = vmatpush.msra.mxu0 %v2460
        %2798 = vmatpush.msra.mxu0 %v2452
        %2799 = vmatpush.msra.mxu0 %v2444
        %2800 = vmatpush.msra.mxu0 %v2436
        %2801 = vmatpush.msra.mxu0 %v2428
        %2802 = vmatpush.msra.mxu0 %v2420
        %2803 = vmatpush.msra.mxu0 %v2412
        %2804 = vmatpush.msra.mxu0 %v2404
        %2805 = vmatpush.msra.mxu0 %v2396
        %2806 = vmatpush.msra.mxu0 %v2388
        %2807 = vmatpush.msra.mxu0 %v2380
        %2808 = vmatpush.msra.mxu0 %v2372
        %2809 = vmatmul.f32.gmra.mxu0 %v2234
        %v2810 = vpop.f32.mrf.mxu0
        %v2811 = vadd.f32 %v2791, %v2810
        %2812 = vdwg.mxu0
        %v2813 = vadd.f32 %v2183, %v2531
        %v2814 = vadd.f32 %v2184, %v2571
        %v2815 = vadd.f32 %v2185, %v2611
        %v2816 = vadd.f32 %v2186, %v2651
        %v2817 = vadd.f32 %v2187, %v2691
        %v2818 = vadd.f32 %v2188, %v2731
        %v2819 = vadd.f32 %v2189, %v2771
        %v2820 = vadd.f32 %v2190, %v2811
        %v2821 = vld [vmem:[%s3] sm:$0xf]
        %2823 = vset.pattern.permute.xlu0 0
        %2824 = vperm.xlu0 %2823, %v2821
        %v2825 = vpop.permute.xlu0 %2824
        %v2827 = vadd.f32 %v2813, %v2825
        %v2828 = vadd.f32 %v2814, %v2825
        %v2829 = vadd.f32 %v2815, %v2825
        %v2830 = vadd.f32 %v2816, %v2825
        %v2831 = vadd.f32 %v2817, %v2825
        %v2832 = vadd.f32 %v2818, %v2825
        %v2833 = vadd.f32 %v2819, %v2825
        %v2834 = vadd.f32 %v2820, %v2825
        %2835 = vst [vmem:[%s315] sm:$0xf] %v2827
        %2836 = vst [vmem:[%s315 + $0x8] sm:$0xf] %v2828
        %2837 = vst [vmem:[%s315 + $0x10] sm:$0xf] %v2829
        %2838 = vst [vmem:[%s315 + $0x18] sm:$0xf] %v2830
        %2839 = vst [vmem:[%s315 + $0x20] sm:$0xf] %v2831
        %2840 = vst [vmem:[%s315 + $0x28] sm:$0xf] %v2832
        %2841 = vst [vmem:[%s315 + $0x30] sm:$0xf] %v2833
        %2842 = vst [vmem:[%s315 + $0x38] sm:$0xf] %v2834
        %v2843 = vld [vmem:[%s273] sm:$0xff]
        %v2844 = vld [vmem:[%s273 + $0x8] sm:$0xff]
        %v2845 = vld [vmem:[%s273 + $0x10] sm:$0xff]
        %v2846 = vld [vmem:[%s273 + $0x18] sm:$0xff]
        %s2851 = scalar_lea.vmem [#allocation1], 1
        %2852 = vst [vmem:[%s2851] ss:$2 sm:$0xff] %v2843
        %s2853 = scalar_lea.vmem [#allocation1], 17
        %2854 = vst [vmem:[%s2853] ss:$2 sm:$0xff] %v2844
        %s2855 = scalar_lea.vmem [#allocation1], 33
        %2856 = vst [vmem:[%s2855] ss:$2 sm:$0xff] %v2845
        %s2857 = scalar_lea.vmem [#allocation1], 49
        %2858 = vst [vmem:[%s2857] ss:$2 sm:$0xff] %v2846
        %v2859 = vld.sshfl [vmem:[#allocation1] sm:$0xff pattern:$0x75316420]
        %v2860 = vld.sshfl [vmem:[#allocation1 + $0x8] sm:$0xff pattern:$0x75316420]
        %v2861 = vld.sshfl [vmem:[#allocation1 + $0x10] sm:$0xff pattern:$0x75316420]
        %v2862 = vld.sshfl [vmem:[#allocation1 + $0x18] sm:$0xff pattern:$0x75316420]
        %v2863 = vld.sshfl [vmem:[#allocation1 + $0x20] sm:$0xff pattern:$0x75316420]
        %v2864 = vld.sshfl [vmem:[#allocation1 + $0x28] sm:$0xff pattern:$0x75316420]
        %v2865 = vld.sshfl [vmem:[#allocation1 + $0x30] sm:$0xff pattern:$0x75316420]
        %v2866 = vld.sshfl [vmem:[#allocation1 + $0x38] sm:$0xff pattern:$0x75316420]
        %2875 = vst [vmem:[%s315] sm:$0xf0] %v2859
        %2876 = vst [vmem:[%s315 + $0x8] sm:$0xf0] %v2860
        %2877 = vst [vmem:[%s315 + $0x10] sm:$0xf0] %v2861
        %2878 = vst [vmem:[%s315 + $0x18] sm:$0xf0] %v2862
        %2879 = vst [vmem:[%s315 + $0x20] sm:$0xf0] %v2863
        %2880 = vst [vmem:[%s315 + $0x28] sm:$0xf0] %v2864
        %2881 = vst [vmem:[%s315 + $0x30] sm:$0xf0] %v2865
        %2882 = vst [vmem:[%s315 + $0x38] sm:$0xf0] %v2866
        %s2883 = sand.u32 %s149, 1
        %s2884 = scalar_lea.sflag [#allocation4], %s2883
        %s2885 = sand.u32 %s149, 1
        %s2886 = smul.addr %s2885, 64
        %s2887 = scalar_lea.vmem [#allocation10], %s2886
        // Predicated region
        $region57: #{tpu_custom_call.1} parent=39 // pred_check
          %p2888 = pneg %p159
        $region58: #{tpu_custom_call.1} parent=39 // pred_check_branch
          %2890 = sbr.rel (%p2888) target = $region60
        $region59: #{tpu_custom_call.1} parent=39 // pred_region
          %2892 = vsyncadd %s2884, 0
          %s2893 = smul.addr %s26, 8
          %s2894 = smul.addr %s2893, 8
          %s2895 = scalar_lea.hbm %s5, %s2894
          %s2897 = sshll.u32 %s2887, 4
          %s2898 = int_to_ptr.vmem [resolvable:$true] %s2897
          %s2899 = sshll.u32 %s2895, 4
          %s2900 = int_to_ptr.hbm [resolvable:$true] %s2899
          %2902 = dma.vmem_to_hbm [thread:$0]  %s2898, 1024, %s2900, %s2884
        $region60: #{tpu_custom_call.1} parent=39 // pred_fallthru
          _
      $region40: #{tpu_custom_call.1} parent=5 // pred_fallthru
        _
      %p2903 = scmp.le.s32.totalorder 2, %s21
      // Predicated region
      $region61: #{tpu_custom_call.1} parent=5 // pred_check
        %p2904 = pneg %p2903
      $region62: #{tpu_custom_call.1} parent=5 // pred_check_branch
        %2906 = sbr.rel (%p2904) target = $region64
      $region63: #{tpu_custom_call.1} parent=5 // pred_region
        %s2907 = ssub.s32 %s21, 2
        // Predicated region
        $region65: #{tpu_custom_call.1} parent=63 // pred_check
          %p2908 = pneg %p165
        $region66: #{tpu_custom_call.1} parent=63 // pred_check_branch
          %2910 = sbr.rel (%p2908) target = $region68
        $region67: #{tpu_custom_call.1} parent=63 // pred_region
          %s2911 = sand.u32 %s150, 1
          %s2912 = scalar_lea.sflag [#allocation4], %s2911
          %s2913 = sand.u32 %s150, 1
          %s2914 = smul.addr %s2913, 64
          %s2915 = scalar_lea.vmem [#allocation10], %s2914
          %2917 = dma.done %s2912, 1024
        $region68: #{tpu_custom_call.1} parent=63 // pred_fallthru
          _
      $region64: #{tpu_custom_call.1} parent=5 // pred_fallthru
        _
    $region6: #{tpu_custom_call.1} parent=1 // loop_footer
      %s25 = sadd.s32 1, %s21
    $region7: #{tpu_custom_call.1} parent=1 // loop_footer_branch
      %20 = sbr.rel target = $region3
    $region8: #{tpu_custom_call.1} parent=1 // loop_exit
      _
    %2918 = vsyncpa [#allocation3], 1
    %s2919 = scalar_lea.sflag [#allocation3], 1
    %2920 = vsyncpa %s2919, 1
    %2921 = vsyncpa [#allocation6], 1
    %s2922 = scalar_lea.sflag [#allocation6], 1
    %2923 = vsyncpa %s2922, 1
    %2924 = vsyncpa [#allocation9], 1
    %2925 = vsyncpa [#allocation4], 1
    %s2926 = scalar_lea.sflag [#allocation4], 1
    %2927 = vsyncpa %s2926, 1

</llo_original>
